<compile_context>
chip_gen: v6e
topology: v6e:2x2x1
jax: 0.10.0
libtpu: 0.0.40
codegen_flags: <defaults>
</compile_context>

<pallas_src>
import functools

import jax
import jax.numpy as jnp
from jax.experimental import pallas as pl
from jax.experimental.pallas import tpu as pltpu


FEAT_PAD = 128   # lane-padded width of the (action, reward, done) feature row
SLOPE = 0.2      # LeakyReLU negative slope


def _pick_tile(m, candidates=(512, 256, 128, 64, 32, 16, 8)):
    """Largest candidate tile that divides m (falls back to full extent)."""
    for c in candidates:
        if m >= c and m % c == 0:
            return c
    return m


def _lrelu(y, slope=SLOPE):
    # valid for slope < 1: max(y, slope*y) == LeakyReLU(y)
    return jnp.maximum(y, slope * y)


# ---------------------------------------------------------------------------
# Kernel 1: conv-as-matmul, BN folded into W, shift + LeakyReLU epilogue.
# ---------------------------------------------------------------------------
def _conv_mm_kernel(x_ref, w_ref, shift_ref, o_ref, *, slope):
    acc = jnp.dot(x_ref[...], w_ref[...], preferred_element_type=jnp.float32)
    y = _lrelu(acc + shift_ref[...], slope)
    o_ref[...] = y.astype(o_ref.dtype)


def conv_matmul(cols, w, shift, *, slope=SLOPE, out_dtype=jnp.bfloat16):
    """out = leaky_relu(cols @ w + shift); M-tiled, bf16 in / bf16 out."""
    M, K = cols.shape
    K2, N = w.shape
    assert K == K2, (K, K2)
    tm = _pick_tile(M)
    grid = (M // tm,)
    return pl.pallas_call(
        functools.partial(_conv_mm_kernel, slope=slope),
        out_shape=jax.ShapeDtypeStruct((M, N), out_dtype),
        grid=grid,
        in_specs=[
            pl.BlockSpec((tm, K), lambda i: (i, 0)),
            pl.BlockSpec((K, N), lambda i: (0, 0)),
            pl.BlockSpec((1, N), lambda i: (0, 0)),
        ],
        out_specs=pl.BlockSpec((tm, N), lambda i: (i, 0)),
        compiler_params=pltpu.CompilerParams(dimension_semantics=("parallel",)),
    )(cols, w, shift)


# ---------------------------------------------------------------------------
# Kernel 2: fused MLP tail -- f1, f2, h1 (split obs/feat, no concat), h2, h3.
# All weights stay in VMEM; activations never leave the chip.
# ---------------------------------------------------------------------------
def _tail_kernel(obs_ref, feat_ref, wf1, bf1, wf2, bf2,
                 wh1o, wh1f, bh1, wh2, bh2, wh3, bh3, o_ref):
    bf16 = jnp.bfloat16

    # feature_critic (Dropout = eval-mode identity)
    f = _lrelu(jnp.dot(feat_ref[...], wf1[...],
                       preferred_element_type=jnp.float32) + bf1[...])
    f = _lrelu(jnp.dot(f.astype(bf16), wf2[...],
                       preferred_element_type=jnp.float32) + bf2[...])

    # combined_head -- h1 computed as obs @ W_obs + feat @ W_feat (concat folded away)
    h = jnp.dot(obs_ref[...], wh1o[...], preferred_element_type=jnp.float32)
    h = h + jnp.dot(f.astype(bf16), wh1f[...], preferred_element_type=jnp.float32)
    h = _lrelu(h + bh1[...])
    h = _lrelu(jnp.dot(h.astype(bf16), wh2[...],
                       preferred_element_type=jnp.float32) + bh2[...])
    out = jnp.dot(h.astype(bf16), wh3[...],
                  preferred_element_type=jnp.float32) + bh3[...]
    o_ref[...] = out  # (tb, 128) lane-dense; only column 0 is the real score


def tail_forward(obs_p, feat_p, prep):
    Bp, obs_dim = obs_p.shape
    tb = _pick_tile(Bp)
    grid = (Bp // tb,)
    weights = (prep["f1_w"], prep["f1_b"], prep["f2_w"], prep["f2_b"],
               prep["h1_wobs"], prep["h1_wfeat"], prep["h1_b"],
               prep["h2_w"], prep["h2_b"], prep["h3_w"], prep["h3_b"])
    w_specs = [pl.BlockSpec(w.shape, lambda i: (0, 0)) for w in weights]
    in_specs = [pl.BlockSpec((tb, obs_dim), lambda i: (i, 0)),
                pl.BlockSpec((tb, FEAT_PAD), lambda i: (i, 0))] + w_specs
    return pl.pallas_call(
        _tail_kernel,
        out_shape=jax.ShapeDtypeStruct((Bp, 128), jnp.float32),
        grid=grid,
        in_specs=in_specs,
        out_specs=pl.BlockSpec((tb, 128), lambda i: (i, 0)),
        compiler_params=pltpu.CompilerParams(dimension_semantics=("parallel",)),
    )(obs_p, feat_p, *weights)


# ---------------------------------------------------------------------------
# im2col (plain JAX glue; XLA fuses the pad/slice/concat)
# ---------------------------------------------------------------------------
def im2col(x_nhwc, kh, kw, stride, pad):
    B, H, W, C = x_nhwc.shape
    xp = jnp.pad(x_nhwc, ((0, 0), (pad, pad), (pad, pad), (0, 0)))
    OH = (H + 2 * pad - kh) // stride + 1
    OW = (W + 2 * pad - kw) // stride + 1
    patches = []
    for i in range(kh):
        for j in range(kw):
            patches.append(xp[:, i:i + stride * OH:stride, j:j + stride * OW:stride, :])
    cols = jnp.concatenate(patches, axis=-1)            # (B, OH, OW, kh*kw*C)
    return cols.reshape(B * OH * OW, kh * kw * C), (B, OH, OW)


# ---------------------------------------------------------------------------
# Raw (PyTorch-layout) parameters + one-time kernel-ready preparation
# ---------------------------------------------------------------------------
def init_params(key, im_chan=4, hidden_dim=16, action_size=1):
    keys = list(jax.random.split(key, 32))
    kit = iter(keys)

    def conv_p(cin, cout, k=4):
        return dict(
            w=jax.random.normal(next(kit), (cout, cin, k, k), jnp.float32) * 0.05,
            b=jax.random.normal(next(kit), (cout,), jnp.float32) * 0.05,
            gamma=jnp.ones((cout,), jnp.float32),
            beta=jnp.zeros((cout,), jnp.float32),
            mean=jnp.zeros((cout,), jnp.float32),
            var=jnp.ones((cout,), jnp.float32),
        )

    def lin_p(fin, fout):
        return dict(
            w=jax.random.normal(next(kit), (fout, fin), jnp.float32) * 0.05,
            b=jax.random.normal(next(kit), (fout,), jnp.float32) * 0.05,
        )

    hd = hidden_dim
    observation_shape = 9 * hd * 4
    return dict(
        c1=conv_p(im_chan, hd),
        c2=conv_p(hd, hd * 2),
        c3=conv_p(hd * 2, hd * 4),
        c4=conv_p(hd * 4, hd * 4),
        f1=lin_p(action_size + 2, 128),
        f2=lin_p(128, 64),
        h1=lin_p(observation_shape + 64, 128),
        h2=lin_p(128, 32),
        h3=lin_p(32, 1),
    )


def prepare_params(params, eps=1e-5):
    """One-time: fold BN into conv weights, transpose/permute/pad, cast bf16."""
    prep = {}

    def conv_prep(p):
        OC, IC, KH, KW = p["w"].shape
        # rows ordered (kh, kw, ic) to match the NHWC im2col patch order
        w2d = jnp.transpose(p["w"], (2, 3, 1, 0)).reshape(KH * KW * IC, OC)
        scale = p["gamma"] / jnp.sqrt(p["var"] + eps)
        w_folded = (w2d * scale[None, :]).astype(jnp.bfloat16)
        shift = (scale * (p["b"] - p["mean"]) + p["beta"]).reshape(1, OC)
        return w_folded, shift.astype(jnp.float32)

    for name in ("c1", "c2", "c3", "c4"):
        prep[name + "_w"], prep[name + "_s"] = conv_prep(params[name])

    def bias2d(b):
        return b.reshape(1, -1).astype(jnp.float32)

    # feature_critic: f1 input (action_size+2) zero-padded to FEAT_PAD lanes
    f1w = params["f1"]["w"].T                         # (k_in, 128)
    k_in = f1w.shape[0]
    assert k_in <= FEAT_PAD
    prep["f1_w"] = jnp.pad(f1w, ((0, FEAT_PAD - k_in), (0, 0))).astype(jnp.bfloat16)
    prep["f1_b"] = bias2d(params["f1"]["b"])
    prep["f2_w"] = params["f2"]["w"].T.astype(jnp.bfloat16)
    prep["f2_b"] = bias2d(params["f2"]["b"])

    # combined_head h1: split into obs / feat parts; permute obs rows from the
    # PyTorch NCHW-flatten order (c*9 + p) to NHWC-flatten order (p*OC + c) so
    # the forward skips the activation transpose entirely.
    h1w = params["h1"]["w"].T                         # (obs_dim + feat_dim, 128)
    feat_dim = params["f2"]["w"].shape[0]             # 64
    obs_dim = h1w.shape[0] - feat_dim                 # 576
    oc4 = params["c4"]["w"].shape[0]                  # conv4 output channels
    spatial = obs_dim // oc4                          # 9
    w_obs = h1w[:obs_dim].reshape(oc4, spatial, h1w.shape[1])
    w_obs = jnp.transpose(w_obs, (1, 0, 2)).reshape(obs_dim, h1w.shape[1])
    prep["h1_wobs"] = w_obs.astype(jnp.bfloat16)
    prep["h1_wfeat"] = h1w[obs_dim:].astype(jnp.bfloat16)
    prep["h1_b"] = bias2d(params["h1"]["b"])

    prep["h2_w"] = params["h2"]["w"].T.astype(jnp.bfloat16)
    prep["h2_b"] = bias2d(params["h2"]["b"])

    # h3: 1 output -> pad to 128 lanes (unmasked, lane-dense store); col 0 real.
    h3w = params["h3"]["w"].T                         # (32, 1)
    prep["h3_w"] = jnp.pad(h3w, ((0, 0), (0, 128 - h3w.shape[1]))).astype(jnp.bfloat16)
    prep["h3_b"] = jnp.pad(params["h3"]["b"].reshape(1, -1),
                           ((0, 0), (0, 128 - 1))).astype(jnp.float32)
    return prep


# ---------------------------------------------------------------------------
# Forward pass (mirrors MultiCrit.forward, eval mode)
# ---------------------------------------------------------------------------
def multi_crit_forward(prep, observation_nchw, action, reward, done):
    B = observation_nchw.shape[0]

    # observation_critic: 4 x (Conv2d + BN(eval) + LeakyReLU) as im2col matmuls
    x = jnp.transpose(observation_nchw, (0, 2, 3, 1)).astype(jnp.bfloat16)  # NHWC
    for name, pad in (("c1", 1), ("c2", 1), ("c3", 1), ("c4", 0)):
        w, shift = prep[name + "_w"], prep[name + "_s"]
        cols, (b, oh, ow) = im2col(x, 4, 4, 2, pad)
        x = conv_matmul(cols, w, shift).reshape(b, oh, ow, w.shape[1])

    # NHWC flatten (h1 obs-weight rows were pre-permuted to match this order,
    # so no NCHW transpose is needed here).
    obs = x.reshape(B, -1)

    # feature row (action | reward | done), lane-padded; rows padded to mult of 8
    feat = jnp.concatenate([action, reward, done], axis=1).astype(jnp.bfloat16)
    Bp = ((max(B, 8) + 7) // 8) * 8
    obs_p = jnp.pad(obs, ((0, Bp - B), (0, 0)))
    feat_p = jnp.pad(feat, ((0, Bp - B), (0, FEAT_PAD - feat.shape[1])))

    out = tail_forward(obs_p, feat_p, prep)           # (Bp, 128) f32
    return out[:B, :1]                                # crit_pred (B, 1)


if __name__ == "__main__":
    B, IM_CHAN, HIDDEN, ACTION = 2, 4, 16, 1

    key = jax.random.PRNGKey(0)
    k_par, k_obs, k_act, k_rew, k_done = jax.random.split(key, 5)

    params = init_params(k_par, im_chan=IM_CHAN, hidden_dim=HIDDEN, action_size=ACTION)
    prep = prepare_params(params)   # one-time weight prep (hoisted out of forward)

    observation = jax.random.normal(k_obs, (B, IM_CHAN, 64, 64), jnp.float32)
    action = jax.random.normal(k_act, (B, ACTION), jnp.float32)
    reward = jax.random.normal(k_rew, (B, 1), jnp.float32)
    done = jax.random.bernoulli(k_done, 0.5, (B, 1)).astype(jnp.float32)

    fwd = jax.jit(multi_crit_forward)
    out = fwd(prep, observation, action, reward, done)
    out = jax.block_until_ready(out)
    assert out.shape == (B, 1), out.shape
    print("KERNEL_OK")
</pallas_src>

<mosaic_0001>
module attributes {stable_mosaic.version = 11 : i64} {
  func.func @_conv_mm_kernel(%arg0: i32, %arg1: memref<512x64xbf16, #tpu.memory_space<vmem>>, %arg2: memref<64x16xbf16, #tpu.memory_space<vmem>>, %arg3: memref<1x16xf32, #tpu.memory_space<vmem>>, %arg4: memref<512x16xbf16, #tpu.memory_space<vmem>>) attributes {dimension_semantics = [#tpu.dimension_semantics<parallel>], iteration_bounds = array<i64: 4>, scalar_prefetch = 0 : i64, scratch_operands = 0 : i64, tpu.core_type = #tpu.core_type<tc>, window_params = [{transform_indices = @transform_0, window_bounds = array<i64: 512, 64>}, {pipeline_mode = #tpu.pipeline_mode<synchronous>, transform_indices = @transform_1, window_bounds = array<i64: 64, 16>}, {pipeline_mode = #tpu.pipeline_mode<synchronous>, transform_indices = @transform_2, window_bounds = array<i64: 1, 16>}, {transform_indices = @transform_3, window_bounds = array<i64: 512, 16>}]} {
    %c0 = arith.constant 0 : index
    %c0_0 = arith.constant 0 : index
    %0 = vector.load %arg1[%c0, %c0_0] : memref<512x64xbf16, #tpu.memory_space<vmem>>, vector<512x64xbf16>
    %c0_1 = arith.constant 0 : index
    %c0_2 = arith.constant 0 : index
    %1 = vector.load %arg2[%c0_1, %c0_2] : memref<64x16xbf16, #tpu.memory_space<vmem>>, vector<64x16xbf16>
    %cst = arith.constant dense<0.000000e+00> : vector<512x16xf32>
    %2 = tpu.matmul %0, %1, %cst {dimension_numbers = #tpu.dot_dimension_numbers<[1], [0], [0], [1], [0, 0, 1, 1], [], []>} : vector<512x64xbf16>, vector<64x16xbf16>, vector<512x16xf32> -> vector<512x16xf32>
    %c0_3 = arith.constant 0 : index
    %c0_4 = arith.constant 0 : index
    %3 = vector.load %arg3[%c0_3, %c0_4] : memref<1x16xf32, #tpu.memory_space<vmem>>, vector<1x16xf32>
    %4 = vector.broadcast %3 : vector<1x16xf32> to vector<512x16xf32>
    %5 = arith.addf %2, %4 : vector<512x16xf32>
    %cst_5 = arith.constant 2.000000e-01 : f32
    %6 = vector.broadcast %cst_5 : f32 to vector<512x16xf32>
    %7 = arith.mulf %6, %5 : vector<512x16xf32>
    %8 = arith.maximumf %5, %7 : vector<512x16xf32>
    %9 = arith.truncf %8 : vector<512x16xf32> to vector<512x16xbf16>
    %c0_6 = arith.constant 0 : index
    %c0_7 = arith.constant 0 : index
    %10 = vector.load %arg4[%c0_6, %c0_7] : memref<512x16xbf16, #tpu.memory_space<vmem>>, vector<512x16xbf16>
    tpu.vector_store %arg4[%c0_6, %c0_7], %9 {strides = array<i32>} : memref<512x16xbf16, #tpu.memory_space<vmem>>, vector<512x16xbf16>,
    return
  }
  func.func @transform_0(%arg0: i32) -> (i32, i32) {
    %c0_i32 = arith.constant 0 : i32
    %c0_i32_0 = arith.constant 0 : i32
    return %arg0, %c0_i32 : i32, i32
  }
  func.func @transform_1(%arg0: i32) -> (i32, i32) {
    %c0_i32 = arith.constant 0 : i32
    %c0_i32_0 = arith.constant 0 : i32
    %c0_i32_1 = arith.constant 0 : i32
    return %c0_i32, %c0_i32_0 : i32, i32
  }
  func.func @transform_2(%arg0: i32) -> (i32, i32) {
    %c0_i32 = arith.constant 0 : i32
    %c0_i32_0 = arith.constant 0 : i32
    %c0_i32_1 = arith.constant 0 : i32
    return %c0_i32, %c0_i32_0 : i32, i32
  }
  func.func @transform_3(%arg0: i32) -> (i32, i32) {
    %c0_i32 = arith.constant 0 : i32
    %c0_i32_0 = arith.constant 0 : i32
    return %arg0, %c0_i32 : i32, i32
  }
}

module attributes {stable_mosaic.version = 11 : i64} {
  func.func @_conv_mm_kernel(%arg0: i32, %arg1: memref<512x256xbf16, #tpu.memory_space<vmem>>, %arg2: memref<256x32xbf16, #tpu.memory_space<vmem>>, %arg3: memref<1x32xf32, #tpu.memory_space<vmem>>, %arg4: memref<512x32xbf16, #tpu.memory_space<vmem>>) attributes {dimension_semantics = [#tpu.dimension_semantics<parallel>], iteration_bounds = array<i64: 1>, scalar_prefetch = 0 : i64, scratch_operands = 0 : i64, tpu.core_type = #tpu.core_type<tc>, window_params = [{transform_indices = @transform_0, window_bounds = array<i64: 512, 256>}, {pipeline_mode = #tpu.pipeline_mode<synchronous>, transform_indices = @transform_1, window_bounds = array<i64: 256, 32>}, {pipeline_mode = #tpu.pipeline_mode<synchronous>, transform_indices = @transform_2, window_bounds = array<i64: 1, 32>}, {transform_indices = @transform_3, window_bounds = array<i64: 512, 32>}]} {
    %c0 = arith.constant 0 : index
    %c0_0 = arith.constant 0 : index
    %0 = vector.load %arg1[%c0, %c0_0] : memref<512x256xbf16, #tpu.memory_space<vmem>>, vector<512x256xbf16>
    %c0_1 = arith.constant 0 : index
    %c0_2 = arith.constant 0 : index
    %1 = vector.load %arg2[%c0_1, %c0_2] : memref<256x32xbf16, #tpu.memory_space<vmem>>, vector<256x32xbf16>
    %cst = arith.constant dense<0.000000e+00> : vector<512x32xf32>
    %2 = tpu.matmul %0, %1, %cst {dimension_numbers = #tpu.dot_dimension_numbers<[1], [0], [0], [1], [0, 0, 1, 1], [], []>} : vector<512x256xbf16>, vector<256x32xbf16>, vector<512x32xf32> -> vector<512x32xf32>
    %c0_3 = arith.constant 0 : index
    %c0_4 = arith.constant 0 : index
    %3 = vector.load %arg3[%c0_3, %c0_4] : memref<1x32xf32, #tpu.memory_space<vmem>>, vector<1x32xf32>
    %4 = vector.broadcast %3 : vector<1x32xf32> to vector<512x32xf32>
    %5 = arith.addf %2, %4 : vector<512x32xf32>
    %cst_5 = arith.constant 2.000000e-01 : f32
    %6 = vector.broadcast %cst_5 : f32 to vector<512x32xf32>
    %7 = arith.mulf %6, %5 : vector<512x32xf32>
    %8 = arith.maximumf %5, %7 : vector<512x32xf32>
    %9 = arith.truncf %8 : vector<512x32xf32> to vector<512x32xbf16>
    %c0_6 = arith.constant 0 : index
    %c0_7 = arith.constant 0 : index
    %10 = vector.load %arg4[%c0_6, %c0_7] : memref<512x32xbf16, #tpu.memory_space<vmem>>, vector<512x32xbf16>
    tpu.vector_store %arg4[%c0_6, %c0_7], %9 {strides = array<i32>} : memref<512x32xbf16, #tpu.memory_space<vmem>>, vector<512x32xbf16>,
    return
  }
  func.func @transform_0(%arg0: i32) -> (i32, i32) {
    %c0_i32 = arith.constant 0 : i32
    %c0_i32_0 = arith.constant 0 : i32
    return %arg0, %c0_i32 : i32, i32
  }
  func.func @transform_1(%arg0: i32) -> (i32, i32) {
    %c0_i32 = arith.constant 0 : i32
    %c0_i32_0 = arith.constant 0 : i32
    %c0_i32_1 = arith.constant 0 : i32
    return %c0_i32, %c0_i32_0 : i32, i32
  }
  func.func @transform_2(%arg0: i32) -> (i32, i32) {
    %c0_i32 = arith.constant 0 : i32
    %c0_i32_0 = arith.constant 0 : i32
    %c0_i32_1 = arith.constant 0 : i32
    return %c0_i32, %c0_i32_0 : i32, i32
  }
  func.func @transform_3(%arg0: i32) -> (i32, i32) {
    %c0_i32 = arith.constant 0 : i32
    %c0_i32_0 = arith.constant 0 : i32
    return %arg0, %c0_i32 : i32, i32
  }
}

module attributes {stable_mosaic.version = 11 : i64} {
  func.func @_conv_mm_kernel(%arg0: i32, %arg1: memref<128x512xbf16, #tpu.memory_space<vmem>>, %arg2: memref<512x64xbf16, #tpu.memory_space<vmem>>, %arg3: memref<1x64xf32, #tpu.memory_space<vmem>>, %arg4: memref<128x64xbf16, #tpu.memory_space<vmem>>) attributes {dimension_semantics = [#tpu.dimension_semantics<parallel>], iteration_bounds = array<i64: 1>, scalar_prefetch = 0 : i64, scratch_operands = 0 : i64, tpu.core_type = #tpu.core_type<tc>, window_params = [{transform_indices = @transform_0, window_bounds = array<i64: 128, 512>}, {pipeline_mode = #tpu.pipeline_mode<synchronous>, transform_indices = @transform_1, window_bounds = array<i64: 512, 64>}, {pipeline_mode = #tpu.pipeline_mode<synchronous>, transform_indices = @transform_2, window_bounds = array<i64: 1, 64>}, {transform_indices = @transform_3, window_bounds = array<i64: 128, 64>}]} {
    %c0 = arith.constant 0 : index
    %c0_0 = arith.constant 0 : index
    %0 = vector.load %arg1[%c0, %c0_0] : memref<128x512xbf16, #tpu.memory_space<vmem>>, vector<128x512xbf16>
    %c0_1 = arith.constant 0 : index
    %c0_2 = arith.constant 0 : index
    %1 = vector.load %arg2[%c0_1, %c0_2] : memref<512x64xbf16, #tpu.memory_space<vmem>>, vector<512x64xbf16>
    %cst = arith.constant dense<0.000000e+00> : vector<128x64xf32>
    %2 = tpu.matmul %0, %1, %cst {dimension_numbers = #tpu.dot_dimension_numbers<[1], [0], [0], [1], [0, 0, 1, 1], [], []>} : vector<128x512xbf16>, vector<512x64xbf16>, vector<128x64xf32> -> vector<128x64xf32>
    %c0_3 = arith.constant 0 : index
    %c0_4 = arith.constant 0 : index
    %3 = vector.load %arg3[%c0_3, %c0_4] : memref<1x64xf32, #tpu.memory_space<vmem>>, vector<1x64xf32>
    %4 = vector.broadcast %3 : vector<1x64xf32> to vector<128x64xf32>
    %5 = arith.addf %2, %4 : vector<128x64xf32>
    %cst_5 = arith.constant 2.000000e-01 : f32
    %6 = vector.broadcast %cst_5 : f32 to vector<128x64xf32>
    %7 = arith.mulf %6, %5 : vector<128x64xf32>
    %8 = arith.maximumf %5, %7 : vector<128x64xf32>
    %9 = arith.truncf %8 : vector<128x64xf32> to vector<128x64xbf16>
    %c0_6 = arith.constant 0 : index
    %c0_7 = arith.constant 0 : index
    %10 = vector.load %arg4[%c0_6, %c0_7] : memref<128x64xbf16, #tpu.memory_space<vmem>>, vector<128x64xbf16>
    tpu.vector_store %arg4[%c0_6, %c0_7], %9 {strides = array<i32>} : memref<128x64xbf16, #tpu.memory_space<vmem>>, vector<128x64xbf16>,
    return
  }
  func.func @transform_0(%arg0: i32) -> (i32, i32) {
    %c0_i32 = arith.constant 0 : i32
    %c0_i32_0 = arith.constant 0 : i32
    return %arg0, %c0_i32 : i32, i32
  }
  func.func @transform_1(%arg0: i32) -> (i32, i32) {
    %c0_i32 = arith.constant 0 : i32
    %c0_i32_0 = arith.constant 0 : i32
    %c0_i32_1 = arith.constant 0 : i32
    return %c0_i32, %c0_i32_0 : i32, i32
  }
  func.func @transform_2(%arg0: i32) -> (i32, i32) {
    %c0_i32 = arith.constant 0 : i32
    %c0_i32_0 = arith.constant 0 : i32
    %c0_i32_1 = arith.constant 0 : i32
    return %c0_i32, %c0_i32_0 : i32, i32
  }
  func.func @transform_3(%arg0: i32) -> (i32, i32) {
    %c0_i32 = arith.constant 0 : i32
    %c0_i32_0 = arith.constant 0 : i32
    return %arg0, %c0_i32 : i32, i32
  }
}

module attributes {stable_mosaic.version = 11 : i64} {
  func.func @_conv_mm_kernel(%arg0: i32, %arg1: memref<18x1024xbf16, #tpu.memory_space<vmem>>, %arg2: memref<1024x64xbf16, #tpu.memory_space<vmem>>, %arg3: memref<1x64xf32, #tpu.memory_space<vmem>>, %arg4: memref<18x64xbf16, #tpu.memory_space<vmem>>) attributes {dimension_semantics = [#tpu.dimension_semantics<parallel>], iteration_bounds = array<i64: 1>, scalar_prefetch = 0 : i64, scratch_operands = 0 : i64, tpu.core_type = #tpu.core_type<tc>, window_params = [{transform_indices = @transform_0, window_bounds = array<i64: 18, 1024>}, {pipeline_mode = #tpu.pipeline_mode<synchronous>, transform_indices = @transform_1, window_bounds = array<i64: 1024, 64>}, {pipeline_mode = #tpu.pipeline_mode<synchronous>, transform_indices = @transform_2, window_bounds = array<i64: 1, 64>}, {transform_indices = @transform_3, window_bounds = array<i64: 18, 64>}]} {
    %c0 = arith.constant 0 : index
    %c0_0 = arith.constant 0 : index
    %0 = vector.load %arg1[%c0, %c0_0] : memref<18x1024xbf16, #tpu.memory_space<vmem>>, vector<18x1024xbf16>
    %c0_1 = arith.constant 0 : index
    %c0_2 = arith.constant 0 : index
    %1 = vector.load %arg2[%c0_1, %c0_2] : memref<1024x64xbf16, #tpu.memory_space<vmem>>, vector<1024x64xbf16>
    %cst = arith.constant dense<0.000000e+00> : vector<18x64xf32>
    %2 = tpu.matmul %0, %1, %cst {dimension_numbers = #tpu.dot_dimension_numbers<[1], [0], [0], [1], [0, 0, 1, 1], [], []>} : vector<18x1024xbf16>, vector<1024x64xbf16>, vector<18x64xf32> -> vector<18x64xf32>
    %c0_3 = arith.constant 0 : index
    %c0_4 = arith.constant 0 : index
    %3 = vector.load %arg3[%c0_3, %c0_4] : memref<1x64xf32, #tpu.memory_space<vmem>>, vector<1x64xf32>
    %4 = vector.broadcast %3 : vector<1x64xf32> to vector<18x64xf32>
    %5 = arith.addf %2, %4 : vector<18x64xf32>
    %cst_5 = arith.constant 2.000000e-01 : f32
    %6 = vector.broadcast %cst_5 : f32 to vector<18x64xf32>
    %7 = arith.mulf %6, %5 : vector<18x64xf32>
    %8 = arith.maximumf %5, %7 : vector<18x64xf32>
    %9 = arith.truncf %8 : vector<18x64xf32> to vector<18x64xbf16>
    %c0_6 = arith.constant 0 : index
    %c0_7 = arith.constant 0 : index
    %10 = vector.load %arg4[%c0_6, %c0_7] : memref<18x64xbf16, #tpu.memory_space<vmem>>, vector<18x64xbf16>
    tpu.vector_store %arg4[%c0_6, %c0_7], %9 {strides = array<i32>} : memref<18x64xbf16, #tpu.memory_space<vmem>>, vector<18x64xbf16>,
    return
  }
  func.func @transform_0(%arg0: i32) -> (i32, i32) {
    %c0_i32 = arith.constant 0 : i32
    %c0_i32_0 = arith.constant 0 : i32
    return %arg0, %c0_i32 : i32, i32
  }
  func.func @transform_1(%arg0: i32) -> (i32, i32) {
    %c0_i32 = arith.constant 0 : i32
    %c0_i32_0 = arith.constant 0 : i32
    %c0_i32_1 = arith.constant 0 : i32
    return %c0_i32, %c0_i32_0 : i32, i32
  }
  func.func @transform_2(%arg0: i32) -> (i32, i32) {
    %c0_i32 = arith.constant 0 : i32
    %c0_i32_0 = arith.constant 0 : i32
    %c0_i32_1 = arith.constant 0 : i32
    return %c0_i32, %c0_i32_0 : i32, i32
  }
  func.func @transform_3(%arg0: i32) -> (i32, i32) {
    %c0_i32 = arith.constant 0 : i32
    %c0_i32_0 = arith.constant 0 : i32
    return %arg0, %c0_i32 : i32, i32
  }
}

module attributes {stable_mosaic.version = 11 : i64} {
  func.func @_tail_kernel(%arg0: i32, %arg1: memref<8x576xbf16, #tpu.memory_space<vmem>>, %arg2: memref<8x128xbf16, #tpu.memory_space<vmem>>, %arg3: memref<128x128xbf16, #tpu.memory_space<vmem>>, %arg4: memref<1x128xf32, #tpu.memory_space<vmem>>, %arg5: memref<128x64xbf16, #tpu.memory_space<vmem>>, %arg6: memref<1x64xf32, #tpu.memory_space<vmem>>, %arg7: memref<576x128xbf16, #tpu.memory_space<vmem>>, %arg8: memref<64x128xbf16, #tpu.memory_space<vmem>>, %arg9: memref<1x128xf32, #tpu.memory_space<vmem>>, %arg10: memref<128x32xbf16, #tpu.memory_space<vmem>>, %arg11: memref<1x32xf32, #tpu.memory_space<vmem>>, %arg12: memref<32x128xbf16, #tpu.memory_space<vmem>>, %arg13: memref<1x128xf32, #tpu.memory_space<vmem>>, %arg14: memref<8x128xf32, #tpu.memory_space<vmem>>) attributes {dimension_semantics = [#tpu.dimension_semantics<parallel>], iteration_bounds = array<i64: 1>, scalar_prefetch = 0 : i64, scratch_operands = 0 : i64, tpu.core_type = #tpu.core_type<tc>, window_params = [{transform_indices = @transform_0, window_bounds = array<i64: 8, 576>}, {transform_indices = @transform_1, window_bounds = array<i64: 8, 128>}, {pipeline_mode = #tpu.pipeline_mode<synchronous>, transform_indices = @transform_2, window_bounds = array<i64: 128, 128>}, {pipeline_mode = #tpu.pipeline_mode<synchronous>, transform_indices = @transform_3, window_bounds = array<i64: 1, 128>}, {pipeline_mode = #tpu.pipeline_mode<synchronous>, transform_indices = @transform_4, window_bounds = array<i64: 128, 64>}, {pipeline_mode = #tpu.pipeline_mode<synchronous>, transform_indices = @transform_5, window_bounds = array<i64: 1, 64>}, {pipeline_mode = #tpu.pipeline_mode<synchronous>, transform_indices = @transform_6, window_bounds = array<i64: 576, 128>}, {pipeline_mode = #tpu.pipeline_mode<synchronous>, transform_indices = @transform_7, window_bounds = array<i64: 64, 128>}, {pipeline_mode = #tpu.pipeline_mode<synchronous>, transform_indices = @transform_8, window_bounds = array<i64: 1, 128>}, {pipeline_mode = #tpu.pipeline_mode<synchronous>, transform_indices = @transform_9, window_bounds = array<i64: 128, 32>}, {pipeline_mode = #tpu.pipeline_mode<synchronous>, transform_indices = @transform_10, window_bounds = array<i64: 1, 32>}, {pipeline_mode = #tpu.pipeline_mode<synchronous>, transform_indices = @transform_11, window_bounds = array<i64: 32, 128>}, {pipeline_mode = #tpu.pipeline_mode<synchronous>, transform_indices = @transform_12, window_bounds = array<i64: 1, 128>}, {transform_indices = @transform_13, window_bounds = array<i64: 8, 128>}]} {
    %c0 = arith.constant 0 : index
    %c0_0 = arith.constant 0 : index
    %0 = vector.load %arg2[%c0, %c0_0] : memref<8x128xbf16, #tpu.memory_space<vmem>>, vector<8x128xbf16>
    %c0_1 = arith.constant 0 : index
    %c0_2 = arith.constant 0 : index
    %1 = vector.load %arg3[%c0_1, %c0_2] : memref<128x128xbf16, #tpu.memory_space<vmem>>, vector<128x128xbf16>
    %cst = arith.constant dense<0.000000e+00> : vector<8x128xf32>
    %2 = tpu.matmul %0, %1, %cst {dimension_numbers = #tpu.dot_dimension_numbers<[1], [0], [0], [1], [0, 0, 1, 1], [], []>} : vector<8x128xbf16>, vector<128x128xbf16>, vector<8x128xf32> -> vector<8x128xf32>
    %c0_3 = arith.constant 0 : index
    %c0_4 = arith.constant 0 : index
    %3 = vector.load %arg4[%c0_3, %c0_4] : memref<1x128xf32, #tpu.memory_space<vmem>>, vector<1x128xf32>
    %4 = vector.broadcast %3 : vector<1x128xf32> to vector<8x128xf32>
    %5 = arith.addf %2, %4 : vector<8x128xf32>
    %cst_5 = arith.constant 2.000000e-01 : f32
    %6 = vector.broadcast %cst_5 : f32 to vector<8x128xf32>
    %7 = arith.mulf %6, %5 : vector<8x128xf32>
    %8 = arith.maximumf %5, %7 : vector<8x128xf32>
    %9 = arith.truncf %8 : vector<8x128xf32> to vector<8x128xbf16>
    %c0_6 = arith.constant 0 : index
    %c0_7 = arith.constant 0 : index
    %10 = vector.load %arg5[%c0_6, %c0_7] : memref<128x64xbf16, #tpu.memory_space<vmem>>, vector<128x64xbf16>
    %cst_8 = arith.constant dense<0.000000e+00> : vector<8x64xf32>
    %11 = tpu.matmul %9, %10, %cst_8 {dimension_numbers = #tpu.dot_dimension_numbers<[1], [0], [0], [1], [0, 0, 1, 1], [], []>} : vector<8x128xbf16>, vector<128x64xbf16>, vector<8x64xf32> -> vector<8x64xf32>
    %c0_9 = arith.constant 0 : index
    %c0_10 = arith.constant 0 : index
    %12 = vector.load %arg6[%c0_9, %c0_10] : memref<1x64xf32, #tpu.memory_space<vmem>>, vector<1x64xf32>
    %13 = vector.broadcast %12 : vector<1x64xf32> to vector<8x64xf32>
    %14 = arith.addf %11, %13 : vector<8x64xf32>
    %cst_11 = arith.constant 2.000000e-01 : f32
    %15 = vector.broadcast %cst_11 : f32 to vector<8x64xf32>
    %16 = arith.mulf %15, %14 : vector<8x64xf32>
    %17 = arith.maximumf %14, %16 : vector<8x64xf32>
    %c0_12 = arith.constant 0 : index
    %c0_13 = arith.constant 0 : index
    %18 = vector.load %arg1[%c0_12, %c0_13] : memref<8x576xbf16, #tpu.memory_space<vmem>>, vector<8x576xbf16>
    %c0_14 = arith.constant 0 : index
    %c0_15 = arith.constant 0 : index
    %19 = vector.load %arg7[%c0_14, %c0_15] : memref<576x128xbf16, #tpu.memory_space<vmem>>, vector<576x128xbf16>
    %cst_16 = arith.constant dense<0.000000e+00> : vector<8x128xf32>
    %20 = tpu.matmul %18, %19, %cst_16 {dimension_numbers = #tpu.dot_dimension_numbers<[1], [0], [0], [1], [0, 0, 1, 1], [], []>} : vector<8x576xbf16>, vector<576x128xbf16>, vector<8x128xf32> -> vector<8x128xf32>
    %21 = arith.truncf %17 : vector<8x64xf32> to vector<8x64xbf16>
    %c0_17 = arith.constant 0 : index
    %c0_18 = arith.constant 0 : index
    %22 = vector.load %arg8[%c0_17, %c0_18] : memref<64x128xbf16, #tpu.memory_space<vmem>>, vector<64x128xbf16>
    %cst_19 = arith.constant dense<0.000000e+00> : vector<8x128xf32>
    %23 = tpu.matmul %21, %22, %cst_19 {dimension_numbers = #tpu.dot_dimension_numbers<[1], [0], [0], [1], [0, 0, 1, 1], [], []>} : vector<8x64xbf16>, vector<64x128xbf16>, vector<8x128xf32> -> vector<8x128xf32>
    %24 = arith.addf %20, %23 : vector<8x128xf32>
    %c0_20 = arith.constant 0 : index
    %c0_21 = arith.constant 0 : index
    %25 = vector.load %arg9[%c0_20, %c0_21] : memref<1x128xf32, #tpu.memory_space<vmem>>, vector<1x128xf32>
    %26 = vector.broadcast %25 : vector<1x128xf32> to vector<8x128xf32>
    %27 = arith.addf %24, %26 : vector<8x128xf32>
    %cst_22 = arith.constant 2.000000e-01 : f32
    %28 = vector.broadcast %cst_22 : f32 to vector<8x128xf32>
    %29 = arith.mulf %28, %27 : vector<8x128xf32>
    %30 = arith.maximumf %27, %29 : vector<8x128xf32>
    %31 = arith.truncf %30 : vector<8x128xf32> to vector<8x128xbf16>
    %c0_23 = arith.constant 0 : index
    %c0_24 = arith.constant 0 : index
    %32 = vector.load %arg10[%c0_23, %c0_24] : memref<128x32xbf16, #tpu.memory_space<vmem>>, vector<128x32xbf16>
    %cst_25 = arith.constant dense<0.000000e+00> : vector<8x32xf32>
    %33 = tpu.matmul %31, %32, %cst_25 {dimension_numbers = #tpu.dot_dimension_numbers<[1], [0], [0], [1], [0, 0, 1, 1], [], []>} : vector<8x128xbf16>, vector<128x32xbf16>, vector<8x32xf32> -> vector<8x32xf32>
    %c0_26 = arith.constant 0 : index
    %c0_27 = arith.constant 0 : index
    %34 = vector.load %arg11[%c0_26, %c0_27] : memref<1x32xf32, #tpu.memory_space<vmem>>, vector<1x32xf32>
    %35 = vector.broadcast %34 : vector<1x32xf32> to vector<8x32xf32>
    %36 = arith.addf %33, %35 : vector<8x32xf32>
    %cst_28 = arith.constant 2.000000e-01 : f32
    %37 = vector.broadcast %cst_28 : f32 to vector<8x32xf32>
    %38 = arith.mulf %37, %36 : vector<8x32xf32>
    %39 = arith.maximumf %36, %38 : vector<8x32xf32>
    %40 = arith.truncf %39 : vector<8x32xf32> to vector<8x32xbf16>
    %c0_29 = arith.constant 0 : index
    %c0_30 = arith.constant 0 : index
    %41 = vector.load %arg12[%c0_29, %c0_30] : memref<32x128xbf16, #tpu.memory_space<vmem>>, vector<32x128xbf16>
    %cst_31 = arith.constant dense<0.000000e+00> : vector<8x128xf32>
    %42 = tpu.matmul %40, %41, %cst_31 {dimension_numbers = #tpu.dot_dimension_numbers<[1], [0], [0], [1], [0, 0, 1, 1], [], []>} : vector<8x32xbf16>, vector<32x128xbf16>, vector<8x128xf32> -> vector<8x128xf32>
    %c0_32 = arith.constant 0 : index
    %c0_33 = arith.constant 0 : index
    %43 = vector.load %arg13[%c0_32, %c0_33] : memref<1x128xf32, #tpu.memory_space<vmem>>, vector<1x128xf32>
    %44 = vector.broadcast %43 : vector<1x128xf32> to vector<8x128xf32>
    %45 = arith.addf %42, %44 : vector<8x128xf32>
    %c0_34 = arith.constant 0 : index
    %c0_35 = arith.constant 0 : index
    %46 = vector.load %arg14[%c0_34, %c0_35] : memref<8x128xf32, #tpu.memory_space<vmem>>, vector<8x128xf32>
    tpu.vector_store %arg14[%c0_34, %c0_35], %45 {strides = array<i32>} : memref<8x128xf32, #tpu.memory_space<vmem>>, vector<8x128xf32>,
    return
  }
  func.func @transform_0(%arg0: i32) -> (i32, i32) {
    %c0_i32 = arith.constant 0 : i32
    %c0_i32_0 = arith.constant 0 : i32
    return %arg0, %c0_i32 : i32, i32
  }
  func.func @transform_1(%arg0: i32) -> (i32, i32) {
    %c0_i32 = arith.constant 0 : i32
    %c0_i32_0 = arith.constant 0 : i32
    return %arg0, %c0_i32 : i32, i32
  }
  func.func @transform_2(%arg0: i32) -> (i32, i32) {
    %c0_i32 = arith.constant 0 : i32
    %c0_i32_0 = arith.constant 0 : i32
    %c0_i32_1 = arith.constant 0 : i32
    return %c0_i32, %c0_i32_0 : i32, i32
  }
  func.func @transform_3(%arg0: i32) -> (i32, i32) {
    %c0_i32 = arith.constant 0 : i32
    %c0_i32_0 = arith.constant 0 : i32
    %c0_i32_1 = arith.constant 0 : i32
    return %c0_i32, %c0_i32_0 : i32, i32
  }
  func.func @transform_4(%arg0: i32) -> (i32, i32) {
    %c0_i32 = arith.constant 0 : i32
    %c0_i32_0 = arith.constant 0 : i32
    %c0_i32_1 = arith.constant 0 : i32
    return %c0_i32, %c0_i32_0 : i32, i32
  }
  func.func @transform_5(%arg0: i32) -> (i32, i32) {
    %c0_i32 = arith.constant 0 : i32
    %c0_i32_0 = arith.constant 0 : i32
    %c0_i32_1 = arith.constant 0 : i32
    return %c0_i32, %c0_i32_0 : i32, i32
  }
  func.func @transform_6(%arg0: i32) -> (i32, i32) {
    %c0_i32 = arith.constant 0 : i32
    %c0_i32_0 = arith.constant 0 : i32
    %c0_i32_1 = arith.constant 0 : i32
    return %c0_i32, %c0_i32_0 : i32, i32
  }
  func.func @transform_7(%arg0: i32) -> (i32, i32) {
    %c0_i32 = arith.constant 0 : i32
    %c0_i32_0 = arith.constant 0 : i32
    %c0_i32_1 = arith.constant 0 : i32
    return %c0_i32, %c0_i32_0 : i32, i32
  }
  func.func @transform_8(%arg0: i32) -> (i32, i32) {
    %c0_i32 = arith.constant 0 : i32
    %c0_i32_0 = arith.constant 0 : i32
    %c0_i32_1 = arith.constant 0 : i32
    return %c0_i32, %c0_i32_0 : i32, i32
  }
  func.func @transform_9(%arg0: i32) -> (i32, i32) {
    %c0_i32 = arith.constant 0 : i32
    %c0_i32_0 = arith.constant 0 : i32
    %c0_i32_1 = arith.constant 0 : i32
    return %c0_i32, %c0_i32_0 : i32, i32
  }
  func.func @transform_10(%arg0: i32) -> (i32, i32) {
    %c0_i32 = arith.constant 0 : i32
    %c0_i32_0 = arith.constant 0 : i32
    %c0_i32_1 = arith.constant 0 : i32
    return %c0_i32, %c0_i32_0 : i32, i32
  }
  func.func @transform_11(%arg0: i32) -> (i32, i32) {
    %c0_i32 = arith.constant 0 : i32
    %c0_i32_0 = arith.constant 0 : i32
    %c0_i32_1 = arith.constant 0 : i32
    return %c0_i32, %c0_i32_0 : i32, i32
  }
  func.func @transform_12(%arg0: i32) -> (i32, i32) {
    %c0_i32 = arith.constant 0 : i32
    %c0_i32_0 = arith.constant 0 : i32
    %c0_i32_1 = arith.constant 0 : i32
    return %c0_i32, %c0_i32_0 : i32, i32
  }
  func.func @transform_13(%arg0: i32) -> (i32, i32) {
    %c0_i32 = arith.constant 0 : i32
    %c0_i32_0 = arith.constant 0 : i32
    return %arg0, %c0_i32 : i32, i32
  }
}

</mosaic_0001>

<llo_original>
// kernel: multi_crit_forward.5
$region0: #{multi_crit_forward.5}
  #allocation0 [shape = 'u32[]', space=smem, size = 0x4, offset = 0x4, fixed_abs, tag = 'smem constant byte address 0x4 - core index']
  #allocation1 [shape = 'u32[144,128]{1,0:T(1,128)}', space=vmem, size = 0x12000, scoped, tag = 'internal scratch']
  %s0 = inlined_call_operand.vmem [shape: bf16[2048,64], index: 0, kind: input, shape index: {}]
  %s1 = inlined_call_operand.vmem [shape: bf16[64,16], index: 1, kind: input, shape index: {}]
  %s2 = inlined_call_operand.vmem [shape: f32[1,16], index: 2, kind: input, shape index: {}]
  %s3 = inlined_call_operand.vmem [shape: bf16[2048,16], index: 3, kind: output, shape index: {}]
  %s4 = sld [smem:[#allocation0]]
  $region45: #{multi_crit_forward.5} parent=0
    _
  %s6 = ssub.s32 1, %s4
  %s7 = scalar_select 0, %s6, %s4
  loop: start=0, step=1, limit=6
  $region2: #{multi_crit_forward.5} parent=0 // loop_pre_header
    _
  $region3: #{multi_crit_forward.5} parent=0 // loop_header
    %s9 = sphi 0, %s13
    %p10 = scmp.ge.s32.totalorder %s9, 6
    %s19 = sphi 0, %s21
    %s22 = sphi 0, %s19
    %s23 = sphi 0, %s22
    %s39 = sphi 0, %s23
    %s43 = sphi 0, %s43
    %s45 = sphi 0, %s43
    %s46 = sphi 0, %s45
    %s60 = sphi 0, %s46
    %s64 = sphi 0, %s64
    %s66 = sphi 0, %s64
    %s67 = sphi 0, %s66
    %s81 = sphi 0, %s67
    %s87 = sphi 0, %s89
    %s90 = sphi 0, %s87
    %s91 = sphi 0, %s90
    %s107 = sphi 0, %s91
  $region4: #{multi_crit_forward.5} parent=0 // loop_header_branch
    %12 = sbr.rel (%p10) target = $region8
  $region5: #{multi_crit_forward.5} parent=0 // loop_body
    %s14 = ssub.s32 %s9, 1
    %s15 = ssub.s32 %s9, 2
    %s16 = sadd.s32 %s9, 1
    %s17 = ssub.s32 %s9, %s16
    %p18 = scmp.eq.s32.totalorder %s17, 0
    %s20 = sadd.s32 %s19, 1
    %s21 = scalar_select %p18, %s19, %s20
    %p24 = pneg %p18
    %p25 = scmp.eq.s32.totalorder %s9, 3
    %p26 = por %p24, %p25
    %p27 = scmp.ne.s32.totalorder %s19, %s22
    %p28 = scmp.eq.s32.totalorder %s9, 0
    %p29 = por %p27, %p28
    %p30 = scmp.ne.s32.totalorder %s19, %s22
    %p31 = scmp.eq.s32.totalorder %s14, 3
    %p32 = por %p30, %p31
    %p33 = scmp.ne.s32.totalorder %s22, %s23
    %p34 = scmp.eq.s32.totalorder %s14, 0
    %p35 = por %p33, %p34
    %p36 = scmp.ne.s32.totalorder %s22, %s23
    %p37 = scmp.eq.s32.totalorder %s15, 3
    %p38 = por %p36, %p37
    %p40 = scmp.ne.s32.totalorder %s23, %s39
    %p41 = scmp.eq.s32.totalorder %s15, 0
    %p42 = por %p40, %p41
    %s44 = sadd.s32 %s43, 1
    %p47 = scmp.eq.s32.totalorder %s9, 3
    %p48 = scmp.ne.s32.totalorder %s43, %s45
    %p49 = scmp.eq.s32.totalorder %s9, 0
    %p50 = por %p48, %p49
    %p51 = scmp.ne.s32.totalorder %s43, %s45
    %p52 = scmp.eq.s32.totalorder %s14, 3
    %p53 = por %p51, %p52
    %p54 = scmp.ne.s32.totalorder %s45, %s46
    %p55 = scmp.eq.s32.totalorder %s14, 0
    %p56 = por %p54, %p55
    %p57 = scmp.ne.s32.totalorder %s45, %s46
    %p58 = scmp.eq.s32.totalorder %s15, 3
    %p59 = por %p57, %p58
    %p61 = scmp.ne.s32.totalorder %s46, %s60
    %p62 = scmp.eq.s32.totalorder %s15, 0
    %p63 = por %p61, %p62
    %s65 = sadd.s32 %s64, 1
    %p68 = scmp.eq.s32.totalorder %s9, 3
    %p69 = scmp.ne.s32.totalorder %s64, %s66
    %p70 = scmp.eq.s32.totalorder %s9, 0
    %p71 = por %p69, %p70
    %p72 = scmp.ne.s32.totalorder %s64, %s66
    %p73 = scmp.eq.s32.totalorder %s14, 3
    %p74 = por %p72, %p73
    %p75 = scmp.ne.s32.totalorder %s66, %s67
    %p76 = scmp.eq.s32.totalorder %s14, 0
    %p77 = por %p75, %p76
    %p78 = scmp.ne.s32.totalorder %s66, %s67
    %p79 = scmp.eq.s32.totalorder %s15, 3
    %p80 = por %p78, %p79
    %p82 = scmp.ne.s32.totalorder %s67, %s81
    %p83 = scmp.eq.s32.totalorder %s15, 0
    %p84 = por %p82, %p83
    %s85 = ssub.s32 %s9, %s16
    %p86 = scmp.eq.s32.totalorder %s85, 0
    %s88 = sadd.s32 %s87, 1
    %s89 = scalar_select %p86, %s87, %s88
    %p92 = pneg %p86
    %p93 = scmp.eq.s32.totalorder %s9, 3
    %p94 = por %p92, %p93
    %p95 = scmp.ne.s32.totalorder %s87, %s90
    %p96 = scmp.eq.s32.totalorder %s9, 0
    %p97 = por %p95, %p96
    %p98 = scmp.ne.s32.totalorder %s87, %s90
    %p99 = scmp.eq.s32.totalorder %s14, 3
    %p100 = por %p98, %p99
    %p101 = scmp.ne.s32.totalorder %s90, %s91
    %p102 = scmp.eq.s32.totalorder %s14, 0
    %p103 = por %p101, %p102
    %p104 = scmp.ne.s32.totalorder %s90, %s91
    %p105 = scmp.eq.s32.totalorder %s15, 3
    %p106 = por %p104, %p105
    %p108 = scmp.ne.s32.totalorder %s91, %s107
    %p109 = scmp.eq.s32.totalorder %s15, 0
    %p110 = por %p108, %p109
    %p111 = scmp.le.s32.totalorder 1, %s9
    %p112 = scmp.lt.s32.totalorder %s9, 5
    %p113 = pnand %p111, %p112
    %p114 = pneg %p113
    // Predicated region
    $region9: #{multi_crit_forward.5} parent=5 // pred_check
      _
    $region10: #{multi_crit_forward.5} parent=5 // pred_check_branch
      %116 = sbr.rel (%p113) target = $region12
    $region11: #{multi_crit_forward.5} parent=5 // pred_region
      %s117 = ssub.s32 %s9, 1
      // Predicated region
      $region13: #{multi_crit_forward.5} parent=11 // pred_check
        %p118 = pneg %p56
      $region14: #{multi_crit_forward.5} parent=11 // pred_check_branch
        %120 = sbr.rel (%p118) target = $region16
      $region15: #{multi_crit_forward.5} parent=11 // pred_region
        _
      $region16: #{multi_crit_forward.5} parent=11 // pred_fallthru
        _
      // Predicated region
      $region17: #{multi_crit_forward.5} parent=11 // pred_check
        %p121 = pneg %p77
      $region18: #{multi_crit_forward.5} parent=11 // pred_check_branch
        %123 = sbr.rel (%p121) target = $region20
      $region19: #{multi_crit_forward.5} parent=11 // pred_region
        _
      $region20: #{multi_crit_forward.5} parent=11 // pred_fallthru
        _
    $region12: #{multi_crit_forward.5} parent=5 // pred_fallthru
      _
    %p124 = scmp.lt.s32.totalorder %s9, 4
    // Predicated region
    $region21: #{multi_crit_forward.5} parent=5 // pred_check
      %p125 = pneg %p124
    $region22: #{multi_crit_forward.5} parent=5 // pred_check_branch
      %127 = sbr.rel (%p125) target = $region24
    $region23: #{multi_crit_forward.5} parent=5 // pred_region
      // Predicated region
      $region25: #{multi_crit_forward.5} parent=23 // pred_check
        %p128 = pneg %p29
      $region26: #{multi_crit_forward.5} parent=23 // pred_check_branch
        %130 = sbr.rel (%p128) target = $region28
      $region27: #{multi_crit_forward.5} parent=23 // pred_region
        %s131 = smul.u32 64, %s9
        %p132 = scmp.lt.s32.totalorder %s131, 255
        %s133 = scalar_select %p132, %s131, 255
        %s134 = smul.addr %s133, 4
        %s135 = scalar_lea.vmem %s0, %s134
        %s136 = smul.u32 64, %s9
      $region28: #{multi_crit_forward.5} parent=23 // pred_fallthru
        _
    $region24: #{multi_crit_forward.5} parent=5 // pred_fallthru
      _
    %p137 = scmp.le.s32.totalorder 1, %s9
    %p138 = scmp.lt.s32.totalorder %s9, 5
    %p139 = pnand %p137, %p138
    %p140 = pneg %p139
    // Predicated region
    $region29: #{multi_crit_forward.5} parent=5 // pred_check
      _
    $region30: #{multi_crit_forward.5} parent=5 // pred_check_branch
      %142 = sbr.rel (%p139) target = $region32
    $region31: #{multi_crit_forward.5} parent=5 // pred_region
      %s143 = ssub.s32 %s9, 1
      %s144 = smul.u32 64, %s14
      %p145 = scmp.lt.s32.totalorder %s144, 255
      %s146 = scalar_select %p145, %s144, 255
      %s147 = smul.addr %s146, 4
      %s148 = scalar_lea.vmem %s0, %s147
      %p149 = pneg %p35
      %p150 = pneg %p32
      %p151 = pneg %p56
      %p152 = pneg %p53
      %p153 = pneg %p77
      %p154 = pneg %p74
      %p155 = pneg %p103
      %p156 = pneg %p100
      %s157 = smul.u32 64, %s14
      %p158 = scmp.lt.s32.totalorder %s157, 255
      %s159 = scalar_select %p158, %s157, 255
      %s160 = smul.addr %s159, 4
      %s161 = scalar_lea.vmem %s3, %s160
      %s162 = smul.u32 64, %s14
      %p163 = scmp.lt.s32.totalorder %s162, 255
      %s164 = scalar_select %p163, %s162, 255
      %s165 = smul.addr %s164, 4
      %s166 = scalar_lea.vmem %s0, %s165
      %s167 = smul.u32 64, %s14
      %s168 = smul.u32 64, %s14
      %p169 = scmp.lt.s32.totalorder %s168, 255
      %s170 = scalar_select %p169, %s168, 255
      %s171 = smul.addr %s170, 4
      %s172 = scalar_lea.vmem %s3, %s171
      %s173 = smul.u32 64, %s14
      %v175 = vld [vmem:[%s166] sm:$0xf]
      %v176 = vld [vmem:[%s166 + $0x4] sm:$0xf]
      %v177 = vld [vmem:[%s166 + $0x8] sm:$0xf]
      %v178 = vld [vmem:[%s166 + $0xc] sm:$0xf]
      %v179 = vld [vmem:[%s166 + $0x10] sm:$0xf]
      %v180 = vld [vmem:[%s166 + $0x14] sm:$0xf]
      %v181 = vld [vmem:[%s166 + $0x18] sm:$0xf]
      %v182 = vld [vmem:[%s166 + $0x1c] sm:$0xf]
      %v183 = vld [vmem:[%s166 + $0x20] sm:$0xf]
      %v184 = vld [vmem:[%s166 + $0x24] sm:$0xf]
      %v185 = vld [vmem:[%s166 + $0x28] sm:$0xf]
      %v186 = vld [vmem:[%s166 + $0x2c] sm:$0xf]
      %v187 = vld [vmem:[%s166 + $0x30] sm:$0xf]
      %v188 = vld [vmem:[%s166 + $0x34] sm:$0xf]
      %v189 = vld [vmem:[%s166 + $0x38] sm:$0xf]
      %v190 = vld [vmem:[%s166 + $0x3c] sm:$0xf]
      %v191 = vld [vmem:[%s166 + $0x40] sm:$0xf]
      %v192 = vld [vmem:[%s166 + $0x44] sm:$0xf]
      %v193 = vld [vmem:[%s166 + $0x48] sm:$0xf]
      %v194 = vld [vmem:[%s166 + $0x4c] sm:$0xf]
      %v195 = vld [vmem:[%s166 + $0x50] sm:$0xf]
      %v196 = vld [vmem:[%s166 + $0x54] sm:$0xf]
      %v197 = vld [vmem:[%s166 + $0x58] sm:$0xf]
      %v198 = vld [vmem:[%s166 + $0x5c] sm:$0xf]
      %v199 = vld [vmem:[%s166 + $0x60] sm:$0xf]
      %v200 = vld [vmem:[%s166 + $0x64] sm:$0xf]
      %v201 = vld [vmem:[%s166 + $0x68] sm:$0xf]
      %v202 = vld [vmem:[%s166 + $0x6c] sm:$0xf]
      %v203 = vld [vmem:[%s166 + $0x70] sm:$0xf]
      %v204 = vld [vmem:[%s166 + $0x74] sm:$0xf]
      %v205 = vld [vmem:[%s166 + $0x78] sm:$0xf]
      %v206 = vld [vmem:[%s166 + $0x7c] sm:$0xf]
      %v207 = vld [vmem:[%s166 + $0x80] sm:$0xf]
      %v208 = vld [vmem:[%s166 + $0x84] sm:$0xf]
      %v209 = vld [vmem:[%s166 + $0x88] sm:$0xf]
      %v210 = vld [vmem:[%s166 + $0x8c] sm:$0xf]
      %v211 = vld [vmem:[%s166 + $0x90] sm:$0xf]
      %v212 = vld [vmem:[%s166 + $0x94] sm:$0xf]
      %v213 = vld [vmem:[%s166 + $0x98] sm:$0xf]
      %v214 = vld [vmem:[%s166 + $0x9c] sm:$0xf]
      %v215 = vld [vmem:[%s166 + $0xa0] sm:$0xf]
      %v216 = vld [vmem:[%s166 + $0xa4] sm:$0xf]
      %v217 = vld [vmem:[%s166 + $0xa8] sm:$0xf]
      %v218 = vld [vmem:[%s166 + $0xac] sm:$0xf]
      %v219 = vld [vmem:[%s166 + $0xb0] sm:$0xf]
      %v220 = vld [vmem:[%s166 + $0xb4] sm:$0xf]
      %v221 = vld [vmem:[%s166 + $0xb8] sm:$0xf]
      %v222 = vld [vmem:[%s166 + $0xbc] sm:$0xf]
      %v223 = vld [vmem:[%s166 + $0xc0] sm:$0xf]
      %v224 = vld [vmem:[%s166 + $0xc4] sm:$0xf]
      %v225 = vld [vmem:[%s166 + $0xc8] sm:$0xf]
      %v226 = vld [vmem:[%s166 + $0xcc] sm:$0xf]
      %v227 = vld [vmem:[%s166 + $0xd0] sm:$0xf]
      %v228 = vld [vmem:[%s166 + $0xd4] sm:$0xf]
      %v229 = vld [vmem:[%s166 + $0xd8] sm:$0xf]
      %v230 = vld [vmem:[%s166 + $0xdc] sm:$0xf]
      %v231 = vld [vmem:[%s166 + $0xe0] sm:$0xf]
      %v232 = vld [vmem:[%s166 + $0xe4] sm:$0xf]
      %v233 = vld [vmem:[%s166 + $0xe8] sm:$0xf]
      %v234 = vld [vmem:[%s166 + $0xec] sm:$0xf]
      %v235 = vld [vmem:[%s166 + $0xf0] sm:$0xf]
      %v236 = vld [vmem:[%s166 + $0xf4] sm:$0xf]
      %v237 = vld [vmem:[%s166 + $0xf8] sm:$0xf]
      %v238 = vld [vmem:[%s166 + $0xfc] sm:$0xf]
      %v239 = vld [vmem:[%s1] sm:$0xf]
      %v240 = vld [vmem:[%s1 + $0x4] sm:$0xf]
      %v241 = vld [vmem:[%s1 + $0x8] sm:$0xf]
      %v242 = vld [vmem:[%s1 + $0xc] sm:$0xf]
      %v243 = vld [vmem:[%s1 + $0x10] sm:$0xf]
      %v244 = vld [vmem:[%s1 + $0x14] sm:$0xf]
      %v245 = vld [vmem:[%s1 + $0x18] sm:$0xf]
      %v246 = vld [vmem:[%s1 + $0x1c] sm:$0xf]
      %v247 = vld [vmem:[%s2] sm:$0x1]
      %v249 = vlaneseq
      %v250 = vshrl.u32 %v249, 7
      %v251 = vsub.s32 0, %v250
      %v252 = vrot.slane %v247, %v251
      %v318 = vunpack.c.l.b16 %v175
      %v319 = vunpack.c.l.b16 %v176
      %v320 = vunpack.c.l.b16 %v177
      %v321 = vunpack.c.l.b16 %v178
      %v322 = vunpack.c.l.b16 %v179
      %v323 = vunpack.c.l.b16 %v180
      %v324 = vunpack.c.l.b16 %v181
      %v325 = vunpack.c.l.b16 %v182
      %v326 = vunpack.c.l.b16 %v183
      %v327 = vunpack.c.l.b16 %v184
      %v328 = vunpack.c.l.b16 %v185
      %v329 = vunpack.c.l.b16 %v186
      %v330 = vunpack.c.l.b16 %v187
      %v331 = vunpack.c.l.b16 %v188
      %v332 = vunpack.c.l.b16 %v189
      %v333 = vunpack.c.l.b16 %v190
      %v334 = vunpack.c.l.b16 %v191
      %v335 = vunpack.c.l.b16 %v192
      %v336 = vunpack.c.l.b16 %v193
      %v337 = vunpack.c.l.b16 %v194
      %v338 = vunpack.c.l.b16 %v195
      %v339 = vunpack.c.l.b16 %v196
      %v340 = vunpack.c.l.b16 %v197
      %v341 = vunpack.c.l.b16 %v198
      %v342 = vunpack.c.l.b16 %v199
      %v343 = vunpack.c.l.b16 %v200
      %v344 = vunpack.c.l.b16 %v201
      %v345 = vunpack.c.l.b16 %v202
      %v346 = vunpack.c.l.b16 %v203
      %v347 = vunpack.c.l.b16 %v204
      %v348 = vunpack.c.l.b16 %v205
      %v349 = vunpack.c.l.b16 %v206
      %v350 = vunpack.c.l.b16 %v207
      %v351 = vunpack.c.l.b16 %v208
      %v352 = vunpack.c.l.b16 %v209
      %v353 = vunpack.c.l.b16 %v210
      %v354 = vunpack.c.l.b16 %v211
      %v355 = vunpack.c.l.b16 %v212
      %v356 = vunpack.c.l.b16 %v213
      %v357 = vunpack.c.l.b16 %v214
      %v358 = vunpack.c.l.b16 %v215
      %v359 = vunpack.c.l.b16 %v216
      %v360 = vunpack.c.l.b16 %v217
      %v361 = vunpack.c.l.b16 %v218
      %v362 = vunpack.c.l.b16 %v219
      %v363 = vunpack.c.l.b16 %v220
      %v364 = vunpack.c.l.b16 %v221
      %v365 = vunpack.c.l.b16 %v222
      %v366 = vunpack.c.l.b16 %v223
      %v367 = vunpack.c.l.b16 %v224
      %v368 = vunpack.c.l.b16 %v225
      %v369 = vunpack.c.l.b16 %v226
      %v370 = vunpack.c.l.b16 %v227
      %v371 = vunpack.c.l.b16 %v228
      %v372 = vunpack.c.l.b16 %v229
      %v373 = vunpack.c.l.b16 %v230
      %v374 = vunpack.c.l.b16 %v231
      %v375 = vunpack.c.l.b16 %v232
      %v376 = vunpack.c.l.b16 %v233
      %v377 = vunpack.c.l.b16 %v234
      %v378 = vunpack.c.l.b16 %v235
      %v379 = vunpack.c.l.b16 %v236
      %v380 = vunpack.c.l.b16 %v237
      %v381 = vunpack.c.l.b16 %v238
      %v382 = vpack.c.b16 %v319, %v318
      %v383 = vpack.c.b16 %v321, %v320
      %v384 = vpack.c.b16 %v323, %v322
      %v385 = vpack.c.b16 %v325, %v324
      %v386 = vpack.c.b16 %v327, %v326
      %v387 = vpack.c.b16 %v329, %v328
      %v388 = vpack.c.b16 %v331, %v330
      %v389 = vpack.c.b16 %v333, %v332
      %v390 = vpack.c.b16 %v335, %v334
      %v391 = vpack.c.b16 %v337, %v336
      %v392 = vpack.c.b16 %v339, %v338
      %v393 = vpack.c.b16 %v341, %v340
      %v394 = vpack.c.b16 %v343, %v342
      %v395 = vpack.c.b16 %v345, %v344
      %v396 = vpack.c.b16 %v347, %v346
      %v397 = vpack.c.b16 %v349, %v348
      %v398 = vpack.c.b16 %v351, %v350
      %v399 = vpack.c.b16 %v353, %v352
      %v400 = vpack.c.b16 %v355, %v354
      %v401 = vpack.c.b16 %v357, %v356
      %v402 = vpack.c.b16 %v359, %v358
      %v403 = vpack.c.b16 %v361, %v360
      %v404 = vpack.c.b16 %v363, %v362
      %v405 = vpack.c.b16 %v365, %v364
      %v406 = vpack.c.b16 %v367, %v366
      %v407 = vpack.c.b16 %v369, %v368
      %v408 = vpack.c.b16 %v371, %v370
      %v409 = vpack.c.b16 %v373, %v372
      %v410 = vpack.c.b16 %v375, %v374
      %v411 = vpack.c.b16 %v377, %v376
      %v412 = vpack.c.b16 %v379, %v378
      %v413 = vpack.c.b16 %v381, %v380
      %v422 = vunpack.c.l.b16 %v239
      %v423 = vunpack.c.l.b16 %v240
      %v424 = vunpack.c.l.b16 %v241
      %v425 = vunpack.c.l.b16 %v242
      %v426 = vunpack.c.l.b16 %v243
      %v427 = vunpack.c.l.b16 %v244
      %v428 = vunpack.c.l.b16 %v245
      %v429 = vunpack.c.l.b16 %v246
      %v430 = vpack.c.b16 %v423, %v422
      %v431 = vpack.c.b16 %v425, %v424
      %v432 = vpack.c.b16 %v427, %v426
      %v433 = vpack.c.b16 %v429, %v428
      %vm438 = vcmask 523264
      %v440 = vsel %vm438, %v382, 0
      %v443 = vsel %vm438, %v383, 0
      %v446 = vsel %vm438, %v384, 0
      %v449 = vsel %vm438, %v385, 0
      %v452 = vsel %vm438, %v386, 0
      %v455 = vsel %vm438, %v387, 0
      %v458 = vsel %vm438, %v388, 0
      %v461 = vsel %vm438, %v389, 0
      %v464 = vsel %vm438, %v390, 0
      %v467 = vsel %vm438, %v391, 0
      %v470 = vsel %vm438, %v392, 0
      %v473 = vsel %vm438, %v393, 0
      %v476 = vsel %vm438, %v394, 0
      %v479 = vsel %vm438, %v395, 0
      %v482 = vsel %vm438, %v396, 0
      %v485 = vsel %vm438, %v397, 0
      %v488 = vsel %vm438, %v398, 0
      %v491 = vsel %vm438, %v399, 0
      %v494 = vsel %vm438, %v400, 0
      %v497 = vsel %vm438, %v401, 0
      %v500 = vsel %vm438, %v402, 0
      %v503 = vsel %vm438, %v403, 0
      %v506 = vsel %vm438, %v404, 0
      %v509 = vsel %vm438, %v405, 0
      %v512 = vsel %vm438, %v406, 0
      %v515 = vsel %vm438, %v407, 0
      %v518 = vsel %vm438, %v408, 0
      %v521 = vsel %vm438, %v409, 0
      %v524 = vsel %vm438, %v410, 0
      %v527 = vsel %vm438, %v411, 0
      %v530 = vsel %vm438, %v412, 0
      %v533 = vsel %vm438, %v413, 0
      %535 = vmatprep.subr.bf16.mxu0 0
      %536 = vmatpush1.bf16.msra.mxu0 0
      %537 = vmatprep.subr.bf16.mxu0 0
      %538 = vmatpush1.bf16.msra.mxu0 0
      %539 = vmatprep.subr.bf16.mxu0 0
      %540 = vmatpush1.bf16.msra.mxu0 0
      %541 = vmatprep.subr.bf16.mxu0 0
      %542 = vmatpush1.bf16.msra.mxu0 0
      %543 = vmatprep.subr.bf16.mxu0 0
      %544 = vmatpush1.bf16.msra.mxu0 %v433
      %545 = vmatprep.subr.bf16.mxu0 0
      %546 = vmatpush1.bf16.msra.mxu0 %v432
      %547 = vmatprep.subr.bf16.mxu0 0
      %548 = vmatpush1.bf16.msra.mxu0 %v431
      %549 = vmatprep.subr.bf16.mxu0 0
      %550 = vmatpush1.bf16.msra.mxu0 %v430
      %551 = vmatprep.subr.bf16.mxu0 0
      %552 = vmatpush2.bf16.msra.mxu0 0
      %553 = vmatprep.subr.bf16.mxu0 0
      %554 = vmatpush2.bf16.msra.mxu0 0
      %555 = vmatprep.subr.bf16.mxu0 0
      %556 = vmatpush2.bf16.msra.mxu0 0
      %557 = vmatprep.subr.bf16.mxu0 0
      %558 = vmatpush2.bf16.msra.mxu0 0
      %559 = vmatprep.subr.bf16.mxu0 0
      %560 = vmatpush2.bf16.msra.mxu0 0
      %561 = vmatprep.subr.bf16.mxu0 0
      %562 = vmatpush2.bf16.msra.mxu0 0
      %563 = vmatprep.subr.bf16.mxu0 0
      %564 = vmatpush2.bf16.msra.mxu0 0
      %565 = vmatprep.subr.bf16.mxu0 0
      %566 = vmatpush2.bf16.msra.mxu0 0
      %567 = vmatprep.mubr.bf16.mxu0 0
      %568 = vmatmul.mubr.bf16.gmra.mxu0 %v440
      %v569 = vpop.f32.mrf.mxu0
      %v570 = vadd.f32 %v252, %v569
      %v571 = vpop.f32.mrf.mxu0
      %v572 = vpop.f32.mrf.mxu0
      %v573 = vadd.f32 %v252, %v572
      %v574 = vpop.f32.mrf.mxu0
      %575 = vmatprep.mubr.bf16.mxu0 0
      %576 = vmatmul.mubr.bf16.gmra.mxu0 %v443
      %v577 = vpop.f32.mrf.mxu0
      %v578 = vadd.f32 %v252, %v577
      %v579 = vpop.f32.mrf.mxu0
      %v580 = vpop.f32.mrf.mxu0
      %v581 = vadd.f32 %v252, %v580
      %v582 = vpop.f32.mrf.mxu0
      %583 = vmatprep.mubr.bf16.mxu0 0
      %584 = vmatmul.mubr.bf16.gmra.mxu0 %v446
      %v585 = vpop.f32.mrf.mxu0
      %v586 = vadd.f32 %v252, %v585
      %v587 = vpop.f32.mrf.mxu0
      %v588 = vpop.f32.mrf.mxu0
      %v589 = vadd.f32 %v252, %v588
      %v590 = vpop.f32.mrf.mxu0
      %591 = vmatprep.mubr.bf16.mxu0 0
      %592 = vmatmul.mubr.bf16.gmra.mxu0 %v449
      %v593 = vpop.f32.mrf.mxu0
      %v594 = vadd.f32 %v252, %v593
      %v595 = vpop.f32.mrf.mxu0
      %v596 = vpop.f32.mrf.mxu0
      %v597 = vadd.f32 %v252, %v596
      %v598 = vpop.f32.mrf.mxu0
      %599 = vmatprep.mubr.bf16.mxu0 0
      %600 = vmatmul.mubr.bf16.gmra.mxu0 %v452
      %v601 = vpop.f32.mrf.mxu0
      %v602 = vadd.f32 %v252, %v601
      %v603 = vpop.f32.mrf.mxu0
      %v604 = vpop.f32.mrf.mxu0
      %v605 = vadd.f32 %v252, %v604
      %v606 = vpop.f32.mrf.mxu0
      %607 = vmatprep.mubr.bf16.mxu0 0
      %608 = vmatmul.mubr.bf16.gmra.mxu0 %v455
      %v609 = vpop.f32.mrf.mxu0
      %v610 = vadd.f32 %v252, %v609
      %v611 = vpop.f32.mrf.mxu0
      %v612 = vpop.f32.mrf.mxu0
      %v613 = vadd.f32 %v252, %v612
      %v614 = vpop.f32.mrf.mxu0
      %615 = vmatprep.mubr.bf16.mxu0 0
      %616 = vmatmul.mubr.bf16.gmra.mxu0 %v458
      %v617 = vpop.f32.mrf.mxu0
      %v618 = vadd.f32 %v252, %v617
      %v619 = vpop.f32.mrf.mxu0
      %v620 = vpop.f32.mrf.mxu0
      %v621 = vadd.f32 %v252, %v620
      %v622 = vpop.f32.mrf.mxu0
      %623 = vmatprep.mubr.bf16.mxu0 0
      %624 = vmatmul.mubr.bf16.gmra.mxu0 %v461
      %v625 = vpop.f32.mrf.mxu0
      %v626 = vadd.f32 %v252, %v625
      %v627 = vpop.f32.mrf.mxu0
      %v628 = vpop.f32.mrf.mxu0
      %v629 = vadd.f32 %v252, %v628
      %v630 = vpop.f32.mrf.mxu0
      %631 = vmatprep.mubr.bf16.mxu0 0
      %632 = vmatmul.mubr.bf16.gmra.mxu0 %v464
      %v633 = vpop.f32.mrf.mxu0
      %v634 = vadd.f32 %v252, %v633
      %v635 = vpop.f32.mrf.mxu0
      %v636 = vpop.f32.mrf.mxu0
      %v637 = vadd.f32 %v252, %v636
      %v638 = vpop.f32.mrf.mxu0
      %639 = vmatprep.mubr.bf16.mxu0 0
      %640 = vmatmul.mubr.bf16.gmra.mxu0 %v467
      %v641 = vpop.f32.mrf.mxu0
      %v642 = vadd.f32 %v252, %v641
      %v643 = vpop.f32.mrf.mxu0
      %v644 = vpop.f32.mrf.mxu0
      %v645 = vadd.f32 %v252, %v644
      %v646 = vpop.f32.mrf.mxu0
      %647 = vmatprep.mubr.bf16.mxu0 0
      %648 = vmatmul.mubr.bf16.gmra.mxu0 %v470
      %v649 = vpop.f32.mrf.mxu0
      %v650 = vadd.f32 %v252, %v649
      %v651 = vpop.f32.mrf.mxu0
      %v652 = vpop.f32.mrf.mxu0
      %v653 = vadd.f32 %v252, %v652
      %v654 = vpop.f32.mrf.mxu0
      %655 = vmatprep.mubr.bf16.mxu0 0
      %656 = vmatmul.mubr.bf16.gmra.mxu0 %v473
      %v657 = vpop.f32.mrf.mxu0
      %v658 = vadd.f32 %v252, %v657
      %v659 = vpop.f32.mrf.mxu0
      %v660 = vpop.f32.mrf.mxu0
      %v661 = vadd.f32 %v252, %v660
      %v662 = vpop.f32.mrf.mxu0
      %663 = vmatprep.mubr.bf16.mxu0 0
      %664 = vmatmul.mubr.bf16.gmra.mxu0 %v476
      %v665 = vpop.f32.mrf.mxu0
      %v666 = vadd.f32 %v252, %v665
      %v667 = vpop.f32.mrf.mxu0
      %v668 = vpop.f32.mrf.mxu0
      %v669 = vadd.f32 %v252, %v668
      %v670 = vpop.f32.mrf.mxu0
      %671 = vmatprep.mubr.bf16.mxu0 0
      %672 = vmatmul.mubr.bf16.gmra.mxu0 %v479
      %v673 = vpop.f32.mrf.mxu0
      %v674 = vadd.f32 %v252, %v673
      %v675 = vpop.f32.mrf.mxu0
      %v676 = vpop.f32.mrf.mxu0
      %v677 = vadd.f32 %v252, %v676
      %v678 = vpop.f32.mrf.mxu0
      %679 = vmatprep.mubr.bf16.mxu0 0
      %680 = vmatmul.mubr.bf16.gmra.mxu0 %v482
      %v681 = vpop.f32.mrf.mxu0
      %v682 = vadd.f32 %v252, %v681
      %v683 = vpop.f32.mrf.mxu0
      %v684 = vpop.f32.mrf.mxu0
      %v685 = vadd.f32 %v252, %v684
      %v686 = vpop.f32.mrf.mxu0
      %687 = vmatprep.mubr.bf16.mxu0 0
      %688 = vmatmul.mubr.bf16.gmra.mxu0 %v485
      %v689 = vpop.f32.mrf.mxu0
      %v690 = vadd.f32 %v252, %v689
      %v691 = vpop.f32.mrf.mxu0
      %v692 = vpop.f32.mrf.mxu0
      %v693 = vadd.f32 %v252, %v692
      %v694 = vpop.f32.mrf.mxu0
      %695 = vmatprep.mubr.bf16.mxu0 0
      %696 = vmatmul.mubr.bf16.gmra.mxu0 %v488
      %v697 = vpop.f32.mrf.mxu0
      %v698 = vadd.f32 %v252, %v697
      %v699 = vpop.f32.mrf.mxu0
      %v700 = vpop.f32.mrf.mxu0
      %v701 = vadd.f32 %v252, %v700
      %v702 = vpop.f32.mrf.mxu0
      %703 = vmatprep.mubr.bf16.mxu0 0
      %704 = vmatmul.mubr.bf16.gmra.mxu0 %v491
      %v705 = vpop.f32.mrf.mxu0
      %v706 = vadd.f32 %v252, %v705
      %v707 = vpop.f32.mrf.mxu0
      %v708 = vpop.f32.mrf.mxu0
      %v709 = vadd.f32 %v252, %v708
      %v710 = vpop.f32.mrf.mxu0
      %711 = vmatprep.mubr.bf16.mxu0 0
      %712 = vmatmul.mubr.bf16.gmra.mxu0 %v494
      %v713 = vpop.f32.mrf.mxu0
      %v714 = vadd.f32 %v252, %v713
      %v715 = vpop.f32.mrf.mxu0
      %v716 = vpop.f32.mrf.mxu0
      %v717 = vadd.f32 %v252, %v716
      %v718 = vpop.f32.mrf.mxu0
      %719 = vmatprep.mubr.bf16.mxu0 0
      %720 = vmatmul.mubr.bf16.gmra.mxu0 %v497
      %v721 = vpop.f32.mrf.mxu0
      %v722 = vadd.f32 %v252, %v721
      %v723 = vpop.f32.mrf.mxu0
      %v724 = vpop.f32.mrf.mxu0
      %v725 = vadd.f32 %v252, %v724
      %v726 = vpop.f32.mrf.mxu0
      %727 = vmatprep.mubr.bf16.mxu0 0
      %728 = vmatmul.mubr.bf16.gmra.mxu0 %v500
      %v729 = vpop.f32.mrf.mxu0
      %v730 = vadd.f32 %v252, %v729
      %v731 = vpop.f32.mrf.mxu0
      %v732 = vpop.f32.mrf.mxu0
      %v733 = vadd.f32 %v252, %v732
      %v734 = vpop.f32.mrf.mxu0
      %735 = vmatprep.mubr.bf16.mxu0 0
      %736 = vmatmul.mubr.bf16.gmra.mxu0 %v503
      %v737 = vpop.f32.mrf.mxu0
      %v738 = vadd.f32 %v252, %v737
      %v739 = vpop.f32.mrf.mxu0
      %v740 = vpop.f32.mrf.mxu0
      %v741 = vadd.f32 %v252, %v740
      %v742 = vpop.f32.mrf.mxu0
      %743 = vmatprep.mubr.bf16.mxu0 0
      %744 = vmatmul.mubr.bf16.gmra.mxu0 %v506
      %v745 = vpop.f32.mrf.mxu0
      %v746 = vadd.f32 %v252, %v745
      %v747 = vpop.f32.mrf.mxu0
      %v748 = vpop.f32.mrf.mxu0
      %v749 = vadd.f32 %v252, %v748
      %v750 = vpop.f32.mrf.mxu0
      %751 = vmatprep.mubr.bf16.mxu0 0
      %752 = vmatmul.mubr.bf16.gmra.mxu0 %v509
      %v753 = vpop.f32.mrf.mxu0
      %v754 = vadd.f32 %v252, %v753
      %v755 = vpop.f32.mrf.mxu0
      %v756 = vpop.f32.mrf.mxu0
      %v757 = vadd.f32 %v252, %v756
      %v758 = vpop.f32.mrf.mxu0
      %759 = vmatprep.mubr.bf16.mxu0 0
      %760 = vmatmul.mubr.bf16.gmra.mxu0 %v512
      %v761 = vpop.f32.mrf.mxu0
      %v762 = vadd.f32 %v252, %v761
      %v763 = vpop.f32.mrf.mxu0
      %v764 = vpop.f32.mrf.mxu0
      %v765 = vadd.f32 %v252, %v764
      %v766 = vpop.f32.mrf.mxu0
      %767 = vmatprep.mubr.bf16.mxu0 0
      %768 = vmatmul.mubr.bf16.gmra.mxu0 %v515
      %v769 = vpop.f32.mrf.mxu0
      %v770 = vadd.f32 %v252, %v769
      %v771 = vpop.f32.mrf.mxu0
      %v772 = vpop.f32.mrf.mxu0
      %v773 = vadd.f32 %v252, %v772
      %v774 = vpop.f32.mrf.mxu0
      %775 = vmatprep.mubr.bf16.mxu0 0
      %776 = vmatmul.mubr.bf16.gmra.mxu0 %v518
      %v777 = vpop.f32.mrf.mxu0
      %v778 = vadd.f32 %v252, %v777
      %v779 = vpop.f32.mrf.mxu0
      %v780 = vpop.f32.mrf.mxu0
      %v781 = vadd.f32 %v252, %v780
      %v782 = vpop.f32.mrf.mxu0
      %783 = vmatprep.mubr.bf16.mxu0 0
      %784 = vmatmul.mubr.bf16.gmra.mxu0 %v521
      %v785 = vpop.f32.mrf.mxu0
      %v786 = vadd.f32 %v252, %v785
      %v787 = vpop.f32.mrf.mxu0
      %v788 = vpop.f32.mrf.mxu0
      %v789 = vadd.f32 %v252, %v788
      %v790 = vpop.f32.mrf.mxu0
      %791 = vmatprep.mubr.bf16.mxu0 0
      %792 = vmatmul.mubr.bf16.gmra.mxu0 %v524
      %v793 = vpop.f32.mrf.mxu0
      %v794 = vadd.f32 %v252, %v793
      %v795 = vpop.f32.mrf.mxu0
      %v796 = vpop.f32.mrf.mxu0
      %v797 = vadd.f32 %v252, %v796
      %v798 = vpop.f32.mrf.mxu0
      %799 = vmatprep.mubr.bf16.mxu0 0
      %800 = vmatmul.mubr.bf16.gmra.mxu0 %v527
      %v801 = vpop.f32.mrf.mxu0
      %v802 = vadd.f32 %v252, %v801
      %v803 = vpop.f32.mrf.mxu0
      %v804 = vpop.f32.mrf.mxu0
      %v805 = vadd.f32 %v252, %v804
      %v806 = vpop.f32.mrf.mxu0
      %807 = vmatprep.mubr.bf16.mxu0 0
      %808 = vmatmul.mubr.bf16.gmra.mxu0 %v530
      %v809 = vpop.f32.mrf.mxu0
      %v810 = vadd.f32 %v252, %v809
      %v811 = vpop.f32.mrf.mxu0
      %v812 = vpop.f32.mrf.mxu0
      %v813 = vadd.f32 %v252, %v812
      %v814 = vpop.f32.mrf.mxu0
      %815 = vmatprep.mubr.bf16.mxu0 0
      %816 = vmatmul.mubr.bf16.gmra.mxu0 %v533
      %v817 = vpop.f32.mrf.mxu0
      %v818 = vadd.f32 %v252, %v817
      %v819 = vpop.f32.mrf.mxu0
      %v820 = vpop.f32.mrf.mxu0
      %v821 = vadd.f32 %v252, %v820
      %v822 = vpop.f32.mrf.mxu0
      %823 = vdwg.mxu0
      %v824 = vmul.f32 %v570, 0.2
      %v825 = vmul.f32 %v573, 0.2
      %v826 = vmul.f32 %v578, 0.2
      %v827 = vmul.f32 %v581, 0.2
      %v828 = vmul.f32 %v586, 0.2
      %v829 = vmul.f32 %v589, 0.2
      %v830 = vmul.f32 %v594, 0.2
      %v831 = vmul.f32 %v597, 0.2
      %v832 = vmul.f32 %v602, 0.2
      %v833 = vmul.f32 %v605, 0.2
      %v834 = vmul.f32 %v610, 0.2
      %v835 = vmul.f32 %v613, 0.2
      %v836 = vmul.f32 %v618, 0.2
      %v837 = vmul.f32 %v621, 0.2
      %v838 = vmul.f32 %v626, 0.2
      %v839 = vmul.f32 %v629, 0.2
      %v840 = vmul.f32 %v634, 0.2
      %v841 = vmul.f32 %v637, 0.2
      %v842 = vmul.f32 %v642, 0.2
      %v843 = vmul.f32 %v645, 0.2
      %v844 = vmul.f32 %v650, 0.2
      %v845 = vmul.f32 %v653, 0.2
      %v846 = vmul.f32 %v658, 0.2
      %v847 = vmul.f32 %v661, 0.2
      %v848 = vmul.f32 %v666, 0.2
      %v849 = vmul.f32 %v669, 0.2
      %v850 = vmul.f32 %v674, 0.2
      %v851 = vmul.f32 %v677, 0.2
      %v852 = vmul.f32 %v682, 0.2
      %v853 = vmul.f32 %v685, 0.2
      %v854 = vmul.f32 %v690, 0.2
      %v855 = vmul.f32 %v693, 0.2
      %v856 = vmul.f32 %v698, 0.2
      %v857 = vmul.f32 %v701, 0.2
      %v858 = vmul.f32 %v706, 0.2
      %v859 = vmul.f32 %v709, 0.2
      %v860 = vmul.f32 %v714, 0.2
      %v861 = vmul.f32 %v717, 0.2
      %v862 = vmul.f32 %v722, 0.2
      %v863 = vmul.f32 %v725, 0.2
      %v864 = vmul.f32 %v730, 0.2
      %v865 = vmul.f32 %v733, 0.2
      %v866 = vmul.f32 %v738, 0.2
      %v867 = vmul.f32 %v741, 0.2
      %v868 = vmul.f32 %v746, 0.2
      %v869 = vmul.f32 %v749, 0.2
      %v870 = vmul.f32 %v754, 0.2
      %v871 = vmul.f32 %v757, 0.2
      %v872 = vmul.f32 %v762, 0.2
      %v873 = vmul.f32 %v765, 0.2
      %v874 = vmul.f32 %v770, 0.2
      %v875 = vmul.f32 %v773, 0.2
      %v876 = vmul.f32 %v778, 0.2
      %v877 = vmul.f32 %v781, 0.2
      %v878 = vmul.f32 %v786, 0.2
      %v879 = vmul.f32 %v789, 0.2
      %v880 = vmul.f32 %v794, 0.2
      %v881 = vmul.f32 %v797, 0.2
      %v882 = vmul.f32 %v802, 0.2
      %v883 = vmul.f32 %v805, 0.2
      %v884 = vmul.f32 %v810, 0.2
      %v885 = vmul.f32 %v813, 0.2
      %v886 = vmul.f32 %v818, 0.2
      %v887 = vmul.f32 %v821, 0.2
      %v888 = vmax.f32 %v570, %v824
      %v889 = vmax.f32 %v573, %v825
      %v890 = vmax.f32 %v578, %v826
      %v891 = vmax.f32 %v581, %v827
      %v892 = vmax.f32 %v586, %v828
      %v893 = vmax.f32 %v589, %v829
      %v894 = vmax.f32 %v594, %v830
      %v895 = vmax.f32 %v597, %v831
      %v896 = vmax.f32 %v602, %v832
      %v897 = vmax.f32 %v605, %v833
      %v898 = vmax.f32 %v610, %v834
      %v899 = vmax.f32 %v613, %v835
      %v900 = vmax.f32 %v618, %v836
      %v901 = vmax.f32 %v621, %v837
      %v902 = vmax.f32 %v626, %v838
      %v903 = vmax.f32 %v629, %v839
      %v904 = vmax.f32 %v634, %v840
      %v905 = vmax.f32 %v637, %v841
      %v906 = vmax.f32 %v642, %v842
      %v907 = vmax.f32 %v645, %v843
      %v908 = vmax.f32 %v650, %v844
      %v909 = vmax.f32 %v653, %v845
      %v910 = vmax.f32 %v658, %v846
      %v911 = vmax.f32 %v661, %v847
      %v912 = vmax.f32 %v666, %v848
      %v913 = vmax.f32 %v669, %v849
      %v914 = vmax.f32 %v674, %v850
      %v915 = vmax.f32 %v677, %v851
      %v916 = vmax.f32 %v682, %v852
      %v917 = vmax.f32 %v685, %v853
      %v918 = vmax.f32 %v690, %v854
      %v919 = vmax.f32 %v693, %v855
      %v920 = vmax.f32 %v698, %v856
      %v921 = vmax.f32 %v701, %v857
      %v922 = vmax.f32 %v706, %v858
      %v923 = vmax.f32 %v709, %v859
      %v924 = vmax.f32 %v714, %v860
      %v925 = vmax.f32 %v717, %v861
      %v926 = vmax.f32 %v722, %v862
      %v927 = vmax.f32 %v725, %v863
      %v928 = vmax.f32 %v730, %v864
      %v929 = vmax.f32 %v733, %v865
      %v930 = vmax.f32 %v738, %v866
      %v931 = vmax.f32 %v741, %v867
      %v932 = vmax.f32 %v746, %v868
      %v933 = vmax.f32 %v749, %v869
      %v934 = vmax.f32 %v754, %v870
      %v935 = vmax.f32 %v757, %v871
      %v936 = vmax.f32 %v762, %v872
      %v937 = vmax.f32 %v765, %v873
      %v938 = vmax.f32 %v770, %v874
      %v939 = vmax.f32 %v773, %v875
      %v940 = vmax.f32 %v778, %v876
      %v941 = vmax.f32 %v781, %v877
      %v942 = vmax.f32 %v786, %v878
      %v943 = vmax.f32 %v789, %v879
      %v944 = vmax.f32 %v794, %v880
      %v945 = vmax.f32 %v797, %v881
      %v946 = vmax.f32 %v802, %v882
      %v947 = vmax.f32 %v805, %v883
      %v948 = vmax.f32 %v810, %v884
      %v949 = vmax.f32 %v813, %v885
      %v950 = vmax.f32 %v818, %v886
      %v951 = vmax.f32 %v821, %v887
      %v952 = vpack.c.bf16 %v889, %v888
      %v953 = vpack.c.bf16 %v891, %v890
      %v954 = vpack.c.bf16 %v893, %v892
      %v955 = vpack.c.bf16 %v895, %v894
      %v956 = vpack.c.bf16 %v897, %v896
      %v957 = vpack.c.bf16 %v899, %v898
      %v958 = vpack.c.bf16 %v901, %v900
      %v959 = vpack.c.bf16 %v903, %v902
      %v960 = vpack.c.bf16 %v905, %v904
      %v961 = vpack.c.bf16 %v907, %v906
      %v962 = vpack.c.bf16 %v909, %v908
      %v963 = vpack.c.bf16 %v911, %v910
      %v964 = vpack.c.bf16 %v913, %v912
      %v965 = vpack.c.bf16 %v915, %v914
      %v966 = vpack.c.bf16 %v917, %v916
      %v967 = vpack.c.bf16 %v919, %v918
      %v968 = vpack.c.bf16 %v921, %v920
      %v969 = vpack.c.bf16 %v923, %v922
      %v970 = vpack.c.bf16 %v925, %v924
      %v971 = vpack.c.bf16 %v927, %v926
      %v972 = vpack.c.bf16 %v929, %v928
      %v973 = vpack.c.bf16 %v931, %v930
      %v974 = vpack.c.bf16 %v933, %v932
      %v975 = vpack.c.bf16 %v935, %v934
      %v976 = vpack.c.bf16 %v937, %v936
      %v977 = vpack.c.bf16 %v939, %v938
      %v978 = vpack.c.bf16 %v941, %v940
      %v979 = vpack.c.bf16 %v943, %v942
      %v980 = vpack.c.bf16 %v945, %v944
      %v981 = vpack.c.bf16 %v947, %v946
      %v982 = vpack.c.bf16 %v949, %v948
      %v983 = vpack.c.bf16 %v951, %v950
      %v1016 = vunpack.c.l.b16 %v952
      %v1017 = vunpack.c.h.b16 %v952
      %v1018 = vunpack.c.l.b16 %v953
      %v1019 = vunpack.c.h.b16 %v953
      %v1020 = vunpack.c.l.b16 %v954
      %v1021 = vunpack.c.h.b16 %v954
      %v1022 = vunpack.c.l.b16 %v955
      %v1023 = vunpack.c.h.b16 %v955
      %v1024 = vunpack.c.l.b16 %v956
      %v1025 = vunpack.c.h.b16 %v956
      %v1026 = vunpack.c.l.b16 %v957
      %v1027 = vunpack.c.h.b16 %v957
      %v1028 = vunpack.c.l.b16 %v958
      %v1029 = vunpack.c.h.b16 %v958
      %v1030 = vunpack.c.l.b16 %v959
      %v1031 = vunpack.c.h.b16 %v959
      %v1032 = vunpack.c.l.b16 %v960
      %v1033 = vunpack.c.h.b16 %v960
      %v1034 = vunpack.c.l.b16 %v961
      %v1035 = vunpack.c.h.b16 %v961
      %v1036 = vunpack.c.l.b16 %v962
      %v1037 = vunpack.c.h.b16 %v962
      %v1038 = vunpack.c.l.b16 %v963
      %v1039 = vunpack.c.h.b16 %v963
      %v1040 = vunpack.c.l.b16 %v964
      %v1041 = vunpack.c.h.b16 %v964
      %v1042 = vunpack.c.l.b16 %v965
      %v1043 = vunpack.c.h.b16 %v965
      %v1044 = vunpack.c.l.b16 %v966
      %v1045 = vunpack.c.h.b16 %v966
      %v1046 = vunpack.c.l.b16 %v967
      %v1047 = vunpack.c.h.b16 %v967
      %v1048 = vunpack.c.l.b16 %v968
      %v1049 = vunpack.c.h.b16 %v968
      %v1050 = vunpack.c.l.b16 %v969
      %v1051 = vunpack.c.h.b16 %v969
      %v1052 = vunpack.c.l.b16 %v970
      %v1053 = vunpack.c.h.b16 %v970
      %v1054 = vunpack.c.l.b16 %v971
      %v1055 = vunpack.c.h.b16 %v971
      %v1056 = vunpack.c.l.b16 %v972
      %v1057 = vunpack.c.h.b16 %v972
      %v1058 = vunpack.c.l.b16 %v973
      %v1059 = vunpack.c.h.b16 %v973
      %v1060 = vunpack.c.l.b16 %v974
      %v1061 = vunpack.c.h.b16 %v974
      %v1062 = vunpack.c.l.b16 %v975
      %v1063 = vunpack.c.h.b16 %v975
      %v1064 = vunpack.c.l.b16 %v976
      %v1065 = vunpack.c.h.b16 %v976
      %v1066 = vunpack.c.l.b16 %v977
      %v1067 = vunpack.c.h.b16 %v977
      %v1068 = vunpack.c.l.b16 %v978
      %v1069 = vunpack.c.h.b16 %v978
      %v1070 = vunpack.c.l.b16 %v979
      %v1071 = vunpack.c.h.b16 %v979
      %v1072 = vunpack.c.l.b16 %v980
      %v1073 = vunpack.c.h.b16 %v980
      %v1074 = vunpack.c.l.b16 %v981
      %v1075 = vunpack.c.h.b16 %v981
      %v1076 = vunpack.c.l.b16 %v982
      %v1077 = vunpack.c.h.b16 %v982
      %v1078 = vunpack.c.l.b16 %v983
      %v1079 = vunpack.c.h.b16 %v983
      %v1080 = vpack.c.b16 %v1016, %v1016
      %v1081 = vpack.c.b16 %v1017, %v1017
      %v1082 = vpack.c.b16 %v1018, %v1018
      %v1083 = vpack.c.b16 %v1019, %v1019
      %v1084 = vpack.c.b16 %v1020, %v1020
      %v1085 = vpack.c.b16 %v1021, %v1021
      %v1086 = vpack.c.b16 %v1022, %v1022
      %v1087 = vpack.c.b16 %v1023, %v1023
      %v1088 = vpack.c.b16 %v1024, %v1024
      %v1089 = vpack.c.b16 %v1025, %v1025
      %v1090 = vpack.c.b16 %v1026, %v1026
      %v1091 = vpack.c.b16 %v1027, %v1027
      %v1092 = vpack.c.b16 %v1028, %v1028
      %v1093 = vpack.c.b16 %v1029, %v1029
      %v1094 = vpack.c.b16 %v1030, %v1030
      %v1095 = vpack.c.b16 %v1031, %v1031
      %v1096 = vpack.c.b16 %v1032, %v1032
      %v1097 = vpack.c.b16 %v1033, %v1033
      %v1098 = vpack.c.b16 %v1034, %v1034
      %v1099 = vpack.c.b16 %v1035, %v1035
      %v1100 = vpack.c.b16 %v1036, %v1036
      %v1101 = vpack.c.b16 %v1037, %v1037
      %v1102 = vpack.c.b16 %v1038, %v1038
      %v1103 = vpack.c.b16 %v1039, %v1039
      %v1104 = vpack.c.b16 %v1040, %v1040
      %v1105 = vpack.c.b16 %v1041, %v1041
      %v1106 = vpack.c.b16 %v1042, %v1042
      %v1107 = vpack.c.b16 %v1043, %v1043
      %v1108 = vpack.c.b16 %v1044, %v1044
      %v1109 = vpack.c.b16 %v1045, %v1045
      %v1110 = vpack.c.b16 %v1046, %v1046
      %v1111 = vpack.c.b16 %v1047, %v1047
      %v1112 = vpack.c.b16 %v1048, %v1048
      %v1113 = vpack.c.b16 %v1049, %v1049
      %v1114 = vpack.c.b16 %v1050, %v1050
      %v1115 = vpack.c.b16 %v1051, %v1051
      %v1116 = vpack.c.b16 %v1052, %v1052
      %v1117 = vpack.c.b16 %v1053, %v1053
      %v1118 = vpack.c.b16 %v1054, %v1054
      %v1119 = vpack.c.b16 %v1055, %v1055
      %v1120 = vpack.c.b16 %v1056, %v1056
      %v1121 = vpack.c.b16 %v1057, %v1057
      %v1122 = vpack.c.b16 %v1058, %v1058
      %v1123 = vpack.c.b16 %v1059, %v1059
      %v1124 = vpack.c.b16 %v1060, %v1060
      %v1125 = vpack.c.b16 %v1061, %v1061
      %v1126 = vpack.c.b16 %v1062, %v1062
      %v1127 = vpack.c.b16 %v1063, %v1063
      %v1128 = vpack.c.b16 %v1064, %v1064
      %v1129 = vpack.c.b16 %v1065, %v1065
      %v1130 = vpack.c.b16 %v1066, %v1066
      %v1131 = vpack.c.b16 %v1067, %v1067
      %v1132 = vpack.c.b16 %v1068, %v1068
      %v1133 = vpack.c.b16 %v1069, %v1069
      %v1134 = vpack.c.b16 %v1070, %v1070
      %v1135 = vpack.c.b16 %v1071, %v1071
      %v1136 = vpack.c.b16 %v1072, %v1072
      %v1137 = vpack.c.b16 %v1073, %v1073
      %v1138 = vpack.c.b16 %v1074, %v1074
      %v1139 = vpack.c.b16 %v1075, %v1075
      %v1140 = vpack.c.b16 %v1076, %v1076
      %v1141 = vpack.c.b16 %v1077, %v1077
      %v1142 = vpack.c.b16 %v1078, %v1078
      %v1143 = vpack.c.b16 %v1079, %v1079
      %vm1208 = vcmask 125952
      %1209 = vst.msk [vmem:[%s172] sm:$0xf] %vm1208, %v1080
      %1210 = vst.msk [vmem:[%s172 + $0x4] sm:$0xf] %vm1208, %v1081
      %1211 = vst.msk [vmem:[%s172 + $0x8] sm:$0xf] %vm1208, %v1082
      %1212 = vst.msk [vmem:[%s172 + $0xc] sm:$0xf] %vm1208, %v1083
      %1213 = vst.msk [vmem:[%s172 + $0x10] sm:$0xf] %vm1208, %v1084
      %1214 = vst.msk [vmem:[%s172 + $0x14] sm:$0xf] %vm1208, %v1085
      %1215 = vst.msk [vmem:[%s172 + $0x18] sm:$0xf] %vm1208, %v1086
      %1216 = vst.msk [vmem:[%s172 + $0x1c] sm:$0xf] %vm1208, %v1087
      %1217 = vst.msk [vmem:[%s172 + $0x20] sm:$0xf] %vm1208, %v1088
      %1218 = vst.msk [vmem:[%s172 + $0x24] sm:$0xf] %vm1208, %v1089
      %1219 = vst.msk [vmem:[%s172 + $0x28] sm:$0xf] %vm1208, %v1090
      %1220 = vst.msk [vmem:[%s172 + $0x2c] sm:$0xf] %vm1208, %v1091
      %1221 = vst.msk [vmem:[%s172 + $0x30] sm:$0xf] %vm1208, %v1092
      %1222 = vst.msk [vmem:[%s172 + $0x34] sm:$0xf] %vm1208, %v1093
      %1223 = vst.msk [vmem:[%s172 + $0x38] sm:$0xf] %vm1208, %v1094
      %1224 = vst.msk [vmem:[%s172 + $0x3c] sm:$0xf] %vm1208, %v1095
      %1225 = vst.msk [vmem:[%s172 + $0x40] sm:$0xf] %vm1208, %v1096
      %1226 = vst.msk [vmem:[%s172 + $0x44] sm:$0xf] %vm1208, %v1097
      %1227 = vst.msk [vmem:[%s172 + $0x48] sm:$0xf] %vm1208, %v1098
      %1228 = vst.msk [vmem:[%s172 + $0x4c] sm:$0xf] %vm1208, %v1099
      %1229 = vst.msk [vmem:[%s172 + $0x50] sm:$0xf] %vm1208, %v1100
      %1230 = vst.msk [vmem:[%s172 + $0x54] sm:$0xf] %vm1208, %v1101
      %1231 = vst.msk [vmem:[%s172 + $0x58] sm:$0xf] %vm1208, %v1102
      %1232 = vst.msk [vmem:[%s172 + $0x5c] sm:$0xf] %vm1208, %v1103
      %1233 = vst.msk [vmem:[%s172 + $0x60] sm:$0xf] %vm1208, %v1104
      %1234 = vst.msk [vmem:[%s172 + $0x64] sm:$0xf] %vm1208, %v1105
      %1235 = vst.msk [vmem:[%s172 + $0x68] sm:$0xf] %vm1208, %v1106
      %1236 = vst.msk [vmem:[%s172 + $0x6c] sm:$0xf] %vm1208, %v1107
      %1237 = vst.msk [vmem:[%s172 + $0x70] sm:$0xf] %vm1208, %v1108
      %1238 = vst.msk [vmem:[%s172 + $0x74] sm:$0xf] %vm1208, %v1109
      %1239 = vst.msk [vmem:[%s172 + $0x78] sm:$0xf] %vm1208, %v1110
      %1240 = vst.msk [vmem:[%s172 + $0x7c] sm:$0xf] %vm1208, %v1111
      %1241 = vst.msk [vmem:[%s172 + $0x80] sm:$0xf] %vm1208, %v1112
      %1242 = vst.msk [vmem:[%s172 + $0x84] sm:$0xf] %vm1208, %v1113
      %1243 = vst.msk [vmem:[%s172 + $0x88] sm:$0xf] %vm1208, %v1114
      %1244 = vst.msk [vmem:[%s172 + $0x8c] sm:$0xf] %vm1208, %v1115
      %1245 = vst.msk [vmem:[%s172 + $0x90] sm:$0xf] %vm1208, %v1116
      %1246 = vst.msk [vmem:[%s172 + $0x94] sm:$0xf] %vm1208, %v1117
      %1247 = vst.msk [vmem:[%s172 + $0x98] sm:$0xf] %vm1208, %v1118
      %1248 = vst.msk [vmem:[%s172 + $0x9c] sm:$0xf] %vm1208, %v1119
      %1249 = vst.msk [vmem:[%s172 + $0xa0] sm:$0xf] %vm1208, %v1120
      %1250 = vst.msk [vmem:[%s172 + $0xa4] sm:$0xf] %vm1208, %v1121
      %1251 = vst.msk [vmem:[%s172 + $0xa8] sm:$0xf] %vm1208, %v1122
      %1252 = vst.msk [vmem:[%s172 + $0xac] sm:$0xf] %vm1208, %v1123
      %1253 = vst.msk [vmem:[%s172 + $0xb0] sm:$0xf] %vm1208, %v1124
      %1254 = vst.msk [vmem:[%s172 + $0xb4] sm:$0xf] %vm1208, %v1125
      %1255 = vst.msk [vmem:[%s172 + $0xb8] sm:$0xf] %vm1208, %v1126
      %1256 = vst.msk [vmem:[%s172 + $0xbc] sm:$0xf] %vm1208, %v1127
      %1257 = vst.msk [vmem:[%s172 + $0xc0] sm:$0xf] %vm1208, %v1128
      %1258 = vst.msk [vmem:[%s172 + $0xc4] sm:$0xf] %vm1208, %v1129
      %1259 = vst.msk [vmem:[%s172 + $0xc8] sm:$0xf] %vm1208, %v1130
      %1260 = vst.msk [vmem:[%s172 + $0xcc] sm:$0xf] %vm1208, %v1131
      %1261 = vst.msk [vmem:[%s172 + $0xd0] sm:$0xf] %vm1208, %v1132
      %1262 = vst.msk [vmem:[%s172 + $0xd4] sm:$0xf] %vm1208, %v1133
      %1263 = vst.msk [vmem:[%s172 + $0xd8] sm:$0xf] %vm1208, %v1134
      %1264 = vst.msk [vmem:[%s172 + $0xdc] sm:$0xf] %vm1208, %v1135
      %1265 = vst.msk [vmem:[%s172 + $0xe0] sm:$0xf] %vm1208, %v1136
      %1266 = vst.msk [vmem:[%s172 + $0xe4] sm:$0xf] %vm1208, %v1137
      %1267 = vst.msk [vmem:[%s172 + $0xe8] sm:$0xf] %vm1208, %v1138
      %1268 = vst.msk [vmem:[%s172 + $0xec] sm:$0xf] %vm1208, %v1139
      %1269 = vst.msk [vmem:[%s172 + $0xf0] sm:$0xf] %vm1208, %v1140
      %1270 = vst.msk [vmem:[%s172 + $0xf4] sm:$0xf] %vm1208, %v1141
      %1271 = vst.msk [vmem:[%s172 + $0xf8] sm:$0xf] %vm1208, %v1142
      %1272 = vst.msk [vmem:[%s172 + $0xfc] sm:$0xf] %vm1208, %v1143
      %s1273 = smul.u32 64, %s14
      %p1274 = scmp.lt.s32.totalorder %s1273, 255
      %s1275 = scalar_select %p1274, %s1273, 255
      %s1276 = smul.addr %s1275, 4
      %s1277 = scalar_lea.vmem %s3, %s1276
      // Predicated region
      $region33: #{multi_crit_forward.5} parent=31 // pred_check
        %p1278 = pneg %p100
      $region34: #{multi_crit_forward.5} parent=31 // pred_check_branch
        %1280 = sbr.rel (%p1278) target = $region36
      $region35: #{multi_crit_forward.5} parent=31 // pred_region
        %s1281 = smul.u32 64, %s14
      $region36: #{multi_crit_forward.5} parent=31 // pred_fallthru
        _
    $region32: #{multi_crit_forward.5} parent=5 // pred_fallthru
      _
    %p1282 = scmp.le.s32.totalorder 2, %s9
    // Predicated region
    $region37: #{multi_crit_forward.5} parent=5 // pred_check
      %p1283 = pneg %p1282
    $region38: #{multi_crit_forward.5} parent=5 // pred_check_branch
      %1285 = sbr.rel (%p1283) target = $region40
    $region39: #{multi_crit_forward.5} parent=5 // pred_region
      %s1286 = ssub.s32 %s9, 2
      // Predicated region
      $region41: #{multi_crit_forward.5} parent=39 // pred_check
        %p1287 = pneg %p106
      $region42: #{multi_crit_forward.5} parent=39 // pred_check_branch
        %1289 = sbr.rel (%p1287) target = $region44
      $region43: #{multi_crit_forward.5} parent=39 // pred_region
        %s1290 = smul.u32 64, %s15
        %p1291 = scmp.lt.s32.totalorder %s1290, 255
        %s1292 = scalar_select %p1291, %s1290, 255
        %s1293 = smul.addr %s1292, 4
        %s1294 = scalar_lea.vmem %s3, %s1293
      $region44: #{multi_crit_forward.5} parent=39 // pred_fallthru
        _
    $region40: #{multi_crit_forward.5} parent=5 // pred_fallthru
      _
  $region6: #{multi_crit_forward.5} parent=0 // loop_footer
    %s13 = sadd.s32 1, %s9
  $region7: #{multi_crit_forward.5} parent=0 // loop_footer_branch
    %8 = sbr.rel target = $region3
  $region8: #{multi_crit_forward.5} parent=0 // loop_exit
    _

// kernel: multi_crit_forward.6
$region0: #{multi_crit_forward.6}
  #allocation0 [shape = 'u32[]', space=smem, size = 0x4, offset = 0x4, fixed_abs, tag = 'smem constant byte address 0x4 - core index']
  #allocation1 [shape = 'u32[144,128]{1,0:T(1,128)}', space=vmem, size = 0x12000, scoped, tag = 'internal scratch']
  %s0 = inlined_call_operand.vmem [shape: bf16[512,256], index: 0, kind: input, shape index: {}]
  %s1 = inlined_call_operand.vmem [shape: bf16[256,32], index: 1, kind: input, shape index: {}]
  %s2 = inlined_call_operand.vmem [shape: f32[1,32], index: 2, kind: input, shape index: {}]
  %s3 = inlined_call_operand.vmem [shape: bf16[512,32], index: 3, kind: output, shape index: {}]
  %s4 = sld [smem:[#allocation0]]
  $region22: #{multi_crit_forward.6} parent=0
    _
  %s6 = ssub.s32 1, %s4
  %s7 = scalar_select 0, %s6, %s4
  // Predicated region
  $region2: #{multi_crit_forward.6} parent=0 // pred_check
    _
  $region3: #{multi_crit_forward.6} parent=0 // pred_check_branch
    %9 = sbr.rel (0) target = $region5
  $region4: #{multi_crit_forward.6} parent=0 // pred_region
    _
  $region5: #{multi_crit_forward.6} parent=0 // pred_fallthru
    _
  // Predicated region
  $region6: #{multi_crit_forward.6} parent=0 // pred_check
    _
  $region7: #{multi_crit_forward.6} parent=0 // pred_check_branch
    %11 = sbr.rel (0) target = $region9
  $region8: #{multi_crit_forward.6} parent=0 // pred_region
    _
  $region9: #{multi_crit_forward.6} parent=0 // pred_fallthru
    _
  // Predicated region
  $region10: #{multi_crit_forward.6} parent=0 // pred_check
    _
  $region11: #{multi_crit_forward.6} parent=0 // pred_check_branch
    %13 = sbr.rel (0) target = $region13
  $region12: #{multi_crit_forward.6} parent=0 // pred_region
    _
  $region13: #{multi_crit_forward.6} parent=0 // pred_fallthru
    _
  %v15 = vld [vmem:[%s0] sm:$0xff]
  %v16 = vld [vmem:[%s0 + $0x8] sm:$0xff]
  %v17 = vld [vmem:[%s0 + $0x10] sm:$0xff]
  %v18 = vld [vmem:[%s0 + $0x18] sm:$0xff]
  %v19 = vld [vmem:[%s0 + $0x20] sm:$0xff]
  %v20 = vld [vmem:[%s0 + $0x28] sm:$0xff]
  %v21 = vld [vmem:[%s0 + $0x30] sm:$0xff]
  %v22 = vld [vmem:[%s0 + $0x38] sm:$0xff]
  %v23 = vld [vmem:[%s0 + $0x40] sm:$0xff]
  %v24 = vld [vmem:[%s0 + $0x48] sm:$0xff]
  %v25 = vld [vmem:[%s0 + $0x50] sm:$0xff]
  %v26 = vld [vmem:[%s0 + $0x58] sm:$0xff]
  %v27 = vld [vmem:[%s0 + $0x60] sm:$0xff]
  %v28 = vld [vmem:[%s0 + $0x68] sm:$0xff]
  %v29 = vld [vmem:[%s0 + $0x70] sm:$0xff]
  %v30 = vld [vmem:[%s0 + $0x78] sm:$0xff]
  %v31 = vld [vmem:[%s0 + $0x80] sm:$0xff]
  %v32 = vld [vmem:[%s0 + $0x88] sm:$0xff]
  %v33 = vld [vmem:[%s0 + $0x90] sm:$0xff]
  %v34 = vld [vmem:[%s0 + $0x98] sm:$0xff]
  %v35 = vld [vmem:[%s0 + $0xa0] sm:$0xff]
  %v36 = vld [vmem:[%s0 + $0xa8] sm:$0xff]
  %v37 = vld [vmem:[%s0 + $0xb0] sm:$0xff]
  %v38 = vld [vmem:[%s0 + $0xb8] sm:$0xff]
  %v39 = vld [vmem:[%s0 + $0xc0] sm:$0xff]
  %v40 = vld [vmem:[%s0 + $0xc8] sm:$0xff]
  %v41 = vld [vmem:[%s0 + $0xd0] sm:$0xff]
  %v42 = vld [vmem:[%s0 + $0xd8] sm:$0xff]
  %v43 = vld [vmem:[%s0 + $0xe0] sm:$0xff]
  %v44 = vld [vmem:[%s0 + $0xe8] sm:$0xff]
  %v45 = vld [vmem:[%s0 + $0xf0] sm:$0xff]
  %v46 = vld [vmem:[%s0 + $0xf8] sm:$0xff]
  %v47 = vld [vmem:[%s0 + $0x100] sm:$0xff]
  %v48 = vld [vmem:[%s0 + $0x108] sm:$0xff]
  %v49 = vld [vmem:[%s0 + $0x110] sm:$0xff]
  %v50 = vld [vmem:[%s0 + $0x118] sm:$0xff]
  %v51 = vld [vmem:[%s0 + $0x120] sm:$0xff]
  %v52 = vld [vmem:[%s0 + $0x128] sm:$0xff]
  %v53 = vld [vmem:[%s0 + $0x130] sm:$0xff]
  %v54 = vld [vmem:[%s0 + $0x138] sm:$0xff]
  %v55 = vld [vmem:[%s0 + $0x140] sm:$0xff]
  %v56 = vld [vmem:[%s0 + $0x148] sm:$0xff]
  %v57 = vld [vmem:[%s0 + $0x150] sm:$0xff]
  %v58 = vld [vmem:[%s0 + $0x158] sm:$0xff]
  %v59 = vld [vmem:[%s0 + $0x160] sm:$0xff]
  %v60 = vld [vmem:[%s0 + $0x168] sm:$0xff]
  %v61 = vld [vmem:[%s0 + $0x170] sm:$0xff]
  %v62 = vld [vmem:[%s0 + $0x178] sm:$0xff]
  %v63 = vld [vmem:[%s0 + $0x180] sm:$0xff]
  %v64 = vld [vmem:[%s0 + $0x188] sm:$0xff]
  %v65 = vld [vmem:[%s0 + $0x190] sm:$0xff]
  %v66 = vld [vmem:[%s0 + $0x198] sm:$0xff]
  %v67 = vld [vmem:[%s0 + $0x1a0] sm:$0xff]
  %v68 = vld [vmem:[%s0 + $0x1a8] sm:$0xff]
  %v69 = vld [vmem:[%s0 + $0x1b0] sm:$0xff]
  %v70 = vld [vmem:[%s0 + $0x1b8] sm:$0xff]
  %v71 = vld [vmem:[%s0 + $0x1c0] sm:$0xff]
  %v72 = vld [vmem:[%s0 + $0x1c8] sm:$0xff]
  %v73 = vld [vmem:[%s0 + $0x1d0] sm:$0xff]
  %v74 = vld [vmem:[%s0 + $0x1d8] sm:$0xff]
  %v75 = vld [vmem:[%s0 + $0x1e0] sm:$0xff]
  %v76 = vld [vmem:[%s0 + $0x1e8] sm:$0xff]
  %v77 = vld [vmem:[%s0 + $0x1f0] sm:$0xff]
  %v78 = vld [vmem:[%s0 + $0x1f8] sm:$0xff]
  %v79 = vld [vmem:[%s1] sm:$0xf]
  %v80 = vld [vmem:[%s1 + $0x4] sm:$0xf]
  %v81 = vld [vmem:[%s1 + $0x8] sm:$0xf]
  %v82 = vld [vmem:[%s1 + $0xc] sm:$0xf]
  %v83 = vld [vmem:[%s1 + $0x10] sm:$0xf]
  %v84 = vld [vmem:[%s1 + $0x14] sm:$0xf]
  %v85 = vld [vmem:[%s1 + $0x18] sm:$0xf]
  %v86 = vld [vmem:[%s1 + $0x1c] sm:$0xf]
  %v87 = vld [vmem:[%s1 + $0x20] sm:$0xf]
  %v88 = vld [vmem:[%s1 + $0x24] sm:$0xf]
  %v89 = vld [vmem:[%s1 + $0x28] sm:$0xf]
  %v90 = vld [vmem:[%s1 + $0x2c] sm:$0xf]
  %v91 = vld [vmem:[%s1 + $0x30] sm:$0xf]
  %v92 = vld [vmem:[%s1 + $0x34] sm:$0xf]
  %v93 = vld [vmem:[%s1 + $0x38] sm:$0xf]
  %v94 = vld [vmem:[%s1 + $0x3c] sm:$0xf]
  %v95 = vld [vmem:[%s1 + $0x40] sm:$0xf]
  %v96 = vld [vmem:[%s1 + $0x44] sm:$0xf]
  %v97 = vld [vmem:[%s1 + $0x48] sm:$0xf]
  %v98 = vld [vmem:[%s1 + $0x4c] sm:$0xf]
  %v99 = vld [vmem:[%s1 + $0x50] sm:$0xf]
  %v100 = vld [vmem:[%s1 + $0x54] sm:$0xf]
  %v101 = vld [vmem:[%s1 + $0x58] sm:$0xf]
  %v102 = vld [vmem:[%s1 + $0x5c] sm:$0xf]
  %v103 = vld [vmem:[%s1 + $0x60] sm:$0xf]
  %v104 = vld [vmem:[%s1 + $0x64] sm:$0xf]
  %v105 = vld [vmem:[%s1 + $0x68] sm:$0xf]
  %v106 = vld [vmem:[%s1 + $0x6c] sm:$0xf]
  %v107 = vld [vmem:[%s1 + $0x70] sm:$0xf]
  %v108 = vld [vmem:[%s1 + $0x74] sm:$0xf]
  %v109 = vld [vmem:[%s1 + $0x78] sm:$0xf]
  %v110 = vld [vmem:[%s1 + $0x7c] sm:$0xf]
  %v111 = vld [vmem:[%s2] sm:$0x1]
  %v113 = vlaneseq
  %v114 = vshrl.u32 %v113, 7
  %v115 = vsub.s32 0, %v114
  %v116 = vrot.slane %v111, %v115
  %v182 = vunpack.c.l.b16 %v15
  %v183 = vunpack.c.h.b16 %v15
  %v184 = vunpack.c.l.b16 %v16
  %v185 = vunpack.c.h.b16 %v16
  %v186 = vunpack.c.l.b16 %v17
  %v187 = vunpack.c.h.b16 %v17
  %v188 = vunpack.c.l.b16 %v18
  %v189 = vunpack.c.h.b16 %v18
  %v190 = vunpack.c.l.b16 %v19
  %v191 = vunpack.c.h.b16 %v19
  %v192 = vunpack.c.l.b16 %v20
  %v193 = vunpack.c.h.b16 %v20
  %v194 = vunpack.c.l.b16 %v21
  %v195 = vunpack.c.h.b16 %v21
  %v196 = vunpack.c.l.b16 %v22
  %v197 = vunpack.c.h.b16 %v22
  %v198 = vunpack.c.l.b16 %v23
  %v199 = vunpack.c.h.b16 %v23
  %v200 = vunpack.c.l.b16 %v24
  %v201 = vunpack.c.h.b16 %v24
  %v202 = vunpack.c.l.b16 %v25
  %v203 = vunpack.c.h.b16 %v25
  %v204 = vunpack.c.l.b16 %v26
  %v205 = vunpack.c.h.b16 %v26
  %v206 = vunpack.c.l.b16 %v27
  %v207 = vunpack.c.h.b16 %v27
  %v208 = vunpack.c.l.b16 %v28
  %v209 = vunpack.c.h.b16 %v28
  %v210 = vunpack.c.l.b16 %v29
  %v211 = vunpack.c.h.b16 %v29
  %v212 = vunpack.c.l.b16 %v30
  %v213 = vunpack.c.h.b16 %v30
  %v214 = vunpack.c.l.b16 %v31
  %v215 = vunpack.c.h.b16 %v31
  %v216 = vunpack.c.l.b16 %v32
  %v217 = vunpack.c.h.b16 %v32
  %v218 = vunpack.c.l.b16 %v33
  %v219 = vunpack.c.h.b16 %v33
  %v220 = vunpack.c.l.b16 %v34
  %v221 = vunpack.c.h.b16 %v34
  %v222 = vunpack.c.l.b16 %v35
  %v223 = vunpack.c.h.b16 %v35
  %v224 = vunpack.c.l.b16 %v36
  %v225 = vunpack.c.h.b16 %v36
  %v226 = vunpack.c.l.b16 %v37
  %v227 = vunpack.c.h.b16 %v37
  %v228 = vunpack.c.l.b16 %v38
  %v229 = vunpack.c.h.b16 %v38
  %v230 = vunpack.c.l.b16 %v39
  %v231 = vunpack.c.h.b16 %v39
  %v232 = vunpack.c.l.b16 %v40
  %v233 = vunpack.c.h.b16 %v40
  %v234 = vunpack.c.l.b16 %v41
  %v235 = vunpack.c.h.b16 %v41
  %v236 = vunpack.c.l.b16 %v42
  %v237 = vunpack.c.h.b16 %v42
  %v238 = vunpack.c.l.b16 %v43
  %v239 = vunpack.c.h.b16 %v43
  %v240 = vunpack.c.l.b16 %v44
  %v241 = vunpack.c.h.b16 %v44
  %v242 = vunpack.c.l.b16 %v45
  %v243 = vunpack.c.h.b16 %v45
  %v244 = vunpack.c.l.b16 %v46
  %v245 = vunpack.c.h.b16 %v46
  %v246 = vunpack.c.l.b16 %v47
  %v247 = vunpack.c.h.b16 %v47
  %v248 = vunpack.c.l.b16 %v48
  %v249 = vunpack.c.h.b16 %v48
  %v250 = vunpack.c.l.b16 %v49
  %v251 = vunpack.c.h.b16 %v49
  %v252 = vunpack.c.l.b16 %v50
  %v253 = vunpack.c.h.b16 %v50
  %v254 = vunpack.c.l.b16 %v51
  %v255 = vunpack.c.h.b16 %v51
  %v256 = vunpack.c.l.b16 %v52
  %v257 = vunpack.c.h.b16 %v52
  %v258 = vunpack.c.l.b16 %v53
  %v259 = vunpack.c.h.b16 %v53
  %v260 = vunpack.c.l.b16 %v54
  %v261 = vunpack.c.h.b16 %v54
  %v262 = vunpack.c.l.b16 %v55
  %v263 = vunpack.c.h.b16 %v55
  %v264 = vunpack.c.l.b16 %v56
  %v265 = vunpack.c.h.b16 %v56
  %v266 = vunpack.c.l.b16 %v57
  %v267 = vunpack.c.h.b16 %v57
  %v268 = vunpack.c.l.b16 %v58
  %v269 = vunpack.c.h.b16 %v58
  %v270 = vunpack.c.l.b16 %v59
  %v271 = vunpack.c.h.b16 %v59
  %v272 = vunpack.c.l.b16 %v60
  %v273 = vunpack.c.h.b16 %v60
  %v274 = vunpack.c.l.b16 %v61
  %v275 = vunpack.c.h.b16 %v61
  %v276 = vunpack.c.l.b16 %v62
  %v277 = vunpack.c.h.b16 %v62
  %v278 = vunpack.c.l.b16 %v63
  %v279 = vunpack.c.h.b16 %v63
  %v280 = vunpack.c.l.b16 %v64
  %v281 = vunpack.c.h.b16 %v64
  %v282 = vunpack.c.l.b16 %v65
  %v283 = vunpack.c.h.b16 %v65
  %v284 = vunpack.c.l.b16 %v66
  %v285 = vunpack.c.h.b16 %v66
  %v286 = vunpack.c.l.b16 %v67
  %v287 = vunpack.c.h.b16 %v67
  %v288 = vunpack.c.l.b16 %v68
  %v289 = vunpack.c.h.b16 %v68
  %v290 = vunpack.c.l.b16 %v69
  %v291 = vunpack.c.h.b16 %v69
  %v292 = vunpack.c.l.b16 %v70
  %v293 = vunpack.c.h.b16 %v70
  %v294 = vunpack.c.l.b16 %v71
  %v295 = vunpack.c.h.b16 %v71
  %v296 = vunpack.c.l.b16 %v72
  %v297 = vunpack.c.h.b16 %v72
  %v298 = vunpack.c.l.b16 %v73
  %v299 = vunpack.c.h.b16 %v73
  %v300 = vunpack.c.l.b16 %v74
  %v301 = vunpack.c.h.b16 %v74
  %v302 = vunpack.c.l.b16 %v75
  %v303 = vunpack.c.h.b16 %v75
  %v304 = vunpack.c.l.b16 %v76
  %v305 = vunpack.c.h.b16 %v76
  %v306 = vunpack.c.l.b16 %v77
  %v307 = vunpack.c.h.b16 %v77
  %v308 = vunpack.c.l.b16 %v78
  %v309 = vunpack.c.h.b16 %v78
  %v310 = vpack.c.b16 %v184, %v182
  %v311 = vpack.c.b16 %v185, %v183
  %v312 = vpack.c.b16 %v188, %v186
  %v313 = vpack.c.b16 %v189, %v187
  %v314 = vpack.c.b16 %v192, %v190
  %v315 = vpack.c.b16 %v193, %v191
  %v316 = vpack.c.b16 %v196, %v194
  %v317 = vpack.c.b16 %v197, %v195
  %v318 = vpack.c.b16 %v200, %v198
  %v319 = vpack.c.b16 %v201, %v199
  %v320 = vpack.c.b16 %v204, %v202
  %v321 = vpack.c.b16 %v205, %v203
  %v322 = vpack.c.b16 %v208, %v206
  %v323 = vpack.c.b16 %v209, %v207
  %v324 = vpack.c.b16 %v212, %v210
  %v325 = vpack.c.b16 %v213, %v211
  %v326 = vpack.c.b16 %v216, %v214
  %v327 = vpack.c.b16 %v217, %v215
  %v328 = vpack.c.b16 %v220, %v218
  %v329 = vpack.c.b16 %v221, %v219
  %v330 = vpack.c.b16 %v224, %v222
  %v331 = vpack.c.b16 %v225, %v223
  %v332 = vpack.c.b16 %v228, %v226
  %v333 = vpack.c.b16 %v229, %v227
  %v334 = vpack.c.b16 %v232, %v230
  %v335 = vpack.c.b16 %v233, %v231
  %v336 = vpack.c.b16 %v236, %v234
  %v337 = vpack.c.b16 %v237, %v235
  %v338 = vpack.c.b16 %v240, %v238
  %v339 = vpack.c.b16 %v241, %v239
  %v340 = vpack.c.b16 %v244, %v242
  %v341 = vpack.c.b16 %v245, %v243
  %v342 = vpack.c.b16 %v248, %v246
  %v343 = vpack.c.b16 %v249, %v247
  %v344 = vpack.c.b16 %v252, %v250
  %v345 = vpack.c.b16 %v253, %v251
  %v346 = vpack.c.b16 %v256, %v254
  %v347 = vpack.c.b16 %v257, %v255
  %v348 = vpack.c.b16 %v260, %v258
  %v349 = vpack.c.b16 %v261, %v259
  %v350 = vpack.c.b16 %v264, %v262
  %v351 = vpack.c.b16 %v265, %v263
  %v352 = vpack.c.b16 %v268, %v266
  %v353 = vpack.c.b16 %v269, %v267
  %v354 = vpack.c.b16 %v272, %v270
  %v355 = vpack.c.b16 %v273, %v271
  %v356 = vpack.c.b16 %v276, %v274
  %v357 = vpack.c.b16 %v277, %v275
  %v358 = vpack.c.b16 %v280, %v278
  %v359 = vpack.c.b16 %v281, %v279
  %v360 = vpack.c.b16 %v284, %v282
  %v361 = vpack.c.b16 %v285, %v283
  %v362 = vpack.c.b16 %v288, %v286
  %v363 = vpack.c.b16 %v289, %v287
  %v364 = vpack.c.b16 %v292, %v290
  %v365 = vpack.c.b16 %v293, %v291
  %v366 = vpack.c.b16 %v296, %v294
  %v367 = vpack.c.b16 %v297, %v295
  %v368 = vpack.c.b16 %v300, %v298
  %v369 = vpack.c.b16 %v301, %v299
  %v370 = vpack.c.b16 %v304, %v302
  %v371 = vpack.c.b16 %v305, %v303
  %v372 = vpack.c.b16 %v308, %v306
  %v373 = vpack.c.b16 %v309, %v307
  %v470 = vunpack.c.l.b16 %v79
  %v471 = vunpack.c.l.b16 %v80
  %v472 = vunpack.c.l.b16 %v81
  %v473 = vunpack.c.l.b16 %v82
  %v474 = vunpack.c.l.b16 %v83
  %v475 = vunpack.c.l.b16 %v84
  %v476 = vunpack.c.l.b16 %v85
  %v477 = vunpack.c.l.b16 %v86
  %v478 = vunpack.c.l.b16 %v87
  %v479 = vunpack.c.l.b16 %v88
  %v480 = vunpack.c.l.b16 %v89
  %v481 = vunpack.c.l.b16 %v90
  %v482 = vunpack.c.l.b16 %v91
  %v483 = vunpack.c.l.b16 %v92
  %v484 = vunpack.c.l.b16 %v93
  %v485 = vunpack.c.l.b16 %v94
  %v486 = vunpack.c.l.b16 %v95
  %v487 = vunpack.c.l.b16 %v96
  %v488 = vunpack.c.l.b16 %v97
  %v489 = vunpack.c.l.b16 %v98
  %v490 = vunpack.c.l.b16 %v99
  %v491 = vunpack.c.l.b16 %v100
  %v492 = vunpack.c.l.b16 %v101
  %v493 = vunpack.c.l.b16 %v102
  %v494 = vunpack.c.l.b16 %v103
  %v495 = vunpack.c.l.b16 %v104
  %v496 = vunpack.c.l.b16 %v105
  %v497 = vunpack.c.l.b16 %v106
  %v498 = vunpack.c.l.b16 %v107
  %v499 = vunpack.c.l.b16 %v108
  %v500 = vunpack.c.l.b16 %v109
  %v501 = vunpack.c.l.b16 %v110
  %v502 = vpack.c.b16 %v471, %v470
  %v503 = vpack.c.b16 %v473, %v472
  %v504 = vpack.c.b16 %v475, %v474
  %v505 = vpack.c.b16 %v477, %v476
  %v506 = vpack.c.b16 %v479, %v478
  %v507 = vpack.c.b16 %v481, %v480
  %v508 = vpack.c.b16 %v483, %v482
  %v509 = vpack.c.b16 %v485, %v484
  %v510 = vpack.c.b16 %v487, %v486
  %v511 = vpack.c.b16 %v489, %v488
  %v512 = vpack.c.b16 %v491, %v490
  %v513 = vpack.c.b16 %v493, %v492
  %v514 = vpack.c.b16 %v495, %v494
  %v515 = vpack.c.b16 %v497, %v496
  %v516 = vpack.c.b16 %v499, %v498
  %v517 = vpack.c.b16 %v501, %v500
  %534 = vmatprep.subr.bf16.mxu0 0
  %535 = vmatpush1.bf16.msra.mxu0 %v509
  %536 = vmatprep.subr.bf16.mxu0 0
  %537 = vmatpush1.bf16.msra.mxu0 %v508
  %538 = vmatprep.subr.bf16.mxu0 0
  %539 = vmatpush1.bf16.msra.mxu0 %v507
  %540 = vmatprep.subr.bf16.mxu0 0
  %541 = vmatpush1.bf16.msra.mxu0 %v506
  %542 = vmatprep.subr.bf16.mxu0 0
  %543 = vmatpush1.bf16.msra.mxu0 %v505
  %544 = vmatprep.subr.bf16.mxu0 0
  %545 = vmatpush1.bf16.msra.mxu0 %v504
  %546 = vmatprep.subr.bf16.mxu0 0
  %547 = vmatpush1.bf16.msra.mxu0 %v503
  %548 = vmatprep.subr.bf16.mxu0 0
  %549 = vmatpush1.bf16.msra.mxu0 %v502
  %550 = vmatprep.subr.bf16.mxu0 0
  %551 = vmatpush2.bf16.msra.mxu0 %v517
  %552 = vmatprep.subr.bf16.mxu0 0
  %553 = vmatpush2.bf16.msra.mxu0 %v516
  %554 = vmatprep.subr.bf16.mxu0 0
  %555 = vmatpush2.bf16.msra.mxu0 %v515
  %556 = vmatprep.subr.bf16.mxu0 0
  %557 = vmatpush2.bf16.msra.mxu0 %v514
  %558 = vmatprep.subr.bf16.mxu0 0
  %559 = vmatpush2.bf16.msra.mxu0 %v513
  %560 = vmatprep.subr.bf16.mxu0 0
  %561 = vmatpush2.bf16.msra.mxu0 %v512
  %562 = vmatprep.subr.bf16.mxu0 0
  %563 = vmatpush2.bf16.msra.mxu0 %v511
  %564 = vmatprep.subr.bf16.mxu0 0
  %565 = vmatpush2.bf16.msra.mxu0 %v510
  %566 = vmatprep.mubr.bf16.mxu0 %v311
  %567 = vmatmul.mubr.bf16.gmra.mxu0 %v310
  %v568 = vpop.f32.mrf.mxu0
  %v569 = vadd.f32 %v116, %v568
  %v570 = vpop.f32.mrf.mxu0
  %v571 = vpop.f32.mrf.mxu0
  %v572 = vadd.f32 %v116, %v571
  %v573 = vpop.f32.mrf.mxu0
  %574 = vmatprep.mubr.bf16.mxu0 %v313
  %575 = vmatmul.mubr.bf16.gmra.mxu0 %v312
  %v576 = vpop.f32.mrf.mxu0
  %v577 = vadd.f32 %v116, %v576
  %v578 = vpop.f32.mrf.mxu0
  %v579 = vpop.f32.mrf.mxu0
  %v580 = vadd.f32 %v116, %v579
  %v581 = vpop.f32.mrf.mxu0
  %582 = vmatprep.mubr.bf16.mxu0 %v315
  %583 = vmatmul.mubr.bf16.gmra.mxu0 %v314
  %v584 = vpop.f32.mrf.mxu0
  %v585 = vadd.f32 %v116, %v584
  %v586 = vpop.f32.mrf.mxu0
  %v587 = vpop.f32.mrf.mxu0
  %v588 = vadd.f32 %v116, %v587
  %v589 = vpop.f32.mrf.mxu0
  %590 = vmatprep.mubr.bf16.mxu0 %v317
  %591 = vmatmul.mubr.bf16.gmra.mxu0 %v316
  %v592 = vpop.f32.mrf.mxu0
  %v593 = vadd.f32 %v116, %v592
  %v594 = vpop.f32.mrf.mxu0
  %v595 = vpop.f32.mrf.mxu0
  %v596 = vadd.f32 %v116, %v595
  %v597 = vpop.f32.mrf.mxu0
  %598 = vmatprep.mubr.bf16.mxu0 %v319
  %599 = vmatmul.mubr.bf16.gmra.mxu0 %v318
  %v600 = vpop.f32.mrf.mxu0
  %v601 = vadd.f32 %v116, %v600
  %v602 = vpop.f32.mrf.mxu0
  %v603 = vpop.f32.mrf.mxu0
  %v604 = vadd.f32 %v116, %v603
  %v605 = vpop.f32.mrf.mxu0
  %606 = vmatprep.mubr.bf16.mxu0 %v321
  %607 = vmatmul.mubr.bf16.gmra.mxu0 %v320
  %v608 = vpop.f32.mrf.mxu0
  %v609 = vadd.f32 %v116, %v608
  %v610 = vpop.f32.mrf.mxu0
  %v611 = vpop.f32.mrf.mxu0
  %v612 = vadd.f32 %v116, %v611
  %v613 = vpop.f32.mrf.mxu0
  %614 = vmatprep.mubr.bf16.mxu0 %v323
  %615 = vmatmul.mubr.bf16.gmra.mxu0 %v322
  %v616 = vpop.f32.mrf.mxu0
  %v617 = vadd.f32 %v116, %v616
  %v618 = vpop.f32.mrf.mxu0
  %v619 = vpop.f32.mrf.mxu0
  %v620 = vadd.f32 %v116, %v619
  %v621 = vpop.f32.mrf.mxu0
  %622 = vmatprep.mubr.bf16.mxu0 %v325
  %623 = vmatmul.mubr.bf16.gmra.mxu0 %v324
  %v624 = vpop.f32.mrf.mxu0
  %v625 = vadd.f32 %v116, %v624
  %v626 = vpop.f32.mrf.mxu0
  %v627 = vpop.f32.mrf.mxu0
  %v628 = vadd.f32 %v116, %v627
  %v629 = vpop.f32.mrf.mxu0
  %630 = vmatprep.mubr.bf16.mxu0 %v327
  %631 = vmatmul.mubr.bf16.gmra.mxu0 %v326
  %v632 = vpop.f32.mrf.mxu0
  %v633 = vadd.f32 %v116, %v632
  %v634 = vpop.f32.mrf.mxu0
  %v635 = vpop.f32.mrf.mxu0
  %v636 = vadd.f32 %v116, %v635
  %v637 = vpop.f32.mrf.mxu0
  %638 = vmatprep.mubr.bf16.mxu0 %v329
  %639 = vmatmul.mubr.bf16.gmra.mxu0 %v328
  %v640 = vpop.f32.mrf.mxu0
  %v641 = vadd.f32 %v116, %v640
  %v642 = vpop.f32.mrf.mxu0
  %v643 = vpop.f32.mrf.mxu0
  %v644 = vadd.f32 %v116, %v643
  %v645 = vpop.f32.mrf.mxu0
  %646 = vmatprep.mubr.bf16.mxu0 %v331
  %647 = vmatmul.mubr.bf16.gmra.mxu0 %v330
  %v648 = vpop.f32.mrf.mxu0
  %v649 = vadd.f32 %v116, %v648
  %v650 = vpop.f32.mrf.mxu0
  %v651 = vpop.f32.mrf.mxu0
  %v652 = vadd.f32 %v116, %v651
  %v653 = vpop.f32.mrf.mxu0
  %654 = vmatprep.mubr.bf16.mxu0 %v333
  %655 = vmatmul.mubr.bf16.gmra.mxu0 %v332
  %v656 = vpop.f32.mrf.mxu0
  %v657 = vadd.f32 %v116, %v656
  %v658 = vpop.f32.mrf.mxu0
  %v659 = vpop.f32.mrf.mxu0
  %v660 = vadd.f32 %v116, %v659
  %v661 = vpop.f32.mrf.mxu0
  %662 = vmatprep.mubr.bf16.mxu0 %v335
  %663 = vmatmul.mubr.bf16.gmra.mxu0 %v334
  %v664 = vpop.f32.mrf.mxu0
  %v665 = vadd.f32 %v116, %v664
  %v666 = vpop.f32.mrf.mxu0
  %v667 = vpop.f32.mrf.mxu0
  %v668 = vadd.f32 %v116, %v667
  %v669 = vpop.f32.mrf.mxu0
  %670 = vmatprep.mubr.bf16.mxu0 %v337
  %671 = vmatmul.mubr.bf16.gmra.mxu0 %v336
  %v672 = vpop.f32.mrf.mxu0
  %v673 = vadd.f32 %v116, %v672
  %v674 = vpop.f32.mrf.mxu0
  %v675 = vpop.f32.mrf.mxu0
  %v676 = vadd.f32 %v116, %v675
  %v677 = vpop.f32.mrf.mxu0
  %678 = vmatprep.mubr.bf16.mxu0 %v339
  %679 = vmatmul.mubr.bf16.gmra.mxu0 %v338
  %v680 = vpop.f32.mrf.mxu0
  %v681 = vadd.f32 %v116, %v680
  %v682 = vpop.f32.mrf.mxu0
  %v683 = vpop.f32.mrf.mxu0
  %v684 = vadd.f32 %v116, %v683
  %v685 = vpop.f32.mrf.mxu0
  %686 = vmatprep.mubr.bf16.mxu0 %v341
  %687 = vmatmul.mubr.bf16.gmra.mxu0 %v340
  %v688 = vpop.f32.mrf.mxu0
  %v689 = vadd.f32 %v116, %v688
  %v690 = vpop.f32.mrf.mxu0
  %v691 = vpop.f32.mrf.mxu0
  %v692 = vadd.f32 %v116, %v691
  %v693 = vpop.f32.mrf.mxu0
  %694 = vmatprep.mubr.bf16.mxu0 %v343
  %695 = vmatmul.mubr.bf16.gmra.mxu0 %v342
  %v696 = vpop.f32.mrf.mxu0
  %v697 = vadd.f32 %v116, %v696
  %v698 = vpop.f32.mrf.mxu0
  %v699 = vpop.f32.mrf.mxu0
  %v700 = vadd.f32 %v116, %v699
  %v701 = vpop.f32.mrf.mxu0
  %702 = vmatprep.mubr.bf16.mxu0 %v345
  %703 = vmatmul.mubr.bf16.gmra.mxu0 %v344
  %v704 = vpop.f32.mrf.mxu0
  %v705 = vadd.f32 %v116, %v704
  %v706 = vpop.f32.mrf.mxu0
  %v707 = vpop.f32.mrf.mxu0
  %v708 = vadd.f32 %v116, %v707
  %v709 = vpop.f32.mrf.mxu0
  %710 = vmatprep.mubr.bf16.mxu0 %v347
  %711 = vmatmul.mubr.bf16.gmra.mxu0 %v346
  %v712 = vpop.f32.mrf.mxu0
  %v713 = vadd.f32 %v116, %v712
  %v714 = vpop.f32.mrf.mxu0
  %v715 = vpop.f32.mrf.mxu0
  %v716 = vadd.f32 %v116, %v715
  %v717 = vpop.f32.mrf.mxu0
  %718 = vmatprep.mubr.bf16.mxu0 %v349
  %719 = vmatmul.mubr.bf16.gmra.mxu0 %v348
  %v720 = vpop.f32.mrf.mxu0
  %v721 = vadd.f32 %v116, %v720
  %v722 = vpop.f32.mrf.mxu0
  %v723 = vpop.f32.mrf.mxu0
  %v724 = vadd.f32 %v116, %v723
  %v725 = vpop.f32.mrf.mxu0
  %726 = vmatprep.mubr.bf16.mxu0 %v351
  %727 = vmatmul.mubr.bf16.gmra.mxu0 %v350
  %v728 = vpop.f32.mrf.mxu0
  %v729 = vadd.f32 %v116, %v728
  %v730 = vpop.f32.mrf.mxu0
  %v731 = vpop.f32.mrf.mxu0
  %v732 = vadd.f32 %v116, %v731
  %v733 = vpop.f32.mrf.mxu0
  %734 = vmatprep.mubr.bf16.mxu0 %v353
  %735 = vmatmul.mubr.bf16.gmra.mxu0 %v352
  %v736 = vpop.f32.mrf.mxu0
  %v737 = vadd.f32 %v116, %v736
  %v738 = vpop.f32.mrf.mxu0
  %v739 = vpop.f32.mrf.mxu0
  %v740 = vadd.f32 %v116, %v739
  %v741 = vpop.f32.mrf.mxu0
  %742 = vmatprep.mubr.bf16.mxu0 %v355
  %743 = vmatmul.mubr.bf16.gmra.mxu0 %v354
  %v744 = vpop.f32.mrf.mxu0
  %v745 = vadd.f32 %v116, %v744
  %v746 = vpop.f32.mrf.mxu0
  %v747 = vpop.f32.mrf.mxu0
  %v748 = vadd.f32 %v116, %v747
  %v749 = vpop.f32.mrf.mxu0
  %750 = vmatprep.mubr.bf16.mxu0 %v357
  %751 = vmatmul.mubr.bf16.gmra.mxu0 %v356
  %v752 = vpop.f32.mrf.mxu0
  %v753 = vadd.f32 %v116, %v752
  %v754 = vpop.f32.mrf.mxu0
  %v755 = vpop.f32.mrf.mxu0
  %v756 = vadd.f32 %v116, %v755
  %v757 = vpop.f32.mrf.mxu0
  %758 = vmatprep.mubr.bf16.mxu0 %v359
  %759 = vmatmul.mubr.bf16.gmra.mxu0 %v358
  %v760 = vpop.f32.mrf.mxu0
  %v761 = vadd.f32 %v116, %v760
  %v762 = vpop.f32.mrf.mxu0
  %v763 = vpop.f32.mrf.mxu0
  %v764 = vadd.f32 %v116, %v763
  %v765 = vpop.f32.mrf.mxu0
  %766 = vmatprep.mubr.bf16.mxu0 %v361
  %767 = vmatmul.mubr.bf16.gmra.mxu0 %v360
  %v768 = vpop.f32.mrf.mxu0
  %v769 = vadd.f32 %v116, %v768
  %v770 = vpop.f32.mrf.mxu0
  %v771 = vpop.f32.mrf.mxu0
  %v772 = vadd.f32 %v116, %v771
  %v773 = vpop.f32.mrf.mxu0
  %774 = vmatprep.mubr.bf16.mxu0 %v363
  %775 = vmatmul.mubr.bf16.gmra.mxu0 %v362
  %v776 = vpop.f32.mrf.mxu0
  %v777 = vadd.f32 %v116, %v776
  %v778 = vpop.f32.mrf.mxu0
  %v779 = vpop.f32.mrf.mxu0
  %v780 = vadd.f32 %v116, %v779
  %v781 = vpop.f32.mrf.mxu0
  %782 = vmatprep.mubr.bf16.mxu0 %v365
  %783 = vmatmul.mubr.bf16.gmra.mxu0 %v364
  %v784 = vpop.f32.mrf.mxu0
  %v785 = vadd.f32 %v116, %v784
  %v786 = vpop.f32.mrf.mxu0
  %v787 = vpop.f32.mrf.mxu0
  %v788 = vadd.f32 %v116, %v787
  %v789 = vpop.f32.mrf.mxu0
  %790 = vmatprep.mubr.bf16.mxu0 %v367
  %791 = vmatmul.mubr.bf16.gmra.mxu0 %v366
  %v792 = vpop.f32.mrf.mxu0
  %v793 = vadd.f32 %v116, %v792
  %v794 = vpop.f32.mrf.mxu0
  %v795 = vpop.f32.mrf.mxu0
  %v796 = vadd.f32 %v116, %v795
  %v797 = vpop.f32.mrf.mxu0
  %798 = vmatprep.mubr.bf16.mxu0 %v369
  %799 = vmatmul.mubr.bf16.gmra.mxu0 %v368
  %v800 = vpop.f32.mrf.mxu0
  %v801 = vadd.f32 %v116, %v800
  %v802 = vpop.f32.mrf.mxu0
  %v803 = vpop.f32.mrf.mxu0
  %v804 = vadd.f32 %v116, %v803
  %v805 = vpop.f32.mrf.mxu0
  %806 = vmatprep.mubr.bf16.mxu0 %v371
  %807 = vmatmul.mubr.bf16.gmra.mxu0 %v370
  %v808 = vpop.f32.mrf.mxu0
  %v809 = vadd.f32 %v116, %v808
  %v810 = vpop.f32.mrf.mxu0
  %v811 = vpop.f32.mrf.mxu0
  %v812 = vadd.f32 %v116, %v811
  %v813 = vpop.f32.mrf.mxu0
  %814 = vmatprep.mubr.bf16.mxu0 %v373
  %815 = vmatmul.mubr.bf16.gmra.mxu0 %v372
  %v816 = vpop.f32.mrf.mxu0
  %v817 = vadd.f32 %v116, %v816
  %v818 = vpop.f32.mrf.mxu0
  %v819 = vpop.f32.mrf.mxu0
  %v820 = vadd.f32 %v116, %v819
  %v821 = vpop.f32.mrf.mxu0
  %822 = vdwg.mxu0
  %v823 = vmul.f32 %v569, 0.2
  %v824 = vmul.f32 %v572, 0.2
  %v825 = vmul.f32 %v577, 0.2
  %v826 = vmul.f32 %v580, 0.2
  %v827 = vmul.f32 %v585, 0.2
  %v828 = vmul.f32 %v588, 0.2
  %v829 = vmul.f32 %v593, 0.2
  %v830 = vmul.f32 %v596, 0.2
  %v831 = vmul.f32 %v601, 0.2
  %v832 = vmul.f32 %v604, 0.2
  %v833 = vmul.f32 %v609, 0.2
  %v834 = vmul.f32 %v612, 0.2
  %v835 = vmul.f32 %v617, 0.2
  %v836 = vmul.f32 %v620, 0.2
  %v837 = vmul.f32 %v625, 0.2
  %v838 = vmul.f32 %v628, 0.2
  %v839 = vmul.f32 %v633, 0.2
  %v840 = vmul.f32 %v636, 0.2
  %v841 = vmul.f32 %v641, 0.2
  %v842 = vmul.f32 %v644, 0.2
  %v843 = vmul.f32 %v649, 0.2
  %v844 = vmul.f32 %v652, 0.2
  %v845 = vmul.f32 %v657, 0.2
  %v846 = vmul.f32 %v660, 0.2
  %v847 = vmul.f32 %v665, 0.2
  %v848 = vmul.f32 %v668, 0.2
  %v849 = vmul.f32 %v673, 0.2
  %v850 = vmul.f32 %v676, 0.2
  %v851 = vmul.f32 %v681, 0.2
  %v852 = vmul.f32 %v684, 0.2
  %v853 = vmul.f32 %v689, 0.2
  %v854 = vmul.f32 %v692, 0.2
  %v855 = vmul.f32 %v697, 0.2
  %v856 = vmul.f32 %v700, 0.2
  %v857 = vmul.f32 %v705, 0.2
  %v858 = vmul.f32 %v708, 0.2
  %v859 = vmul.f32 %v713, 0.2
  %v860 = vmul.f32 %v716, 0.2
  %v861 = vmul.f32 %v721, 0.2
  %v862 = vmul.f32 %v724, 0.2
  %v863 = vmul.f32 %v729, 0.2
  %v864 = vmul.f32 %v732, 0.2
  %v865 = vmul.f32 %v737, 0.2
  %v866 = vmul.f32 %v740, 0.2
  %v867 = vmul.f32 %v745, 0.2
  %v868 = vmul.f32 %v748, 0.2
  %v869 = vmul.f32 %v753, 0.2
  %v870 = vmul.f32 %v756, 0.2
  %v871 = vmul.f32 %v761, 0.2
  %v872 = vmul.f32 %v764, 0.2
  %v873 = vmul.f32 %v769, 0.2
  %v874 = vmul.f32 %v772, 0.2
  %v875 = vmul.f32 %v777, 0.2
  %v876 = vmul.f32 %v780, 0.2
  %v877 = vmul.f32 %v785, 0.2
  %v878 = vmul.f32 %v788, 0.2
  %v879 = vmul.f32 %v793, 0.2
  %v880 = vmul.f32 %v796, 0.2
  %v881 = vmul.f32 %v801, 0.2
  %v882 = vmul.f32 %v804, 0.2
  %v883 = vmul.f32 %v809, 0.2
  %v884 = vmul.f32 %v812, 0.2
  %v885 = vmul.f32 %v817, 0.2
  %v886 = vmul.f32 %v820, 0.2
  %v887 = vmax.f32 %v569, %v823
  %v888 = vmax.f32 %v572, %v824
  %v889 = vmax.f32 %v577, %v825
  %v890 = vmax.f32 %v580, %v826
  %v891 = vmax.f32 %v585, %v827
  %v892 = vmax.f32 %v588, %v828
  %v893 = vmax.f32 %v593, %v829
  %v894 = vmax.f32 %v596, %v830
  %v895 = vmax.f32 %v601, %v831
  %v896 = vmax.f32 %v604, %v832
  %v897 = vmax.f32 %v609, %v833
  %v898 = vmax.f32 %v612, %v834
  %v899 = vmax.f32 %v617, %v835
  %v900 = vmax.f32 %v620, %v836
  %v901 = vmax.f32 %v625, %v837
  %v902 = vmax.f32 %v628, %v838
  %v903 = vmax.f32 %v633, %v839
  %v904 = vmax.f32 %v636, %v840
  %v905 = vmax.f32 %v641, %v841
  %v906 = vmax.f32 %v644, %v842
  %v907 = vmax.f32 %v649, %v843
  %v908 = vmax.f32 %v652, %v844
  %v909 = vmax.f32 %v657, %v845
  %v910 = vmax.f32 %v660, %v846
  %v911 = vmax.f32 %v665, %v847
  %v912 = vmax.f32 %v668, %v848
  %v913 = vmax.f32 %v673, %v849
  %v914 = vmax.f32 %v676, %v850
  %v915 = vmax.f32 %v681, %v851
  %v916 = vmax.f32 %v684, %v852
  %v917 = vmax.f32 %v689, %v853
  %v918 = vmax.f32 %v692, %v854
  %v919 = vmax.f32 %v697, %v855
  %v920 = vmax.f32 %v700, %v856
  %v921 = vmax.f32 %v705, %v857
  %v922 = vmax.f32 %v708, %v858
  %v923 = vmax.f32 %v713, %v859
  %v924 = vmax.f32 %v716, %v860
  %v925 = vmax.f32 %v721, %v861
  %v926 = vmax.f32 %v724, %v862
  %v927 = vmax.f32 %v729, %v863
  %v928 = vmax.f32 %v732, %v864
  %v929 = vmax.f32 %v737, %v865
  %v930 = vmax.f32 %v740, %v866
  %v931 = vmax.f32 %v745, %v867
  %v932 = vmax.f32 %v748, %v868
  %v933 = vmax.f32 %v753, %v869
  %v934 = vmax.f32 %v756, %v870
  %v935 = vmax.f32 %v761, %v871
  %v936 = vmax.f32 %v764, %v872
  %v937 = vmax.f32 %v769, %v873
  %v938 = vmax.f32 %v772, %v874
  %v939 = vmax.f32 %v777, %v875
  %v940 = vmax.f32 %v780, %v876
  %v941 = vmax.f32 %v785, %v877
  %v942 = vmax.f32 %v788, %v878
  %v943 = vmax.f32 %v793, %v879
  %v944 = vmax.f32 %v796, %v880
  %v945 = vmax.f32 %v801, %v881
  %v946 = vmax.f32 %v804, %v882
  %v947 = vmax.f32 %v809, %v883
  %v948 = vmax.f32 %v812, %v884
  %v949 = vmax.f32 %v817, %v885
  %v950 = vmax.f32 %v820, %v886
  %v951 = vpack.c.bf16 %v888, %v887
  %v952 = vpack.c.bf16 %v890, %v889
  %v953 = vpack.c.bf16 %v892, %v891
  %v954 = vpack.c.bf16 %v894, %v893
  %v955 = vpack.c.bf16 %v896, %v895
  %v956 = vpack.c.bf16 %v898, %v897
  %v957 = vpack.c.bf16 %v900, %v899
  %v958 = vpack.c.bf16 %v902, %v901
  %v959 = vpack.c.bf16 %v904, %v903
  %v960 = vpack.c.bf16 %v906, %v905
  %v961 = vpack.c.bf16 %v908, %v907
  %v962 = vpack.c.bf16 %v910, %v909
  %v963 = vpack.c.bf16 %v912, %v911
  %v964 = vpack.c.bf16 %v914, %v913
  %v965 = vpack.c.bf16 %v916, %v915
  %v966 = vpack.c.bf16 %v918, %v917
  %v967 = vpack.c.bf16 %v920, %v919
  %v968 = vpack.c.bf16 %v922, %v921
  %v969 = vpack.c.bf16 %v924, %v923
  %v970 = vpack.c.bf16 %v926, %v925
  %v971 = vpack.c.bf16 %v928, %v927
  %v972 = vpack.c.bf16 %v930, %v929
  %v973 = vpack.c.bf16 %v932, %v931
  %v974 = vpack.c.bf16 %v934, %v933
  %v975 = vpack.c.bf16 %v936, %v935
  %v976 = vpack.c.bf16 %v938, %v937
  %v977 = vpack.c.bf16 %v940, %v939
  %v978 = vpack.c.bf16 %v942, %v941
  %v979 = vpack.c.bf16 %v944, %v943
  %v980 = vpack.c.bf16 %v946, %v945
  %v981 = vpack.c.bf16 %v948, %v947
  %v982 = vpack.c.bf16 %v950, %v949
  %v1015 = vunpack.c.l.b16 %v951
  %v1016 = vunpack.c.h.b16 %v951
  %v1017 = vunpack.c.l.b16 %v952
  %v1018 = vunpack.c.h.b16 %v952
  %v1019 = vunpack.c.l.b16 %v953
  %v1020 = vunpack.c.h.b16 %v953
  %v1021 = vunpack.c.l.b16 %v954
  %v1022 = vunpack.c.h.b16 %v954
  %v1023 = vunpack.c.l.b16 %v955
  %v1024 = vunpack.c.h.b16 %v955
  %v1025 = vunpack.c.l.b16 %v956
  %v1026 = vunpack.c.h.b16 %v956
  %v1027 = vunpack.c.l.b16 %v957
  %v1028 = vunpack.c.h.b16 %v957
  %v1029 = vunpack.c.l.b16 %v958
  %v1030 = vunpack.c.h.b16 %v958
  %v1031 = vunpack.c.l.b16 %v959
  %v1032 = vunpack.c.h.b16 %v959
  %v1033 = vunpack.c.l.b16 %v960
  %v1034 = vunpack.c.h.b16 %v960
  %v1035 = vunpack.c.l.b16 %v961
  %v1036 = vunpack.c.h.b16 %v961
  %v1037 = vunpack.c.l.b16 %v962
  %v1038 = vunpack.c.h.b16 %v962
  %v1039 = vunpack.c.l.b16 %v963
  %v1040 = vunpack.c.h.b16 %v963
  %v1041 = vunpack.c.l.b16 %v964
  %v1042 = vunpack.c.h.b16 %v964
  %v1043 = vunpack.c.l.b16 %v965
  %v1044 = vunpack.c.h.b16 %v965
  %v1045 = vunpack.c.l.b16 %v966
  %v1046 = vunpack.c.h.b16 %v966
  %v1047 = vunpack.c.l.b16 %v967
  %v1048 = vunpack.c.h.b16 %v967
  %v1049 = vunpack.c.l.b16 %v968
  %v1050 = vunpack.c.h.b16 %v968
  %v1051 = vunpack.c.l.b16 %v969
  %v1052 = vunpack.c.h.b16 %v969
  %v1053 = vunpack.c.l.b16 %v970
  %v1054 = vunpack.c.h.b16 %v970
  %v1055 = vunpack.c.l.b16 %v971
  %v1056 = vunpack.c.h.b16 %v971
  %v1057 = vunpack.c.l.b16 %v972
  %v1058 = vunpack.c.h.b16 %v972
  %v1059 = vunpack.c.l.b16 %v973
  %v1060 = vunpack.c.h.b16 %v973
  %v1061 = vunpack.c.l.b16 %v974
  %v1062 = vunpack.c.h.b16 %v974
  %v1063 = vunpack.c.l.b16 %v975
  %v1064 = vunpack.c.h.b16 %v975
  %v1065 = vunpack.c.l.b16 %v976
  %v1066 = vunpack.c.h.b16 %v976
  %v1067 = vunpack.c.l.b16 %v977
  %v1068 = vunpack.c.h.b16 %v977
  %v1069 = vunpack.c.l.b16 %v978
  %v1070 = vunpack.c.h.b16 %v978
  %v1071 = vunpack.c.l.b16 %v979
  %v1072 = vunpack.c.h.b16 %v979
  %v1073 = vunpack.c.l.b16 %v980
  %v1074 = vunpack.c.h.b16 %v980
  %v1075 = vunpack.c.l.b16 %v981
  %v1076 = vunpack.c.h.b16 %v981
  %v1077 = vunpack.c.l.b16 %v982
  %v1078 = vunpack.c.h.b16 %v982
  %v1079 = vpack.c.b16 %v1015, %v1015
  %v1080 = vpack.c.b16 %v1016, %v1016
  %v1081 = vpack.c.b16 %v1017, %v1017
  %v1082 = vpack.c.b16 %v1018, %v1018
  %v1083 = vpack.c.b16 %v1019, %v1019
  %v1084 = vpack.c.b16 %v1020, %v1020
  %v1085 = vpack.c.b16 %v1021, %v1021
  %v1086 = vpack.c.b16 %v1022, %v1022
  %v1087 = vpack.c.b16 %v1023, %v1023
  %v1088 = vpack.c.b16 %v1024, %v1024
  %v1089 = vpack.c.b16 %v1025, %v1025
  %v1090 = vpack.c.b16 %v1026, %v1026
  %v1091 = vpack.c.b16 %v1027, %v1027
  %v1092 = vpack.c.b16 %v1028, %v1028
  %v1093 = vpack.c.b16 %v1029, %v1029
  %v1094 = vpack.c.b16 %v1030, %v1030
  %v1095 = vpack.c.b16 %v1031, %v1031
  %v1096 = vpack.c.b16 %v1032, %v1032
  %v1097 = vpack.c.b16 %v1033, %v1033
  %v1098 = vpack.c.b16 %v1034, %v1034
  %v1099 = vpack.c.b16 %v1035, %v1035
  %v1100 = vpack.c.b16 %v1036, %v1036
  %v1101 = vpack.c.b16 %v1037, %v1037
  %v1102 = vpack.c.b16 %v1038, %v1038
  %v1103 = vpack.c.b16 %v1039, %v1039
  %v1104 = vpack.c.b16 %v1040, %v1040
  %v1105 = vpack.c.b16 %v1041, %v1041
  %v1106 = vpack.c.b16 %v1042, %v1042
  %v1107 = vpack.c.b16 %v1043, %v1043
  %v1108 = vpack.c.b16 %v1044, %v1044
  %v1109 = vpack.c.b16 %v1045, %v1045
  %v1110 = vpack.c.b16 %v1046, %v1046
  %v1111 = vpack.c.b16 %v1047, %v1047
  %v1112 = vpack.c.b16 %v1048, %v1048
  %v1113 = vpack.c.b16 %v1049, %v1049
  %v1114 = vpack.c.b16 %v1050, %v1050
  %v1115 = vpack.c.b16 %v1051, %v1051
  %v1116 = vpack.c.b16 %v1052, %v1052
  %v1117 = vpack.c.b16 %v1053, %v1053
  %v1118 = vpack.c.b16 %v1054, %v1054
  %v1119 = vpack.c.b16 %v1055, %v1055
  %v1120 = vpack.c.b16 %v1056, %v1056
  %v1121 = vpack.c.b16 %v1057, %v1057
  %v1122 = vpack.c.b16 %v1058, %v1058
  %v1123 = vpack.c.b16 %v1059, %v1059
  %v1124 = vpack.c.b16 %v1060, %v1060
  %v1125 = vpack.c.b16 %v1061, %v1061
  %v1126 = vpack.c.b16 %v1062, %v1062
  %v1127 = vpack.c.b16 %v1063, %v1063
  %v1128 = vpack.c.b16 %v1064, %v1064
  %v1129 = vpack.c.b16 %v1065, %v1065
  %v1130 = vpack.c.b16 %v1066, %v1066
  %v1131 = vpack.c.b16 %v1067, %v1067
  %v1132 = vpack.c.b16 %v1068, %v1068
  %v1133 = vpack.c.b16 %v1069, %v1069
  %v1134 = vpack.c.b16 %v1070, %v1070
  %v1135 = vpack.c.b16 %v1071, %v1071
  %v1136 = vpack.c.b16 %v1072, %v1072
  %v1137 = vpack.c.b16 %v1073, %v1073
  %v1138 = vpack.c.b16 %v1074, %v1074
  %v1139 = vpack.c.b16 %v1075, %v1075
  %v1140 = vpack.c.b16 %v1076, %v1076
  %v1141 = vpack.c.b16 %v1077, %v1077
  %v1142 = vpack.c.b16 %v1078, %v1078
  %vm1207 = vcmask 257024
  %1208 = vst.msk [vmem:[%s3] sm:$0xf] %vm1207, %v1079
  %1209 = vst.msk [vmem:[%s3 + $0x4] sm:$0xf] %vm1207, %v1080
  %1210 = vst.msk [vmem:[%s3 + $0x8] sm:$0xf] %vm1207, %v1081
  %1211 = vst.msk [vmem:[%s3 + $0xc] sm:$0xf] %vm1207, %v1082
  %1212 = vst.msk [vmem:[%s3 + $0x10] sm:$0xf] %vm1207, %v1083
  %1213 = vst.msk [vmem:[%s3 + $0x14] sm:$0xf] %vm1207, %v1084
  %1214 = vst.msk [vmem:[%s3 + $0x18] sm:$0xf] %vm1207, %v1085
  %1215 = vst.msk [vmem:[%s3 + $0x1c] sm:$0xf] %vm1207, %v1086
  %1216 = vst.msk [vmem:[%s3 + $0x20] sm:$0xf] %vm1207, %v1087
  %1217 = vst.msk [vmem:[%s3 + $0x24] sm:$0xf] %vm1207, %v1088
  %1218 = vst.msk [vmem:[%s3 + $0x28] sm:$0xf] %vm1207, %v1089
  %1219 = vst.msk [vmem:[%s3 + $0x2c] sm:$0xf] %vm1207, %v1090
  %1220 = vst.msk [vmem:[%s3 + $0x30] sm:$0xf] %vm1207, %v1091
  %1221 = vst.msk [vmem:[%s3 + $0x34] sm:$0xf] %vm1207, %v1092
  %1222 = vst.msk [vmem:[%s3 + $0x38] sm:$0xf] %vm1207, %v1093
  %1223 = vst.msk [vmem:[%s3 + $0x3c] sm:$0xf] %vm1207, %v1094
  %1224 = vst.msk [vmem:[%s3 + $0x40] sm:$0xf] %vm1207, %v1095
  %1225 = vst.msk [vmem:[%s3 + $0x44] sm:$0xf] %vm1207, %v1096
  %1226 = vst.msk [vmem:[%s3 + $0x48] sm:$0xf] %vm1207, %v1097
  %1227 = vst.msk [vmem:[%s3 + $0x4c] sm:$0xf] %vm1207, %v1098
  %1228 = vst.msk [vmem:[%s3 + $0x50] sm:$0xf] %vm1207, %v1099
  %1229 = vst.msk [vmem:[%s3 + $0x54] sm:$0xf] %vm1207, %v1100
  %1230 = vst.msk [vmem:[%s3 + $0x58] sm:$0xf] %vm1207, %v1101
  %1231 = vst.msk [vmem:[%s3 + $0x5c] sm:$0xf] %vm1207, %v1102
  %1232 = vst.msk [vmem:[%s3 + $0x60] sm:$0xf] %vm1207, %v1103
  %1233 = vst.msk [vmem:[%s3 + $0x64] sm:$0xf] %vm1207, %v1104
  %1234 = vst.msk [vmem:[%s3 + $0x68] sm:$0xf] %vm1207, %v1105
  %1235 = vst.msk [vmem:[%s3 + $0x6c] sm:$0xf] %vm1207, %v1106
  %1236 = vst.msk [vmem:[%s3 + $0x70] sm:$0xf] %vm1207, %v1107
  %1237 = vst.msk [vmem:[%s3 + $0x74] sm:$0xf] %vm1207, %v1108
  %1238 = vst.msk [vmem:[%s3 + $0x78] sm:$0xf] %vm1207, %v1109
  %1239 = vst.msk [vmem:[%s3 + $0x7c] sm:$0xf] %vm1207, %v1110
  %1240 = vst.msk [vmem:[%s3 + $0x80] sm:$0xf] %vm1207, %v1111
  %1241 = vst.msk [vmem:[%s3 + $0x84] sm:$0xf] %vm1207, %v1112
  %1242 = vst.msk [vmem:[%s3 + $0x88] sm:$0xf] %vm1207, %v1113
  %1243 = vst.msk [vmem:[%s3 + $0x8c] sm:$0xf] %vm1207, %v1114
  %1244 = vst.msk [vmem:[%s3 + $0x90] sm:$0xf] %vm1207, %v1115
  %1245 = vst.msk [vmem:[%s3 + $0x94] sm:$0xf] %vm1207, %v1116
  %1246 = vst.msk [vmem:[%s3 + $0x98] sm:$0xf] %vm1207, %v1117
  %1247 = vst.msk [vmem:[%s3 + $0x9c] sm:$0xf] %vm1207, %v1118
  %1248 = vst.msk [vmem:[%s3 + $0xa0] sm:$0xf] %vm1207, %v1119
  %1249 = vst.msk [vmem:[%s3 + $0xa4] sm:$0xf] %vm1207, %v1120
  %1250 = vst.msk [vmem:[%s3 + $0xa8] sm:$0xf] %vm1207, %v1121
  %1251 = vst.msk [vmem:[%s3 + $0xac] sm:$0xf] %vm1207, %v1122
  %1252 = vst.msk [vmem:[%s3 + $0xb0] sm:$0xf] %vm1207, %v1123
  %1253 = vst.msk [vmem:[%s3 + $0xb4] sm:$0xf] %vm1207, %v1124
  %1254 = vst.msk [vmem:[%s3 + $0xb8] sm:$0xf] %vm1207, %v1125
  %1255 = vst.msk [vmem:[%s3 + $0xbc] sm:$0xf] %vm1207, %v1126
  %1256 = vst.msk [vmem:[%s3 + $0xc0] sm:$0xf] %vm1207, %v1127
  %1257 = vst.msk [vmem:[%s3 + $0xc4] sm:$0xf] %vm1207, %v1128
  %1258 = vst.msk [vmem:[%s3 + $0xc8] sm:$0xf] %vm1207, %v1129
  %1259 = vst.msk [vmem:[%s3 + $0xcc] sm:$0xf] %vm1207, %v1130
  %1260 = vst.msk [vmem:[%s3 + $0xd0] sm:$0xf] %vm1207, %v1131
  %1261 = vst.msk [vmem:[%s3 + $0xd4] sm:$0xf] %vm1207, %v1132
  %1262 = vst.msk [vmem:[%s3 + $0xd8] sm:$0xf] %vm1207, %v1133
  %1263 = vst.msk [vmem:[%s3 + $0xdc] sm:$0xf] %vm1207, %v1134
  %1264 = vst.msk [vmem:[%s3 + $0xe0] sm:$0xf] %vm1207, %v1135
  %1265 = vst.msk [vmem:[%s3 + $0xe4] sm:$0xf] %vm1207, %v1136
  %1266 = vst.msk [vmem:[%s3 + $0xe8] sm:$0xf] %vm1207, %v1137
  %1267 = vst.msk [vmem:[%s3 + $0xec] sm:$0xf] %vm1207, %v1138
  %1268 = vst.msk [vmem:[%s3 + $0xf0] sm:$0xf] %vm1207, %v1139
  %1269 = vst.msk [vmem:[%s3 + $0xf4] sm:$0xf] %vm1207, %v1140
  %1270 = vst.msk [vmem:[%s3 + $0xf8] sm:$0xf] %vm1207, %v1141
  %1271 = vst.msk [vmem:[%s3 + $0xfc] sm:$0xf] %vm1207, %v1142
  // Predicated region
  $region14: #{multi_crit_forward.6} parent=0 // pred_check
    _
  $region15: #{multi_crit_forward.6} parent=0 // pred_check_branch
    %1273 = sbr.rel (0) target = $region17
  $region16: #{multi_crit_forward.6} parent=0 // pred_region
    _
  $region17: #{multi_crit_forward.6} parent=0 // pred_fallthru
    _
  // Predicated region
  $region18: #{multi_crit_forward.6} parent=0 // pred_check
    _
  $region19: #{multi_crit_forward.6} parent=0 // pred_check_branch
    %1275 = sbr.rel (0) target = $region21
  $region20: #{multi_crit_forward.6} parent=0 // pred_region
    _
  $region21: #{multi_crit_forward.6} parent=0 // pred_fallthru
    _

// kernel: multi_crit_forward.7
$region0: #{multi_crit_forward.7}
  #allocation0 [shape = 'u32[]', space=smem, size = 0x4, offset = 0x4, fixed_abs, tag = 'smem constant byte address 0x4 - core index']
  #allocation1 [shape = 'u32[144,128]{1,0:T(1,128)}', space=vmem, size = 0x12000, scoped, tag = 'internal scratch']
  %s0 = inlined_call_operand.vmem [shape: bf16[128,512], index: 0, kind: input, shape index: {}]
  %s1 = inlined_call_operand.vmem [shape: bf16[512,64], index: 1, kind: input, shape index: {}]
  %s2 = inlined_call_operand.vmem [shape: f32[1,64], index: 2, kind: input, shape index: {}]
  %s3 = inlined_call_operand.vmem [shape: bf16[128,64], index: 3, kind: output, shape index: {}]
  %s4 = sld [smem:[#allocation0]]
  $region22: #{multi_crit_forward.7} parent=0
    _
  %s6 = ssub.s32 1, %s4
  %s7 = scalar_select 0, %s6, %s4
  // Predicated region
  $region2: #{multi_crit_forward.7} parent=0 // pred_check
    _
  $region3: #{multi_crit_forward.7} parent=0 // pred_check_branch
    %9 = sbr.rel (0) target = $region5
  $region4: #{multi_crit_forward.7} parent=0 // pred_region
    _
  $region5: #{multi_crit_forward.7} parent=0 // pred_fallthru
    _
  // Predicated region
  $region6: #{multi_crit_forward.7} parent=0 // pred_check
    _
  $region7: #{multi_crit_forward.7} parent=0 // pred_check_branch
    %11 = sbr.rel (0) target = $region9
  $region8: #{multi_crit_forward.7} parent=0 // pred_region
    _
  $region9: #{multi_crit_forward.7} parent=0 // pred_fallthru
    _
  // Predicated region
  $region10: #{multi_crit_forward.7} parent=0 // pred_check
    _
  $region11: #{multi_crit_forward.7} parent=0 // pred_check_branch
    %13 = sbr.rel (0) target = $region13
  $region12: #{multi_crit_forward.7} parent=0 // pred_region
    _
  $region13: #{multi_crit_forward.7} parent=0 // pred_fallthru
    _
  %v15 = vld [vmem:[%s0] sm:$0xff]
  %v16 = vld [vmem:[%s0 + $0x8] sm:$0xff]
  %v17 = vld [vmem:[%s0 + $0x10] sm:$0xff]
  %v18 = vld [vmem:[%s0 + $0x18] sm:$0xff]
  %v19 = vld [vmem:[%s0 + $0x20] sm:$0xff]
  %v20 = vld [vmem:[%s0 + $0x28] sm:$0xff]
  %v21 = vld [vmem:[%s0 + $0x30] sm:$0xff]
  %v22 = vld [vmem:[%s0 + $0x38] sm:$0xff]
  %v23 = vld [vmem:[%s0 + $0x40] sm:$0xff]
  %v24 = vld [vmem:[%s0 + $0x48] sm:$0xff]
  %v25 = vld [vmem:[%s0 + $0x50] sm:$0xff]
  %v26 = vld [vmem:[%s0 + $0x58] sm:$0xff]
  %v27 = vld [vmem:[%s0 + $0x60] sm:$0xff]
  %v28 = vld [vmem:[%s0 + $0x68] sm:$0xff]
  %v29 = vld [vmem:[%s0 + $0x70] sm:$0xff]
  %v30 = vld [vmem:[%s0 + $0x78] sm:$0xff]
  %v31 = vld [vmem:[%s0 + $0x80] sm:$0xff]
  %v32 = vld [vmem:[%s0 + $0x88] sm:$0xff]
  %v33 = vld [vmem:[%s0 + $0x90] sm:$0xff]
  %v34 = vld [vmem:[%s0 + $0x98] sm:$0xff]
  %v35 = vld [vmem:[%s0 + $0xa0] sm:$0xff]
  %v36 = vld [vmem:[%s0 + $0xa8] sm:$0xff]
  %v37 = vld [vmem:[%s0 + $0xb0] sm:$0xff]
  %v38 = vld [vmem:[%s0 + $0xb8] sm:$0xff]
  %v39 = vld [vmem:[%s0 + $0xc0] sm:$0xff]
  %v40 = vld [vmem:[%s0 + $0xc8] sm:$0xff]
  %v41 = vld [vmem:[%s0 + $0xd0] sm:$0xff]
  %v42 = vld [vmem:[%s0 + $0xd8] sm:$0xff]
  %v43 = vld [vmem:[%s0 + $0xe0] sm:$0xff]
  %v44 = vld [vmem:[%s0 + $0xe8] sm:$0xff]
  %v45 = vld [vmem:[%s0 + $0xf0] sm:$0xff]
  %v46 = vld [vmem:[%s0 + $0xf8] sm:$0xff]
  %v47 = vld [vmem:[%s1] sm:$0xf]
  %v48 = vld [vmem:[%s1 + $0x4] sm:$0xf]
  %v49 = vld [vmem:[%s1 + $0x8] sm:$0xf]
  %v50 = vld [vmem:[%s1 + $0xc] sm:$0xf]
  %v51 = vld [vmem:[%s1 + $0x10] sm:$0xf]
  %v52 = vld [vmem:[%s1 + $0x14] sm:$0xf]
  %v53 = vld [vmem:[%s1 + $0x18] sm:$0xf]
  %v54 = vld [vmem:[%s1 + $0x1c] sm:$0xf]
  %v55 = vld [vmem:[%s1 + $0x20] sm:$0xf]
  %v56 = vld [vmem:[%s1 + $0x24] sm:$0xf]
  %v57 = vld [vmem:[%s1 + $0x28] sm:$0xf]
  %v58 = vld [vmem:[%s1 + $0x2c] sm:$0xf]
  %v59 = vld [vmem:[%s1 + $0x30] sm:$0xf]
  %v60 = vld [vmem:[%s1 + $0x34] sm:$0xf]
  %v61 = vld [vmem:[%s1 + $0x38] sm:$0xf]
  %v62 = vld [vmem:[%s1 + $0x3c] sm:$0xf]
  %v63 = vld [vmem:[%s1 + $0x40] sm:$0xf]
  %v64 = vld [vmem:[%s1 + $0x44] sm:$0xf]
  %v65 = vld [vmem:[%s1 + $0x48] sm:$0xf]
  %v66 = vld [vmem:[%s1 + $0x4c] sm:$0xf]
  %v67 = vld [vmem:[%s1 + $0x50] sm:$0xf]
  %v68 = vld [vmem:[%s1 + $0x54] sm:$0xf]
  %v69 = vld [vmem:[%s1 + $0x58] sm:$0xf]
  %v70 = vld [vmem:[%s1 + $0x5c] sm:$0xf]
  %v71 = vld [vmem:[%s1 + $0x60] sm:$0xf]
  %v72 = vld [vmem:[%s1 + $0x64] sm:$0xf]
  %v73 = vld [vmem:[%s1 + $0x68] sm:$0xf]
  %v74 = vld [vmem:[%s1 + $0x6c] sm:$0xf]
  %v75 = vld [vmem:[%s1 + $0x70] sm:$0xf]
  %v76 = vld [vmem:[%s1 + $0x74] sm:$0xf]
  %v77 = vld [vmem:[%s1 + $0x78] sm:$0xf]
  %v78 = vld [vmem:[%s1 + $0x7c] sm:$0xf]
  %v79 = vld [vmem:[%s1 + $0x80] sm:$0xf]
  %v80 = vld [vmem:[%s1 + $0x84] sm:$0xf]
  %v81 = vld [vmem:[%s1 + $0x88] sm:$0xf]
  %v82 = vld [vmem:[%s1 + $0x8c] sm:$0xf]
  %v83 = vld [vmem:[%s1 + $0x90] sm:$0xf]
  %v84 = vld [vmem:[%s1 + $0x94] sm:$0xf]
  %v85 = vld [vmem:[%s1 + $0x98] sm:$0xf]
  %v86 = vld [vmem:[%s1 + $0x9c] sm:$0xf]
  %v87 = vld [vmem:[%s1 + $0xa0] sm:$0xf]
  %v88 = vld [vmem:[%s1 + $0xa4] sm:$0xf]
  %v89 = vld [vmem:[%s1 + $0xa8] sm:$0xf]
  %v90 = vld [vmem:[%s1 + $0xac] sm:$0xf]
  %v91 = vld [vmem:[%s1 + $0xb0] sm:$0xf]
  %v92 = vld [vmem:[%s1 + $0xb4] sm:$0xf]
  %v93 = vld [vmem:[%s1 + $0xb8] sm:$0xf]
  %v94 = vld [vmem:[%s1 + $0xbc] sm:$0xf]
  %v95 = vld [vmem:[%s1 + $0xc0] sm:$0xf]
  %v96 = vld [vmem:[%s1 + $0xc4] sm:$0xf]
  %v97 = vld [vmem:[%s1 + $0xc8] sm:$0xf]
  %v98 = vld [vmem:[%s1 + $0xcc] sm:$0xf]
  %v99 = vld [vmem:[%s1 + $0xd0] sm:$0xf]
  %v100 = vld [vmem:[%s1 + $0xd4] sm:$0xf]
  %v101 = vld [vmem:[%s1 + $0xd8] sm:$0xf]
  %v102 = vld [vmem:[%s1 + $0xdc] sm:$0xf]
  %v103 = vld [vmem:[%s1 + $0xe0] sm:$0xf]
  %v104 = vld [vmem:[%s1 + $0xe4] sm:$0xf]
  %v105 = vld [vmem:[%s1 + $0xe8] sm:$0xf]
  %v106 = vld [vmem:[%s1 + $0xec] sm:$0xf]
  %v107 = vld [vmem:[%s1 + $0xf0] sm:$0xf]
  %v108 = vld [vmem:[%s1 + $0xf4] sm:$0xf]
  %v109 = vld [vmem:[%s1 + $0xf8] sm:$0xf]
  %v110 = vld [vmem:[%s1 + $0xfc] sm:$0xf]
  %v111 = vld [vmem:[%s2] sm:$0x1]
  %v113 = vlaneseq
  %v114 = vshrl.u32 %v113, 7
  %v115 = vsub.s32 0, %v114
  %v116 = vrot.slane %v111, %v115
  %v150 = vunpack.c.l.b16 %v15
  %v151 = vunpack.c.h.b16 %v15
  %v152 = vunpack.c.l.b16 %v16
  %v153 = vunpack.c.h.b16 %v16
  %v154 = vunpack.c.l.b16 %v17
  %v155 = vunpack.c.h.b16 %v17
  %v156 = vunpack.c.l.b16 %v18
  %v157 = vunpack.c.h.b16 %v18
  %v158 = vunpack.c.l.b16 %v19
  %v159 = vunpack.c.h.b16 %v19
  %v160 = vunpack.c.l.b16 %v20
  %v161 = vunpack.c.h.b16 %v20
  %v162 = vunpack.c.l.b16 %v21
  %v163 = vunpack.c.h.b16 %v21
  %v164 = vunpack.c.l.b16 %v22
  %v165 = vunpack.c.h.b16 %v22
  %v166 = vunpack.c.l.b16 %v23
  %v167 = vunpack.c.h.b16 %v23
  %v168 = vunpack.c.l.b16 %v24
  %v169 = vunpack.c.h.b16 %v24
  %v170 = vunpack.c.l.b16 %v25
  %v171 = vunpack.c.h.b16 %v25
  %v172 = vunpack.c.l.b16 %v26
  %v173 = vunpack.c.h.b16 %v26
  %v174 = vunpack.c.l.b16 %v27
  %v175 = vunpack.c.h.b16 %v27
  %v176 = vunpack.c.l.b16 %v28
  %v177 = vunpack.c.h.b16 %v28
  %v178 = vunpack.c.l.b16 %v29
  %v179 = vunpack.c.h.b16 %v29
  %v180 = vunpack.c.l.b16 %v30
  %v181 = vunpack.c.h.b16 %v30
  %v182 = vunpack.c.l.b16 %v31
  %v183 = vunpack.c.h.b16 %v31
  %v184 = vunpack.c.l.b16 %v32
  %v185 = vunpack.c.h.b16 %v32
  %v186 = vunpack.c.l.b16 %v33
  %v187 = vunpack.c.h.b16 %v33
  %v188 = vunpack.c.l.b16 %v34
  %v189 = vunpack.c.h.b16 %v34
  %v190 = vunpack.c.l.b16 %v35
  %v191 = vunpack.c.h.b16 %v35
  %v192 = vunpack.c.l.b16 %v36
  %v193 = vunpack.c.h.b16 %v36
  %v194 = vunpack.c.l.b16 %v37
  %v195 = vunpack.c.h.b16 %v37
  %v196 = vunpack.c.l.b16 %v38
  %v197 = vunpack.c.h.b16 %v38
  %v198 = vunpack.c.l.b16 %v39
  %v199 = vunpack.c.h.b16 %v39
  %v200 = vunpack.c.l.b16 %v40
  %v201 = vunpack.c.h.b16 %v40
  %v202 = vunpack.c.l.b16 %v41
  %v203 = vunpack.c.h.b16 %v41
  %v204 = vunpack.c.l.b16 %v42
  %v205 = vunpack.c.h.b16 %v42
  %v206 = vunpack.c.l.b16 %v43
  %v207 = vunpack.c.h.b16 %v43
  %v208 = vunpack.c.l.b16 %v44
  %v209 = vunpack.c.h.b16 %v44
  %v210 = vunpack.c.l.b16 %v45
  %v211 = vunpack.c.h.b16 %v45
  %v212 = vunpack.c.l.b16 %v46
  %v213 = vunpack.c.h.b16 %v46
  %v214 = vpack.c.b16 %v154, %v150
  %v215 = vpack.c.b16 %v155, %v151
  %v216 = vpack.c.b16 %v156, %v152
  %v217 = vpack.c.b16 %v157, %v153
  %v218 = vpack.c.b16 %v162, %v158
  %v219 = vpack.c.b16 %v163, %v159
  %v220 = vpack.c.b16 %v164, %v160
  %v221 = vpack.c.b16 %v165, %v161
  %v222 = vpack.c.b16 %v170, %v166
  %v223 = vpack.c.b16 %v171, %v167
  %v224 = vpack.c.b16 %v172, %v168
  %v225 = vpack.c.b16 %v173, %v169
  %v226 = vpack.c.b16 %v178, %v174
  %v227 = vpack.c.b16 %v179, %v175
  %v228 = vpack.c.b16 %v180, %v176
  %v229 = vpack.c.b16 %v181, %v177
  %v230 = vpack.c.b16 %v186, %v182
  %v231 = vpack.c.b16 %v187, %v183
  %v232 = vpack.c.b16 %v188, %v184
  %v233 = vpack.c.b16 %v189, %v185
  %v234 = vpack.c.b16 %v194, %v190
  %v235 = vpack.c.b16 %v195, %v191
  %v236 = vpack.c.b16 %v196, %v192
  %v237 = vpack.c.b16 %v197, %v193
  %v238 = vpack.c.b16 %v202, %v198
  %v239 = vpack.c.b16 %v203, %v199
  %v240 = vpack.c.b16 %v204, %v200
  %v241 = vpack.c.b16 %v205, %v201
  %v242 = vpack.c.b16 %v210, %v206
  %v243 = vpack.c.b16 %v211, %v207
  %v244 = vpack.c.b16 %v212, %v208
  %v245 = vpack.c.b16 %v213, %v209
  %v342 = vunpack.c.l.b16 %v47
  %v343 = vunpack.c.l.b16 %v48
  %v344 = vunpack.c.l.b16 %v49
  %v345 = vunpack.c.l.b16 %v50
  %v346 = vunpack.c.l.b16 %v51
  %v347 = vunpack.c.l.b16 %v52
  %v348 = vunpack.c.l.b16 %v53
  %v349 = vunpack.c.l.b16 %v54
  %v350 = vunpack.c.l.b16 %v55
  %v351 = vunpack.c.l.b16 %v56
  %v352 = vunpack.c.l.b16 %v57
  %v353 = vunpack.c.l.b16 %v58
  %v354 = vunpack.c.l.b16 %v59
  %v355 = vunpack.c.l.b16 %v60
  %v356 = vunpack.c.l.b16 %v61
  %v357 = vunpack.c.l.b16 %v62
  %v358 = vunpack.c.l.b16 %v63
  %v359 = vunpack.c.l.b16 %v64
  %v360 = vunpack.c.l.b16 %v65
  %v361 = vunpack.c.l.b16 %v66
  %v362 = vunpack.c.l.b16 %v67
  %v363 = vunpack.c.l.b16 %v68
  %v364 = vunpack.c.l.b16 %v69
  %v365 = vunpack.c.l.b16 %v70
  %v366 = vunpack.c.l.b16 %v71
  %v367 = vunpack.c.l.b16 %v72
  %v368 = vunpack.c.l.b16 %v73
  %v369 = vunpack.c.l.b16 %v74
  %v370 = vunpack.c.l.b16 %v75
  %v371 = vunpack.c.l.b16 %v76
  %v372 = vunpack.c.l.b16 %v77
  %v373 = vunpack.c.l.b16 %v78
  %v374 = vunpack.c.l.b16 %v79
  %v375 = vunpack.c.l.b16 %v80
  %v376 = vunpack.c.l.b16 %v81
  %v377 = vunpack.c.l.b16 %v82
  %v378 = vunpack.c.l.b16 %v83
  %v379 = vunpack.c.l.b16 %v84
  %v380 = vunpack.c.l.b16 %v85
  %v381 = vunpack.c.l.b16 %v86
  %v382 = vunpack.c.l.b16 %v87
  %v383 = vunpack.c.l.b16 %v88
  %v384 = vunpack.c.l.b16 %v89
  %v385 = vunpack.c.l.b16 %v90
  %v386 = vunpack.c.l.b16 %v91
  %v387 = vunpack.c.l.b16 %v92
  %v388 = vunpack.c.l.b16 %v93
  %v389 = vunpack.c.l.b16 %v94
  %v390 = vunpack.c.l.b16 %v95
  %v391 = vunpack.c.l.b16 %v96
  %v392 = vunpack.c.l.b16 %v97
  %v393 = vunpack.c.l.b16 %v98
  %v394 = vunpack.c.l.b16 %v99
  %v395 = vunpack.c.l.b16 %v100
  %v396 = vunpack.c.l.b16 %v101
  %v397 = vunpack.c.l.b16 %v102
  %v398 = vunpack.c.l.b16 %v103
  %v399 = vunpack.c.l.b16 %v104
  %v400 = vunpack.c.l.b16 %v105
  %v401 = vunpack.c.l.b16 %v106
  %v402 = vunpack.c.l.b16 %v107
  %v403 = vunpack.c.l.b16 %v108
  %v404 = vunpack.c.l.b16 %v109
  %v405 = vunpack.c.l.b16 %v110
  %v406 = vpack.c.b16 %v343, %v342
  %v407 = vpack.c.b16 %v345, %v344
  %v408 = vpack.c.b16 %v347, %v346
  %v409 = vpack.c.b16 %v349, %v348
  %v410 = vpack.c.b16 %v351, %v350
  %v411 = vpack.c.b16 %v353, %v352
  %v412 = vpack.c.b16 %v355, %v354
  %v413 = vpack.c.b16 %v357, %v356
  %v414 = vpack.c.b16 %v359, %v358
  %v415 = vpack.c.b16 %v361, %v360
  %v416 = vpack.c.b16 %v363, %v362
  %v417 = vpack.c.b16 %v365, %v364
  %v418 = vpack.c.b16 %v367, %v366
  %v419 = vpack.c.b16 %v369, %v368
  %v420 = vpack.c.b16 %v371, %v370
  %v421 = vpack.c.b16 %v373, %v372
  %v422 = vpack.c.b16 %v375, %v374
  %v423 = vpack.c.b16 %v377, %v376
  %v424 = vpack.c.b16 %v379, %v378
  %v425 = vpack.c.b16 %v381, %v380
  %v426 = vpack.c.b16 %v383, %v382
  %v427 = vpack.c.b16 %v385, %v384
  %v428 = vpack.c.b16 %v387, %v386
  %v429 = vpack.c.b16 %v389, %v388
  %v430 = vpack.c.b16 %v391, %v390
  %v431 = vpack.c.b16 %v393, %v392
  %v432 = vpack.c.b16 %v395, %v394
  %v433 = vpack.c.b16 %v397, %v396
  %v434 = vpack.c.b16 %v399, %v398
  %v435 = vpack.c.b16 %v401, %v400
  %v436 = vpack.c.b16 %v403, %v402
  %v437 = vpack.c.b16 %v405, %v404
  %470 = vmatprep.subr.bf16.mxu0 0
  %471 = vmatpush1.bf16.msra.mxu0 %v413
  %472 = vmatprep.subr.bf16.mxu0 0
  %473 = vmatpush1.bf16.msra.mxu0 %v412
  %474 = vmatprep.subr.bf16.mxu0 0
  %475 = vmatpush1.bf16.msra.mxu0 %v411
  %476 = vmatprep.subr.bf16.mxu0 0
  %477 = vmatpush1.bf16.msra.mxu0 %v410
  %478 = vmatprep.subr.bf16.mxu0 0
  %479 = vmatpush1.bf16.msra.mxu0 %v409
  %480 = vmatprep.subr.bf16.mxu0 0
  %481 = vmatpush1.bf16.msra.mxu0 %v408
  %482 = vmatprep.subr.bf16.mxu0 0
  %483 = vmatpush1.bf16.msra.mxu0 %v407
  %484 = vmatprep.subr.bf16.mxu0 0
  %485 = vmatpush1.bf16.msra.mxu0 %v406
  %486 = vmatprep.subr.bf16.mxu0 0
  %487 = vmatpush2.bf16.msra.mxu0 %v421
  %488 = vmatprep.subr.bf16.mxu0 0
  %489 = vmatpush2.bf16.msra.mxu0 %v420
  %490 = vmatprep.subr.bf16.mxu0 0
  %491 = vmatpush2.bf16.msra.mxu0 %v419
  %492 = vmatprep.subr.bf16.mxu0 0
  %493 = vmatpush2.bf16.msra.mxu0 %v418
  %494 = vmatprep.subr.bf16.mxu0 0
  %495 = vmatpush2.bf16.msra.mxu0 %v417
  %496 = vmatprep.subr.bf16.mxu0 0
  %497 = vmatpush2.bf16.msra.mxu0 %v416
  %498 = vmatprep.subr.bf16.mxu0 0
  %499 = vmatpush2.bf16.msra.mxu0 %v415
  %500 = vmatprep.subr.bf16.mxu0 0
  %501 = vmatpush2.bf16.msra.mxu0 %v414
  %502 = vmatprep.mubr.bf16.mxu0 %v215
  %503 = vmatmul.mubr.bf16.gmra.mxu0 %v214
  %v504 = vpop.f32.mrf.mxu0
  %v505 = vadd.f32 %v116, %v504
  %v506 = vpop.f32.mrf.mxu0
  %v507 = vpop.f32.mrf.mxu0
  %v508 = vadd.f32 %v116, %v507
  %v509 = vpop.f32.mrf.mxu0
  %510 = vmatprep.mubr.bf16.mxu0 %v219
  %511 = vmatmul.mubr.bf16.gmra.mxu0 %v218
  %v512 = vpop.f32.mrf.mxu0
  %v513 = vadd.f32 %v116, %v512
  %v514 = vpop.f32.mrf.mxu0
  %v515 = vpop.f32.mrf.mxu0
  %v516 = vadd.f32 %v116, %v515
  %v517 = vpop.f32.mrf.mxu0
  %518 = vmatprep.mubr.bf16.mxu0 %v223
  %519 = vmatmul.mubr.bf16.gmra.mxu0 %v222
  %v520 = vpop.f32.mrf.mxu0
  %v521 = vadd.f32 %v116, %v520
  %v522 = vpop.f32.mrf.mxu0
  %v523 = vpop.f32.mrf.mxu0
  %v524 = vadd.f32 %v116, %v523
  %v525 = vpop.f32.mrf.mxu0
  %526 = vmatprep.mubr.bf16.mxu0 %v227
  %527 = vmatmul.mubr.bf16.gmra.mxu0 %v226
  %v528 = vpop.f32.mrf.mxu0
  %v529 = vadd.f32 %v116, %v528
  %v530 = vpop.f32.mrf.mxu0
  %v531 = vpop.f32.mrf.mxu0
  %v532 = vadd.f32 %v116, %v531
  %v533 = vpop.f32.mrf.mxu0
  %534 = vmatprep.mubr.bf16.mxu0 %v231
  %535 = vmatmul.mubr.bf16.gmra.mxu0 %v230
  %v536 = vpop.f32.mrf.mxu0
  %v537 = vadd.f32 %v116, %v536
  %v538 = vpop.f32.mrf.mxu0
  %v539 = vpop.f32.mrf.mxu0
  %v540 = vadd.f32 %v116, %v539
  %v541 = vpop.f32.mrf.mxu0
  %542 = vmatprep.mubr.bf16.mxu0 %v235
  %543 = vmatmul.mubr.bf16.gmra.mxu0 %v234
  %v544 = vpop.f32.mrf.mxu0
  %v545 = vadd.f32 %v116, %v544
  %v546 = vpop.f32.mrf.mxu0
  %v547 = vpop.f32.mrf.mxu0
  %v548 = vadd.f32 %v116, %v547
  %v549 = vpop.f32.mrf.mxu0
  %550 = vmatprep.mubr.bf16.mxu0 %v239
  %551 = vmatmul.mubr.bf16.gmra.mxu0 %v238
  %v552 = vpop.f32.mrf.mxu0
  %v553 = vadd.f32 %v116, %v552
  %v554 = vpop.f32.mrf.mxu0
  %v555 = vpop.f32.mrf.mxu0
  %v556 = vadd.f32 %v116, %v555
  %v557 = vpop.f32.mrf.mxu0
  %558 = vmatprep.mubr.bf16.mxu0 %v243
  %559 = vmatmul.mubr.bf16.gmra.mxu0 %v242
  %v560 = vpop.f32.mrf.mxu0
  %v561 = vadd.f32 %v116, %v560
  %v562 = vpop.f32.mrf.mxu0
  %v563 = vpop.f32.mrf.mxu0
  %v564 = vadd.f32 %v116, %v563
  %v565 = vpop.f32.mrf.mxu0
  %566 = vdwg.mxu0
  %567 = vmatprep.subr.bf16.mxu0 0
  %568 = vmatpush1.bf16.msra.mxu0 %v429
  %569 = vmatprep.subr.bf16.mxu0 0
  %570 = vmatpush1.bf16.msra.mxu0 %v428
  %571 = vmatprep.subr.bf16.mxu0 0
  %572 = vmatpush1.bf16.msra.mxu0 %v427
  %573 = vmatprep.subr.bf16.mxu0 0
  %574 = vmatpush1.bf16.msra.mxu0 %v426
  %575 = vmatprep.subr.bf16.mxu0 0
  %576 = vmatpush1.bf16.msra.mxu0 %v425
  %577 = vmatprep.subr.bf16.mxu0 0
  %578 = vmatpush1.bf16.msra.mxu0 %v424
  %579 = vmatprep.subr.bf16.mxu0 0
  %580 = vmatpush1.bf16.msra.mxu0 %v423
  %581 = vmatprep.subr.bf16.mxu0 0
  %582 = vmatpush1.bf16.msra.mxu0 %v422
  %583 = vmatprep.subr.bf16.mxu0 0
  %584 = vmatpush2.bf16.msra.mxu0 %v437
  %585 = vmatprep.subr.bf16.mxu0 0
  %586 = vmatpush2.bf16.msra.mxu0 %v436
  %587 = vmatprep.subr.bf16.mxu0 0
  %588 = vmatpush2.bf16.msra.mxu0 %v435
  %589 = vmatprep.subr.bf16.mxu0 0
  %590 = vmatpush2.bf16.msra.mxu0 %v434
  %591 = vmatprep.subr.bf16.mxu0 0
  %592 = vmatpush2.bf16.msra.mxu0 %v433
  %593 = vmatprep.subr.bf16.mxu0 0
  %594 = vmatpush2.bf16.msra.mxu0 %v432
  %595 = vmatprep.subr.bf16.mxu0 0
  %596 = vmatpush2.bf16.msra.mxu0 %v431
  %597 = vmatprep.subr.bf16.mxu0 0
  %598 = vmatpush2.bf16.msra.mxu0 %v430
  %599 = vmatprep.mubr.bf16.mxu0 %v217
  %600 = vmatmul.mubr.bf16.gmra.mxu0 %v216
  %v601 = vpop.f32.mrf.mxu0
  %v602 = vadd.f32 %v505, %v601
  %v603 = vpop.f32.mrf.mxu0
  %v604 = vpop.f32.mrf.mxu0
  %v605 = vadd.f32 %v508, %v604
  %v606 = vpop.f32.mrf.mxu0
  %607 = vmatprep.mubr.bf16.mxu0 %v221
  %608 = vmatmul.mubr.bf16.gmra.mxu0 %v220
  %v609 = vpop.f32.mrf.mxu0
  %v610 = vadd.f32 %v513, %v609
  %v611 = vpop.f32.mrf.mxu0
  %v612 = vpop.f32.mrf.mxu0
  %v613 = vadd.f32 %v516, %v612
  %v614 = vpop.f32.mrf.mxu0
  %615 = vmatprep.mubr.bf16.mxu0 %v225
  %616 = vmatmul.mubr.bf16.gmra.mxu0 %v224
  %v617 = vpop.f32.mrf.mxu0
  %v618 = vadd.f32 %v521, %v617
  %v619 = vpop.f32.mrf.mxu0
  %v620 = vpop.f32.mrf.mxu0
  %v621 = vadd.f32 %v524, %v620
  %v622 = vpop.f32.mrf.mxu0
  %623 = vmatprep.mubr.bf16.mxu0 %v229
  %624 = vmatmul.mubr.bf16.gmra.mxu0 %v228
  %v625 = vpop.f32.mrf.mxu0
  %v626 = vadd.f32 %v529, %v625
  %v627 = vpop.f32.mrf.mxu0
  %v628 = vpop.f32.mrf.mxu0
  %v629 = vadd.f32 %v532, %v628
  %v630 = vpop.f32.mrf.mxu0
  %631 = vmatprep.mubr.bf16.mxu0 %v233
  %632 = vmatmul.mubr.bf16.gmra.mxu0 %v232
  %v633 = vpop.f32.mrf.mxu0
  %v634 = vadd.f32 %v537, %v633
  %v635 = vpop.f32.mrf.mxu0
  %v636 = vpop.f32.mrf.mxu0
  %v637 = vadd.f32 %v540, %v636
  %v638 = vpop.f32.mrf.mxu0
  %639 = vmatprep.mubr.bf16.mxu0 %v237
  %640 = vmatmul.mubr.bf16.gmra.mxu0 %v236
  %v641 = vpop.f32.mrf.mxu0
  %v642 = vadd.f32 %v545, %v641
  %v643 = vpop.f32.mrf.mxu0
  %v644 = vpop.f32.mrf.mxu0
  %v645 = vadd.f32 %v548, %v644
  %v646 = vpop.f32.mrf.mxu0
  %647 = vmatprep.mubr.bf16.mxu0 %v241
  %648 = vmatmul.mubr.bf16.gmra.mxu0 %v240
  %v649 = vpop.f32.mrf.mxu0
  %v650 = vadd.f32 %v553, %v649
  %v651 = vpop.f32.mrf.mxu0
  %v652 = vpop.f32.mrf.mxu0
  %v653 = vadd.f32 %v556, %v652
  %v654 = vpop.f32.mrf.mxu0
  %655 = vmatprep.mubr.bf16.mxu0 %v245
  %656 = vmatmul.mubr.bf16.gmra.mxu0 %v244
  %v657 = vpop.f32.mrf.mxu0
  %v658 = vadd.f32 %v561, %v657
  %v659 = vpop.f32.mrf.mxu0
  %v660 = vpop.f32.mrf.mxu0
  %v661 = vadd.f32 %v564, %v660
  %v662 = vpop.f32.mrf.mxu0
  %663 = vdwg.mxu0
  %v664 = vmul.f32 %v602, 0.2
  %v665 = vmul.f32 %v605, 0.2
  %v666 = vmul.f32 %v610, 0.2
  %v667 = vmul.f32 %v613, 0.2
  %v668 = vmul.f32 %v618, 0.2
  %v669 = vmul.f32 %v621, 0.2
  %v670 = vmul.f32 %v626, 0.2
  %v671 = vmul.f32 %v629, 0.2
  %v672 = vmul.f32 %v634, 0.2
  %v673 = vmul.f32 %v637, 0.2
  %v674 = vmul.f32 %v642, 0.2
  %v675 = vmul.f32 %v645, 0.2
  %v676 = vmul.f32 %v650, 0.2
  %v677 = vmul.f32 %v653, 0.2
  %v678 = vmul.f32 %v658, 0.2
  %v679 = vmul.f32 %v661, 0.2
  %v680 = vmax.f32 %v602, %v664
  %v681 = vmax.f32 %v605, %v665
  %v682 = vmax.f32 %v610, %v666
  %v683 = vmax.f32 %v613, %v667
  %v684 = vmax.f32 %v618, %v668
  %v685 = vmax.f32 %v621, %v669
  %v686 = vmax.f32 %v626, %v670
  %v687 = vmax.f32 %v629, %v671
  %v688 = vmax.f32 %v634, %v672
  %v689 = vmax.f32 %v637, %v673
  %v690 = vmax.f32 %v642, %v674
  %v691 = vmax.f32 %v645, %v675
  %v692 = vmax.f32 %v650, %v676
  %v693 = vmax.f32 %v653, %v677
  %v694 = vmax.f32 %v658, %v678
  %v695 = vmax.f32 %v661, %v679
  %v696 = vpack.c.bf16 %v681, %v680
  %v697 = vpack.c.bf16 %v683, %v682
  %v698 = vpack.c.bf16 %v685, %v684
  %v699 = vpack.c.bf16 %v687, %v686
  %v700 = vpack.c.bf16 %v689, %v688
  %v701 = vpack.c.bf16 %v691, %v690
  %v702 = vpack.c.bf16 %v693, %v692
  %v703 = vpack.c.bf16 %v695, %v694
  %v712 = vunpack.c.l.b16 %v696
  %v713 = vunpack.c.h.b16 %v696
  %v714 = vunpack.c.l.b16 %v697
  %v715 = vunpack.c.h.b16 %v697
  %v716 = vunpack.c.l.b16 %v698
  %v717 = vunpack.c.h.b16 %v698
  %v718 = vunpack.c.l.b16 %v699
  %v719 = vunpack.c.h.b16 %v699
  %v720 = vunpack.c.l.b16 %v700
  %v721 = vunpack.c.h.b16 %v700
  %v722 = vunpack.c.l.b16 %v701
  %v723 = vunpack.c.h.b16 %v701
  %v724 = vunpack.c.l.b16 %v702
  %v725 = vunpack.c.h.b16 %v702
  %v726 = vunpack.c.l.b16 %v703
  %v727 = vunpack.c.h.b16 %v703
  %v728 = vpack.c.b16 %v712, %v712
  %v729 = vpack.c.b16 %v713, %v713
  %v730 = vpack.c.b16 %v714, %v714
  %v731 = vpack.c.b16 %v715, %v715
  %v732 = vpack.c.b16 %v716, %v716
  %v733 = vpack.c.b16 %v717, %v717
  %v734 = vpack.c.b16 %v718, %v718
  %v735 = vpack.c.b16 %v719, %v719
  %v736 = vpack.c.b16 %v720, %v720
  %v737 = vpack.c.b16 %v721, %v721
  %v738 = vpack.c.b16 %v722, %v722
  %v739 = vpack.c.b16 %v723, %v723
  %v740 = vpack.c.b16 %v724, %v724
  %v741 = vpack.c.b16 %v725, %v725
  %v742 = vpack.c.b16 %v726, %v726
  %v743 = vpack.c.b16 %v727, %v727
  %vm760 = vcmask 519168
  %761 = vst.msk [vmem:[%s3] sm:$0xf] %vm760, %v728
  %762 = vst.msk [vmem:[%s3 + $0x4] sm:$0xf] %vm760, %v729
  %763 = vst.msk [vmem:[%s3 + $0x8] sm:$0xf] %vm760, %v730
  %764 = vst.msk [vmem:[%s3 + $0xc] sm:$0xf] %vm760, %v731
  %765 = vst.msk [vmem:[%s3 + $0x10] sm:$0xf] %vm760, %v732
  %766 = vst.msk [vmem:[%s3 + $0x14] sm:$0xf] %vm760, %v733
  %767 = vst.msk [vmem:[%s3 + $0x18] sm:$0xf] %vm760, %v734
  %768 = vst.msk [vmem:[%s3 + $0x1c] sm:$0xf] %vm760, %v735
  %769 = vst.msk [vmem:[%s3 + $0x20] sm:$0xf] %vm760, %v736
  %770 = vst.msk [vmem:[%s3 + $0x24] sm:$0xf] %vm760, %v737
  %771 = vst.msk [vmem:[%s3 + $0x28] sm:$0xf] %vm760, %v738
  %772 = vst.msk [vmem:[%s3 + $0x2c] sm:$0xf] %vm760, %v739
  %773 = vst.msk [vmem:[%s3 + $0x30] sm:$0xf] %vm760, %v740
  %774 = vst.msk [vmem:[%s3 + $0x34] sm:$0xf] %vm760, %v741
  %775 = vst.msk [vmem:[%s3 + $0x38] sm:$0xf] %vm760, %v742
  %776 = vst.msk [vmem:[%s3 + $0x3c] sm:$0xf] %vm760, %v743
  // Predicated region
  $region14: #{multi_crit_forward.7} parent=0 // pred_check
    _
  $region15: #{multi_crit_forward.7} parent=0 // pred_check_branch
    %778 = sbr.rel (0) target = $region17
  $region16: #{multi_crit_forward.7} parent=0 // pred_region
    _
  $region17: #{multi_crit_forward.7} parent=0 // pred_fallthru
    _
  // Predicated region
  $region18: #{multi_crit_forward.7} parent=0 // pred_check
    _
  $region19: #{multi_crit_forward.7} parent=0 // pred_check_branch
    %780 = sbr.rel (0) target = $region21
  $region20: #{multi_crit_forward.7} parent=0 // pred_region
    _
  $region21: #{multi_crit_forward.7} parent=0 // pred_fallthru
    _

// kernel: multi_crit_forward.8
$region0: #{multi_crit_forward.8}
  #allocation0 [shape = 'u32[]', space=smem, size = 0x4, offset = 0x4, fixed_abs, tag = 'smem constant byte address 0x4 - core index']
  #allocation1 [shape = 'u32[144,128]{1,0:T(1,128)}', space=vmem, size = 0x12000, scoped, tag = 'internal scratch']
  %s0 = inlined_call_operand.vmem [shape: bf16[18,1024], index: 0, kind: input, shape index: {}]
  %s1 = inlined_call_operand.vmem [shape: bf16[1024,64], index: 1, kind: input, shape index: {}]
  %s2 = inlined_call_operand.vmem [shape: f32[1,64], index: 2, kind: input, shape index: {}]
  %s3 = inlined_call_operand.vmem [shape: bf16[18,64], index: 3, kind: output, shape index: {}]
  %s4 = sld [smem:[#allocation0]]
  $region22: #{multi_crit_forward.8} parent=0
    _
  %s6 = ssub.s32 1, %s4
  %s7 = scalar_select 0, %s6, %s4
  // Predicated region
  $region2: #{multi_crit_forward.8} parent=0 // pred_check
    _
  $region3: #{multi_crit_forward.8} parent=0 // pred_check_branch
    %9 = sbr.rel (0) target = $region5
  $region4: #{multi_crit_forward.8} parent=0 // pred_region
    _
  $region5: #{multi_crit_forward.8} parent=0 // pred_fallthru
    _
  // Predicated region
  $region6: #{multi_crit_forward.8} parent=0 // pred_check
    _
  $region7: #{multi_crit_forward.8} parent=0 // pred_check_branch
    %11 = sbr.rel (0) target = $region9
  $region8: #{multi_crit_forward.8} parent=0 // pred_region
    _
  $region9: #{multi_crit_forward.8} parent=0 // pred_fallthru
    _
  // Predicated region
  $region10: #{multi_crit_forward.8} parent=0 // pred_check
    _
  $region11: #{multi_crit_forward.8} parent=0 // pred_check_branch
    %13 = sbr.rel (0) target = $region13
  $region12: #{multi_crit_forward.8} parent=0 // pred_region
    _
  $region13: #{multi_crit_forward.8} parent=0 // pred_fallthru
    _
  %v15 = vld [vmem:[%s0] sm:$0xff]
  %v16 = vld [vmem:[%s0 + $0x8] sm:$0xff]
  %v17 = vld [vmem:[%s0 + $0x10] sm:$0xff]
  %v18 = vld [vmem:[%s0 + $0x18] sm:$0xff]
  %v19 = vld [vmem:[%s0 + $0x20] sm:$0xff]
  %v20 = vld [vmem:[%s0 + $0x28] sm:$0xff]
  %v21 = vld [vmem:[%s0 + $0x30] sm:$0xff]
  %v22 = vld [vmem:[%s0 + $0x38] sm:$0xff]
  %v23 = vld [vmem:[%s0 + $0x40] sm:$0x11]
  %v24 = vld [vmem:[%s0 + $0x48] sm:$0x11]
  %v25 = vld [vmem:[%s0 + $0x50] sm:$0x11]
  %v26 = vld [vmem:[%s0 + $0x58] sm:$0x11]
  %v27 = vld [vmem:[%s1] sm:$0xf]
  %v28 = vld [vmem:[%s1 + $0x4] sm:$0xf]
  %v29 = vld [vmem:[%s1 + $0x8] sm:$0xf]
  %v30 = vld [vmem:[%s1 + $0xc] sm:$0xf]
  %v31 = vld [vmem:[%s1 + $0x10] sm:$0xf]
  %v32 = vld [vmem:[%s1 + $0x14] sm:$0xf]
  %v33 = vld [vmem:[%s1 + $0x18] sm:$0xf]
  %v34 = vld [vmem:[%s1 + $0x1c] sm:$0xf]
  %v35 = vld [vmem:[%s1 + $0x20] sm:$0xf]
  %v36 = vld [vmem:[%s1 + $0x24] sm:$0xf]
  %v37 = vld [vmem:[%s1 + $0x28] sm:$0xf]
  %v38 = vld [vmem:[%s1 + $0x2c] sm:$0xf]
  %v39 = vld [vmem:[%s1 + $0x30] sm:$0xf]
  %v40 = vld [vmem:[%s1 + $0x34] sm:$0xf]
  %v41 = vld [vmem:[%s1 + $0x38] sm:$0xf]
  %v42 = vld [vmem:[%s1 + $0x3c] sm:$0xf]
  %v43 = vld [vmem:[%s1 + $0x40] sm:$0xf]
  %v44 = vld [vmem:[%s1 + $0x44] sm:$0xf]
  %v45 = vld [vmem:[%s1 + $0x48] sm:$0xf]
  %v46 = vld [vmem:[%s1 + $0x4c] sm:$0xf]
  %v47 = vld [vmem:[%s1 + $0x50] sm:$0xf]
  %v48 = vld [vmem:[%s1 + $0x54] sm:$0xf]
  %v49 = vld [vmem:[%s1 + $0x58] sm:$0xf]
  %v50 = vld [vmem:[%s1 + $0x5c] sm:$0xf]
  %v51 = vld [vmem:[%s1 + $0x60] sm:$0xf]
  %v52 = vld [vmem:[%s1 + $0x64] sm:$0xf]
  %v53 = vld [vmem:[%s1 + $0x68] sm:$0xf]
  %v54 = vld [vmem:[%s1 + $0x6c] sm:$0xf]
  %v55 = vld [vmem:[%s1 + $0x70] sm:$0xf]
  %v56 = vld [vmem:[%s1 + $0x74] sm:$0xf]
  %v57 = vld [vmem:[%s1 + $0x78] sm:$0xf]
  %v58 = vld [vmem:[%s1 + $0x7c] sm:$0xf]
  %v59 = vld [vmem:[%s1 + $0x80] sm:$0xf]
  %v60 = vld [vmem:[%s1 + $0x84] sm:$0xf]
  %v61 = vld [vmem:[%s1 + $0x88] sm:$0xf]
  %v62 = vld [vmem:[%s1 + $0x8c] sm:$0xf]
  %v63 = vld [vmem:[%s1 + $0x90] sm:$0xf]
  %v64 = vld [vmem:[%s1 + $0x94] sm:$0xf]
  %v65 = vld [vmem:[%s1 + $0x98] sm:$0xf]
  %v66 = vld [vmem:[%s1 + $0x9c] sm:$0xf]
  %v67 = vld [vmem:[%s1 + $0xa0] sm:$0xf]
  %v68 = vld [vmem:[%s1 + $0xa4] sm:$0xf]
  %v69 = vld [vmem:[%s1 + $0xa8] sm:$0xf]
  %v70 = vld [vmem:[%s1 + $0xac] sm:$0xf]
  %v71 = vld [vmem:[%s1 + $0xb0] sm:$0xf]
  %v72 = vld [vmem:[%s1 + $0xb4] sm:$0xf]
  %v73 = vld [vmem:[%s1 + $0xb8] sm:$0xf]
  %v74 = vld [vmem:[%s1 + $0xbc] sm:$0xf]
  %v75 = vld [vmem:[%s1 + $0xc0] sm:$0xf]
  %v76 = vld [vmem:[%s1 + $0xc4] sm:$0xf]
  %v77 = vld [vmem:[%s1 + $0xc8] sm:$0xf]
  %v78 = vld [vmem:[%s1 + $0xcc] sm:$0xf]
  %v79 = vld [vmem:[%s1 + $0xd0] sm:$0xf]
  %v80 = vld [vmem:[%s1 + $0xd4] sm:$0xf]
  %v81 = vld [vmem:[%s1 + $0xd8] sm:$0xf]
  %v82 = vld [vmem:[%s1 + $0xdc] sm:$0xf]
  %v83 = vld [vmem:[%s1 + $0xe0] sm:$0xf]
  %v84 = vld [vmem:[%s1 + $0xe4] sm:$0xf]
  %v85 = vld [vmem:[%s1 + $0xe8] sm:$0xf]
  %v86 = vld [vmem:[%s1 + $0xec] sm:$0xf]
  %v87 = vld [vmem:[%s1 + $0xf0] sm:$0xf]
  %v88 = vld [vmem:[%s1 + $0xf4] sm:$0xf]
  %v89 = vld [vmem:[%s1 + $0xf8] sm:$0xf]
  %v90 = vld [vmem:[%s1 + $0xfc] sm:$0xf]
  %v91 = vld [vmem:[%s1 + $0x100] sm:$0xf]
  %v92 = vld [vmem:[%s1 + $0x104] sm:$0xf]
  %v93 = vld [vmem:[%s1 + $0x108] sm:$0xf]
  %v94 = vld [vmem:[%s1 + $0x10c] sm:$0xf]
  %v95 = vld [vmem:[%s1 + $0x110] sm:$0xf]
  %v96 = vld [vmem:[%s1 + $0x114] sm:$0xf]
  %v97 = vld [vmem:[%s1 + $0x118] sm:$0xf]
  %v98 = vld [vmem:[%s1 + $0x11c] sm:$0xf]
  %v99 = vld [vmem:[%s1 + $0x120] sm:$0xf]
  %v100 = vld [vmem:[%s1 + $0x124] sm:$0xf]
  %v101 = vld [vmem:[%s1 + $0x128] sm:$0xf]
  %v102 = vld [vmem:[%s1 + $0x12c] sm:$0xf]
  %v103 = vld [vmem:[%s1 + $0x130] sm:$0xf]
  %v104 = vld [vmem:[%s1 + $0x134] sm:$0xf]
  %v105 = vld [vmem:[%s1 + $0x138] sm:$0xf]
  %v106 = vld [vmem:[%s1 + $0x13c] sm:$0xf]
  %v107 = vld [vmem:[%s1 + $0x140] sm:$0xf]
  %v108 = vld [vmem:[%s1 + $0x144] sm:$0xf]
  %v109 = vld [vmem:[%s1 + $0x148] sm:$0xf]
  %v110 = vld [vmem:[%s1 + $0x14c] sm:$0xf]
  %v111 = vld [vmem:[%s1 + $0x150] sm:$0xf]
  %v112 = vld [vmem:[%s1 + $0x154] sm:$0xf]
  %v113 = vld [vmem:[%s1 + $0x158] sm:$0xf]
  %v114 = vld [vmem:[%s1 + $0x15c] sm:$0xf]
  %v115 = vld [vmem:[%s1 + $0x160] sm:$0xf]
  %v116 = vld [vmem:[%s1 + $0x164] sm:$0xf]
  %v117 = vld [vmem:[%s1 + $0x168] sm:$0xf]
  %v118 = vld [vmem:[%s1 + $0x16c] sm:$0xf]
  %v119 = vld [vmem:[%s1 + $0x170] sm:$0xf]
  %v120 = vld [vmem:[%s1 + $0x174] sm:$0xf]
  %v121 = vld [vmem:[%s1 + $0x178] sm:$0xf]
  %v122 = vld [vmem:[%s1 + $0x17c] sm:$0xf]
  %v123 = vld [vmem:[%s1 + $0x180] sm:$0xf]
  %v124 = vld [vmem:[%s1 + $0x184] sm:$0xf]
  %v125 = vld [vmem:[%s1 + $0x188] sm:$0xf]
  %v126 = vld [vmem:[%s1 + $0x18c] sm:$0xf]
  %v127 = vld [vmem:[%s1 + $0x190] sm:$0xf]
  %v128 = vld [vmem:[%s1 + $0x194] sm:$0xf]
  %v129 = vld [vmem:[%s1 + $0x198] sm:$0xf]
  %v130 = vld [vmem:[%s1 + $0x19c] sm:$0xf]
  %v131 = vld [vmem:[%s1 + $0x1a0] sm:$0xf]
  %v132 = vld [vmem:[%s1 + $0x1a4] sm:$0xf]
  %v133 = vld [vmem:[%s1 + $0x1a8] sm:$0xf]
  %v134 = vld [vmem:[%s1 + $0x1ac] sm:$0xf]
  %v135 = vld [vmem:[%s1 + $0x1b0] sm:$0xf]
  %v136 = vld [vmem:[%s1 + $0x1b4] sm:$0xf]
  %v137 = vld [vmem:[%s1 + $0x1b8] sm:$0xf]
  %v138 = vld [vmem:[%s1 + $0x1bc] sm:$0xf]
  %v139 = vld [vmem:[%s1 + $0x1c0] sm:$0xf]
  %v140 = vld [vmem:[%s1 + $0x1c4] sm:$0xf]
  %v141 = vld [vmem:[%s1 + $0x1c8] sm:$0xf]
  %v142 = vld [vmem:[%s1 + $0x1cc] sm:$0xf]
  %v143 = vld [vmem:[%s1 + $0x1d0] sm:$0xf]
  %v144 = vld [vmem:[%s1 + $0x1d4] sm:$0xf]
  %v145 = vld [vmem:[%s1 + $0x1d8] sm:$0xf]
  %v146 = vld [vmem:[%s1 + $0x1dc] sm:$0xf]
  %v147 = vld [vmem:[%s1 + $0x1e0] sm:$0xf]
  %v148 = vld [vmem:[%s1 + $0x1e4] sm:$0xf]
  %v149 = vld [vmem:[%s1 + $0x1e8] sm:$0xf]
  %v150 = vld [vmem:[%s1 + $0x1ec] sm:$0xf]
  %v151 = vld [vmem:[%s1 + $0x1f0] sm:$0xf]
  %v152 = vld [vmem:[%s1 + $0x1f4] sm:$0xf]
  %v153 = vld [vmem:[%s1 + $0x1f8] sm:$0xf]
  %v154 = vld [vmem:[%s1 + $0x1fc] sm:$0xf]
  %v155 = vld [vmem:[%s2] sm:$0x1]
  %v157 = vlaneseq
  %v158 = vshrl.u32 %v157, 7
  %v159 = vsub.s32 0, %v158
  %v160 = vrot.slane %v155, %v159
  %v174 = vunpack.c.l.b16 %v15
  %v175 = vunpack.c.h.b16 %v15
  %v176 = vunpack.c.l.b16 %v16
  %v177 = vunpack.c.h.b16 %v16
  %v178 = vunpack.c.l.b16 %v17
  %v179 = vunpack.c.h.b16 %v17
  %v180 = vunpack.c.l.b16 %v18
  %v181 = vunpack.c.h.b16 %v18
  %v182 = vunpack.c.l.b16 %v19
  %v183 = vunpack.c.h.b16 %v19
  %v184 = vunpack.c.l.b16 %v20
  %v185 = vunpack.c.h.b16 %v20
  %v186 = vunpack.c.l.b16 %v21
  %v187 = vunpack.c.h.b16 %v21
  %v188 = vunpack.c.l.b16 %v22
  %v189 = vunpack.c.h.b16 %v22
  %v190 = vunpack.c.l.b16 %v23
  %v191 = vunpack.c.h.b16 %v23
  %v192 = vunpack.c.l.b16 %v24
  %v193 = vunpack.c.h.b16 %v24
  %v194 = vunpack.c.l.b16 %v25
  %v195 = vunpack.c.h.b16 %v25
  %v196 = vunpack.c.l.b16 %v26
  %v197 = vunpack.c.h.b16 %v26
  %v198 = vpack.c.b16 %v182, %v174
  %v199 = vpack.c.b16 %v183, %v175
  %v200 = vpack.c.b16 %v184, %v176
  %v201 = vpack.c.b16 %v185, %v177
  %v202 = vpack.c.b16 %v186, %v178
  %v203 = vpack.c.b16 %v187, %v179
  %v204 = vpack.c.b16 %v188, %v180
  %v205 = vpack.c.b16 %v189, %v181
  %v206 = vpack.c.b16 %v190, %v190
  %v207 = vpack.c.b16 %v191, %v191
  %v208 = vpack.c.b16 %v192, %v192
  %v209 = vpack.c.b16 %v193, %v193
  %v210 = vpack.c.b16 %v194, %v194
  %v211 = vpack.c.b16 %v195, %v195
  %v212 = vpack.c.b16 %v196, %v196
  %v213 = vpack.c.b16 %v197, %v197
  %v358 = vunpack.c.l.b16 %v27
  %v359 = vunpack.c.l.b16 %v28
  %v360 = vunpack.c.l.b16 %v29
  %v361 = vunpack.c.l.b16 %v30
  %v362 = vunpack.c.l.b16 %v31
  %v363 = vunpack.c.l.b16 %v32
  %v364 = vunpack.c.l.b16 %v33
  %v365 = vunpack.c.l.b16 %v34
  %v366 = vunpack.c.l.b16 %v35
  %v367 = vunpack.c.l.b16 %v36
  %v368 = vunpack.c.l.b16 %v37
  %v369 = vunpack.c.l.b16 %v38
  %v370 = vunpack.c.l.b16 %v39
  %v371 = vunpack.c.l.b16 %v40
  %v372 = vunpack.c.l.b16 %v41
  %v373 = vunpack.c.l.b16 %v42
  %v374 = vunpack.c.l.b16 %v43
  %v375 = vunpack.c.l.b16 %v44
  %v376 = vunpack.c.l.b16 %v45
  %v377 = vunpack.c.l.b16 %v46
  %v378 = vunpack.c.l.b16 %v47
  %v379 = vunpack.c.l.b16 %v48
  %v380 = vunpack.c.l.b16 %v49
  %v381 = vunpack.c.l.b16 %v50
  %v382 = vunpack.c.l.b16 %v51
  %v383 = vunpack.c.l.b16 %v52
  %v384 = vunpack.c.l.b16 %v53
  %v385 = vunpack.c.l.b16 %v54
  %v386 = vunpack.c.l.b16 %v55
  %v387 = vunpack.c.l.b16 %v56
  %v388 = vunpack.c.l.b16 %v57
  %v389 = vunpack.c.l.b16 %v58
  %v390 = vunpack.c.l.b16 %v59
  %v391 = vunpack.c.l.b16 %v60
  %v392 = vunpack.c.l.b16 %v61
  %v393 = vunpack.c.l.b16 %v62
  %v394 = vunpack.c.l.b16 %v63
  %v395 = vunpack.c.l.b16 %v64
  %v396 = vunpack.c.l.b16 %v65
  %v397 = vunpack.c.l.b16 %v66
  %v398 = vunpack.c.l.b16 %v67
  %v399 = vunpack.c.l.b16 %v68
  %v400 = vunpack.c.l.b16 %v69
  %v401 = vunpack.c.l.b16 %v70
  %v402 = vunpack.c.l.b16 %v71
  %v403 = vunpack.c.l.b16 %v72
  %v404 = vunpack.c.l.b16 %v73
  %v405 = vunpack.c.l.b16 %v74
  %v406 = vunpack.c.l.b16 %v75
  %v407 = vunpack.c.l.b16 %v76
  %v408 = vunpack.c.l.b16 %v77
  %v409 = vunpack.c.l.b16 %v78
  %v410 = vunpack.c.l.b16 %v79
  %v411 = vunpack.c.l.b16 %v80
  %v412 = vunpack.c.l.b16 %v81
  %v413 = vunpack.c.l.b16 %v82
  %v414 = vunpack.c.l.b16 %v83
  %v415 = vunpack.c.l.b16 %v84
  %v416 = vunpack.c.l.b16 %v85
  %v417 = vunpack.c.l.b16 %v86
  %v418 = vunpack.c.l.b16 %v87
  %v419 = vunpack.c.l.b16 %v88
  %v420 = vunpack.c.l.b16 %v89
  %v421 = vunpack.c.l.b16 %v90
  %v422 = vunpack.c.l.b16 %v91
  %v423 = vunpack.c.l.b16 %v92
  %v424 = vunpack.c.l.b16 %v93
  %v425 = vunpack.c.l.b16 %v94
  %v426 = vunpack.c.l.b16 %v95
  %v427 = vunpack.c.l.b16 %v96
  %v428 = vunpack.c.l.b16 %v97
  %v429 = vunpack.c.l.b16 %v98
  %v430 = vunpack.c.l.b16 %v99
  %v431 = vunpack.c.l.b16 %v100
  %v432 = vunpack.c.l.b16 %v101
  %v433 = vunpack.c.l.b16 %v102
  %v434 = vunpack.c.l.b16 %v103
  %v435 = vunpack.c.l.b16 %v104
  %v436 = vunpack.c.l.b16 %v105
  %v437 = vunpack.c.l.b16 %v106
  %v438 = vunpack.c.l.b16 %v107
  %v439 = vunpack.c.l.b16 %v108
  %v440 = vunpack.c.l.b16 %v109
  %v441 = vunpack.c.l.b16 %v110
  %v442 = vunpack.c.l.b16 %v111
  %v443 = vunpack.c.l.b16 %v112
  %v444 = vunpack.c.l.b16 %v113
  %v445 = vunpack.c.l.b16 %v114
  %v446 = vunpack.c.l.b16 %v115
  %v447 = vunpack.c.l.b16 %v116
  %v448 = vunpack.c.l.b16 %v117
  %v449 = vunpack.c.l.b16 %v118
  %v450 = vunpack.c.l.b16 %v119
  %v451 = vunpack.c.l.b16 %v120
  %v452 = vunpack.c.l.b16 %v121
  %v453 = vunpack.c.l.b16 %v122
  %v454 = vunpack.c.l.b16 %v123
  %v455 = vunpack.c.l.b16 %v124
  %v456 = vunpack.c.l.b16 %v125
  %v457 = vunpack.c.l.b16 %v126
  %v458 = vunpack.c.l.b16 %v127
  %v459 = vunpack.c.l.b16 %v128
  %v460 = vunpack.c.l.b16 %v129
  %v461 = vunpack.c.l.b16 %v130
  %v462 = vunpack.c.l.b16 %v131
  %v463 = vunpack.c.l.b16 %v132
  %v464 = vunpack.c.l.b16 %v133
  %v465 = vunpack.c.l.b16 %v134
  %v466 = vunpack.c.l.b16 %v135
  %v467 = vunpack.c.l.b16 %v136
  %v468 = vunpack.c.l.b16 %v137
  %v469 = vunpack.c.l.b16 %v138
  %v470 = vunpack.c.l.b16 %v139
  %v471 = vunpack.c.l.b16 %v140
  %v472 = vunpack.c.l.b16 %v141
  %v473 = vunpack.c.l.b16 %v142
  %v474 = vunpack.c.l.b16 %v143
  %v475 = vunpack.c.l.b16 %v144
  %v476 = vunpack.c.l.b16 %v145
  %v477 = vunpack.c.l.b16 %v146
  %v478 = vunpack.c.l.b16 %v147
  %v479 = vunpack.c.l.b16 %v148
  %v480 = vunpack.c.l.b16 %v149
  %v481 = vunpack.c.l.b16 %v150
  %v482 = vunpack.c.l.b16 %v151
  %v483 = vunpack.c.l.b16 %v152
  %v484 = vunpack.c.l.b16 %v153
  %v485 = vunpack.c.l.b16 %v154
  %v486 = vpack.c.b16 %v359, %v358
  %v487 = vpack.c.b16 %v361, %v360
  %v488 = vpack.c.b16 %v363, %v362
  %v489 = vpack.c.b16 %v365, %v364
  %v490 = vpack.c.b16 %v367, %v366
  %v491 = vpack.c.b16 %v369, %v368
  %v492 = vpack.c.b16 %v371, %v370
  %v493 = vpack.c.b16 %v373, %v372
  %v494 = vpack.c.b16 %v375, %v374
  %v495 = vpack.c.b16 %v377, %v376
  %v496 = vpack.c.b16 %v379, %v378
  %v497 = vpack.c.b16 %v381, %v380
  %v498 = vpack.c.b16 %v383, %v382
  %v499 = vpack.c.b16 %v385, %v384
  %v500 = vpack.c.b16 %v387, %v386
  %v501 = vpack.c.b16 %v389, %v388
  %v502 = vpack.c.b16 %v391, %v390
  %v503 = vpack.c.b16 %v393, %v392
  %v504 = vpack.c.b16 %v395, %v394
  %v505 = vpack.c.b16 %v397, %v396
  %v506 = vpack.c.b16 %v399, %v398
  %v507 = vpack.c.b16 %v401, %v400
  %v508 = vpack.c.b16 %v403, %v402
  %v509 = vpack.c.b16 %v405, %v404
  %v510 = vpack.c.b16 %v407, %v406
  %v511 = vpack.c.b16 %v409, %v408
  %v512 = vpack.c.b16 %v411, %v410
  %v513 = vpack.c.b16 %v413, %v412
  %v514 = vpack.c.b16 %v415, %v414
  %v515 = vpack.c.b16 %v417, %v416
  %v516 = vpack.c.b16 %v419, %v418
  %v517 = vpack.c.b16 %v421, %v420
  %v518 = vpack.c.b16 %v423, %v422
  %v519 = vpack.c.b16 %v425, %v424
  %v520 = vpack.c.b16 %v427, %v426
  %v521 = vpack.c.b16 %v429, %v428
  %v522 = vpack.c.b16 %v431, %v430
  %v523 = vpack.c.b16 %v433, %v432
  %v524 = vpack.c.b16 %v435, %v434
  %v525 = vpack.c.b16 %v437, %v436
  %v526 = vpack.c.b16 %v439, %v438
  %v527 = vpack.c.b16 %v441, %v440
  %v528 = vpack.c.b16 %v443, %v442
  %v529 = vpack.c.b16 %v445, %v444
  %v530 = vpack.c.b16 %v447, %v446
  %v531 = vpack.c.b16 %v449, %v448
  %v532 = vpack.c.b16 %v451, %v450
  %v533 = vpack.c.b16 %v453, %v452
  %v534 = vpack.c.b16 %v455, %v454
  %v535 = vpack.c.b16 %v457, %v456
  %v536 = vpack.c.b16 %v459, %v458
  %v537 = vpack.c.b16 %v461, %v460
  %v538 = vpack.c.b16 %v463, %v462
  %v539 = vpack.c.b16 %v465, %v464
  %v540 = vpack.c.b16 %v467, %v466
  %v541 = vpack.c.b16 %v469, %v468
  %v542 = vpack.c.b16 %v471, %v470
  %v543 = vpack.c.b16 %v473, %v472
  %v544 = vpack.c.b16 %v475, %v474
  %v545 = vpack.c.b16 %v477, %v476
  %v546 = vpack.c.b16 %v479, %v478
  %v547 = vpack.c.b16 %v481, %v480
  %v548 = vpack.c.b16 %v483, %v482
  %v549 = vpack.c.b16 %v485, %v484
  %614 = vmatprep.subr.bf16.mxu0 0
  %615 = vmatpush1.bf16.msra.mxu0 %v493
  %616 = vmatprep.subr.bf16.mxu0 0
  %617 = vmatpush1.bf16.msra.mxu0 %v492
  %618 = vmatprep.subr.bf16.mxu0 0
  %619 = vmatpush1.bf16.msra.mxu0 %v491
  %620 = vmatprep.subr.bf16.mxu0 0
  %621 = vmatpush1.bf16.msra.mxu0 %v490
  %622 = vmatprep.subr.bf16.mxu0 0
  %623 = vmatpush1.bf16.msra.mxu0 %v489
  %624 = vmatprep.subr.bf16.mxu0 0
  %625 = vmatpush1.bf16.msra.mxu0 %v488
  %626 = vmatprep.subr.bf16.mxu0 0
  %627 = vmatpush1.bf16.msra.mxu0 %v487
  %628 = vmatprep.subr.bf16.mxu0 0
  %629 = vmatpush1.bf16.msra.mxu0 %v486
  %630 = vmatprep.subr.bf16.mxu0 0
  %631 = vmatpush2.bf16.msra.mxu0 %v501
  %632 = vmatprep.subr.bf16.mxu0 0
  %633 = vmatpush2.bf16.msra.mxu0 %v500
  %634 = vmatprep.subr.bf16.mxu0 0
  %635 = vmatpush2.bf16.msra.mxu0 %v499
  %636 = vmatprep.subr.bf16.mxu0 0
  %637 = vmatpush2.bf16.msra.mxu0 %v498
  %638 = vmatprep.subr.bf16.mxu0 0
  %639 = vmatpush2.bf16.msra.mxu0 %v497
  %640 = vmatprep.subr.bf16.mxu0 0
  %641 = vmatpush2.bf16.msra.mxu0 %v496
  %642 = vmatprep.subr.bf16.mxu0 0
  %643 = vmatpush2.bf16.msra.mxu0 %v495
  %644 = vmatprep.subr.bf16.mxu0 0
  %645 = vmatpush2.bf16.msra.mxu0 %v494
  %646 = vmatprep.mubr.bf16.mxu0 %v199
  %647 = vmatmul.mubr.bf16.gmra.mxu0 %v198
  %v648 = vpop.f32.mrf.mxu0
  %v649 = vadd.f32 %v160, %v648
  %v650 = vpop.f32.mrf.mxu0
  %v651 = vpop.f32.mrf.mxu0
  %v652 = vadd.f32 %v160, %v651
  %v653 = vpop.f32.mrf.mxu0
  %654 = vmatprep.mubr.bf16.mxu0 %v207
  %655 = vmatmul.mubr.bf16.gmra.mxu0 %v206
  %v656 = vpop.f32.mrf.mxu0
  %v657 = vadd.f32 %v160, %v656
  %v658 = vpop.f32.mrf.mxu0
  %v659 = vpop.f32.mrf.mxu0
  %v660 = vpop.f32.mrf.mxu0
  %661 = vdwg.mxu0
  %662 = vmatprep.subr.bf16.mxu0 0
  %663 = vmatpush1.bf16.msra.mxu0 %v509
  %664 = vmatprep.subr.bf16.mxu0 0
  %665 = vmatpush1.bf16.msra.mxu0 %v508
  %666 = vmatprep.subr.bf16.mxu0 0
  %667 = vmatpush1.bf16.msra.mxu0 %v507
  %668 = vmatprep.subr.bf16.mxu0 0
  %669 = vmatpush1.bf16.msra.mxu0 %v506
  %670 = vmatprep.subr.bf16.mxu0 0
  %671 = vmatpush1.bf16.msra.mxu0 %v505
  %672 = vmatprep.subr.bf16.mxu0 0
  %673 = vmatpush1.bf16.msra.mxu0 %v504
  %674 = vmatprep.subr.bf16.mxu0 0
  %675 = vmatpush1.bf16.msra.mxu0 %v503
  %676 = vmatprep.subr.bf16.mxu0 0
  %677 = vmatpush1.bf16.msra.mxu0 %v502
  %678 = vmatprep.subr.bf16.mxu0 0
  %679 = vmatpush2.bf16.msra.mxu0 %v517
  %680 = vmatprep.subr.bf16.mxu0 0
  %681 = vmatpush2.bf16.msra.mxu0 %v516
  %682 = vmatprep.subr.bf16.mxu0 0
  %683 = vmatpush2.bf16.msra.mxu0 %v515
  %684 = vmatprep.subr.bf16.mxu0 0
  %685 = vmatpush2.bf16.msra.mxu0 %v514
  %686 = vmatprep.subr.bf16.mxu0 0
  %687 = vmatpush2.bf16.msra.mxu0 %v513
  %688 = vmatprep.subr.bf16.mxu0 0
  %689 = vmatpush2.bf16.msra.mxu0 %v512
  %690 = vmatprep.subr.bf16.mxu0 0
  %691 = vmatpush2.bf16.msra.mxu0 %v511
  %692 = vmatprep.subr.bf16.mxu0 0
  %693 = vmatpush2.bf16.msra.mxu0 %v510
  %694 = vmatprep.mubr.bf16.mxu0 %v201
  %695 = vmatmul.mubr.bf16.gmra.mxu0 %v200
  %v696 = vpop.f32.mrf.mxu0
  %v697 = vadd.f32 %v649, %v696
  %v698 = vpop.f32.mrf.mxu0
  %v699 = vpop.f32.mrf.mxu0
  %v700 = vadd.f32 %v652, %v699
  %v701 = vpop.f32.mrf.mxu0
  %702 = vmatprep.mubr.bf16.mxu0 %v209
  %703 = vmatmul.mubr.bf16.gmra.mxu0 %v208
  %v704 = vpop.f32.mrf.mxu0
  %v705 = vadd.f32 %v657, %v704
  %v706 = vpop.f32.mrf.mxu0
  %v707 = vpop.f32.mrf.mxu0
  %v708 = vpop.f32.mrf.mxu0
  %709 = vdwg.mxu0
  %710 = vmatprep.subr.bf16.mxu0 0
  %711 = vmatpush1.bf16.msra.mxu0 %v525
  %712 = vmatprep.subr.bf16.mxu0 0
  %713 = vmatpush1.bf16.msra.mxu0 %v524
  %714 = vmatprep.subr.bf16.mxu0 0
  %715 = vmatpush1.bf16.msra.mxu0 %v523
  %716 = vmatprep.subr.bf16.mxu0 0
  %717 = vmatpush1.bf16.msra.mxu0 %v522
  %718 = vmatprep.subr.bf16.mxu0 0
  %719 = vmatpush1.bf16.msra.mxu0 %v521
  %720 = vmatprep.subr.bf16.mxu0 0
  %721 = vmatpush1.bf16.msra.mxu0 %v520
  %722 = vmatprep.subr.bf16.mxu0 0
  %723 = vmatpush1.bf16.msra.mxu0 %v519
  %724 = vmatprep.subr.bf16.mxu0 0
  %725 = vmatpush1.bf16.msra.mxu0 %v518
  %726 = vmatprep.subr.bf16.mxu0 0
  %727 = vmatpush2.bf16.msra.mxu0 %v533
  %728 = vmatprep.subr.bf16.mxu0 0
  %729 = vmatpush2.bf16.msra.mxu0 %v532
  %730 = vmatprep.subr.bf16.mxu0 0
  %731 = vmatpush2.bf16.msra.mxu0 %v531
  %732 = vmatprep.subr.bf16.mxu0 0
  %733 = vmatpush2.bf16.msra.mxu0 %v530
  %734 = vmatprep.subr.bf16.mxu0 0
  %735 = vmatpush2.bf16.msra.mxu0 %v529
  %736 = vmatprep.subr.bf16.mxu0 0
  %737 = vmatpush2.bf16.msra.mxu0 %v528
  %738 = vmatprep.subr.bf16.mxu0 0
  %739 = vmatpush2.bf16.msra.mxu0 %v527
  %740 = vmatprep.subr.bf16.mxu0 0
  %741 = vmatpush2.bf16.msra.mxu0 %v526
  %742 = vmatprep.mubr.bf16.mxu0 %v203
  %743 = vmatmul.mubr.bf16.gmra.mxu0 %v202
  %v744 = vpop.f32.mrf.mxu0
  %v745 = vadd.f32 %v697, %v744
  %v746 = vpop.f32.mrf.mxu0
  %v747 = vpop.f32.mrf.mxu0
  %v748 = vadd.f32 %v700, %v747
  %v749 = vpop.f32.mrf.mxu0
  %750 = vmatprep.mubr.bf16.mxu0 %v211
  %751 = vmatmul.mubr.bf16.gmra.mxu0 %v210
  %v752 = vpop.f32.mrf.mxu0
  %v753 = vadd.f32 %v705, %v752
  %v754 = vpop.f32.mrf.mxu0
  %v755 = vpop.f32.mrf.mxu0
  %v756 = vpop.f32.mrf.mxu0
  %757 = vdwg.mxu0
  %758 = vmatprep.subr.bf16.mxu0 0
  %759 = vmatpush1.bf16.msra.mxu0 %v541
  %760 = vmatprep.subr.bf16.mxu0 0
  %761 = vmatpush1.bf16.msra.mxu0 %v540
  %762 = vmatprep.subr.bf16.mxu0 0
  %763 = vmatpush1.bf16.msra.mxu0 %v539
  %764 = vmatprep.subr.bf16.mxu0 0
  %765 = vmatpush1.bf16.msra.mxu0 %v538
  %766 = vmatprep.subr.bf16.mxu0 0
  %767 = vmatpush1.bf16.msra.mxu0 %v537
  %768 = vmatprep.subr.bf16.mxu0 0
  %769 = vmatpush1.bf16.msra.mxu0 %v536
  %770 = vmatprep.subr.bf16.mxu0 0
  %771 = vmatpush1.bf16.msra.mxu0 %v535
  %772 = vmatprep.subr.bf16.mxu0 0
  %773 = vmatpush1.bf16.msra.mxu0 %v534
  %774 = vmatprep.subr.bf16.mxu0 0
  %775 = vmatpush2.bf16.msra.mxu0 %v549
  %776 = vmatprep.subr.bf16.mxu0 0
  %777 = vmatpush2.bf16.msra.mxu0 %v548
  %778 = vmatprep.subr.bf16.mxu0 0
  %779 = vmatpush2.bf16.msra.mxu0 %v547
  %780 = vmatprep.subr.bf16.mxu0 0
  %781 = vmatpush2.bf16.msra.mxu0 %v546
  %782 = vmatprep.subr.bf16.mxu0 0
  %783 = vmatpush2.bf16.msra.mxu0 %v545
  %784 = vmatprep.subr.bf16.mxu0 0
  %785 = vmatpush2.bf16.msra.mxu0 %v544
  %786 = vmatprep.subr.bf16.mxu0 0
  %787 = vmatpush2.bf16.msra.mxu0 %v543
  %788 = vmatprep.subr.bf16.mxu0 0
  %789 = vmatpush2.bf16.msra.mxu0 %v542
  %790 = vmatprep.mubr.bf16.mxu0 %v205
  %791 = vmatmul.mubr.bf16.gmra.mxu0 %v204
  %v792 = vpop.f32.mrf.mxu0
  %v793 = vadd.f32 %v745, %v792
  %v794 = vpop.f32.mrf.mxu0
  %v795 = vpop.f32.mrf.mxu0
  %v796 = vadd.f32 %v748, %v795
  %v797 = vpop.f32.mrf.mxu0
  %798 = vmatprep.mubr.bf16.mxu0 %v213
  %799 = vmatmul.mubr.bf16.gmra.mxu0 %v212
  %v800 = vpop.f32.mrf.mxu0
  %v801 = vadd.f32 %v753, %v800
  %v802 = vpop.f32.mrf.mxu0
  %v803 = vpop.f32.mrf.mxu0
  %v804 = vpop.f32.mrf.mxu0
  %805 = vdwg.mxu0
  %v806 = vmul.f32 %v793, 0.2
  %v807 = vmul.f32 %v796, 0.2
  %v808 = vmul.f32 %v801, 0.2
  %v809 = vmax.f32 %v793, %v806
  %v810 = vmax.f32 %v796, %v807
  %v811 = vmax.f32 %v801, %v808
  %v812 = vpack.c.bf16 %v810, %v809
  %v813 = vpack.c.bf16 %v811, %v811
  %v816 = vunpack.c.l.b16 %v812
  %v817 = vunpack.c.h.b16 %v812
  %v818 = vunpack.c.l.b16 %v813
  %v819 = vpack.c.b16 %v816, %v816
  %v820 = vpack.c.b16 %v817, %v817
  %v821 = vpack.c.b16 %v818, %v818
  %vm825 = vcmask 519168
  %826 = vst.msk [vmem:[%s3] sm:$0xf] %vm825, %v819
  %827 = vst.msk [vmem:[%s3 + $0x4] sm:$0xf] %vm825, %v820
  %vm828 = vcmask 516096
  %829 = vst.msk [vmem:[%s3 + $0x8] sm:$0x1] %vm828, %v821
  // Predicated region
  $region14: #{multi_crit_forward.8} parent=0 // pred_check
    _
  $region15: #{multi_crit_forward.8} parent=0 // pred_check_branch
    %831 = sbr.rel (0) target = $region17
  $region16: #{multi_crit_forward.8} parent=0 // pred_region
    _
  $region17: #{multi_crit_forward.8} parent=0 // pred_fallthru
    _
  // Predicated region
  $region18: #{multi_crit_forward.8} parent=0 // pred_check
    _
  $region19: #{multi_crit_forward.8} parent=0 // pred_check_branch
    %833 = sbr.rel (0) target = $region21
  $region20: #{multi_crit_forward.8} parent=0 // pred_region
    _
  $region21: #{multi_crit_forward.8} parent=0 // pred_fallthru
    _

// kernel: multi_crit_forward.9
$region0: #{multi_crit_forward.9}
  #allocation0 [shape = 'u32[]', space=smem, size = 0x4, offset = 0x4, fixed_abs, tag = 'smem constant byte address 0x4 - core index']
  #allocation1 [shape = 'u32[144,128]{1,0:T(1,128)}', space=vmem, size = 0x12000, scoped, tag = 'internal scratch']
  %s0 = inlined_call_operand.vmem [shape: bf16[8,576], index: 0, kind: input, shape index: {}]
  %s1 = inlined_call_operand.vmem [shape: bf16[8,128], index: 1, kind: input, shape index: {}]
  %s2 = inlined_call_operand.vmem [shape: bf16[128,128], index: 2, kind: input, shape index: {}]
  %s3 = inlined_call_operand.vmem [shape: f32[1,128], index: 3, kind: input, shape index: {}]
  %s4 = inlined_call_operand.vmem [shape: bf16[128,64], index: 4, kind: input, shape index: {}]
  %s5 = inlined_call_operand.vmem [shape: f32[1,64], index: 5, kind: input, shape index: {}]
  %s6 = inlined_call_operand.vmem [shape: bf16[576,128], index: 6, kind: input, shape index: {}]
  %s7 = inlined_call_operand.vmem [shape: bf16[64,128], index: 7, kind: input, shape index: {}]
  %s8 = inlined_call_operand.vmem [shape: f32[1,128], index: 8, kind: input, shape index: {}]
  %s9 = inlined_call_operand.vmem [shape: bf16[128,32], index: 9, kind: input, shape index: {}]
  %s10 = inlined_call_operand.vmem [shape: f32[1,32], index: 10, kind: input, shape index: {}]
  %s11 = inlined_call_operand.vmem [shape: bf16[32,128], index: 11, kind: input, shape index: {}]
  %s12 = inlined_call_operand.vmem [shape: f32[1,128], index: 12, kind: input, shape index: {}]
  %s13 = inlined_call_operand.vmem [shape: f32[8,128], index: 13, kind: output, shape index: {}]
  %s14 = sld [smem:[#allocation0]]
  $region62: #{multi_crit_forward.9} parent=0
    _
  %s16 = ssub.s32 1, %s14
  %s17 = scalar_select 0, %s16, %s14
  // Predicated region
  $region2: #{multi_crit_forward.9} parent=0 // pred_check
    _
  $region3: #{multi_crit_forward.9} parent=0 // pred_check_branch
    %19 = sbr.rel (0) target = $region5
  $region4: #{multi_crit_forward.9} parent=0 // pred_region
    _
  $region5: #{multi_crit_forward.9} parent=0 // pred_fallthru
    _
  // Predicated region
  $region6: #{multi_crit_forward.9} parent=0 // pred_check
    _
  $region7: #{multi_crit_forward.9} parent=0 // pred_check_branch
    %21 = sbr.rel (0) target = $region9
  $region8: #{multi_crit_forward.9} parent=0 // pred_region
    _
  $region9: #{multi_crit_forward.9} parent=0 // pred_fallthru
    _
  // Predicated region
  $region10: #{multi_crit_forward.9} parent=0 // pred_check
    _
  $region11: #{multi_crit_forward.9} parent=0 // pred_check_branch
    %23 = sbr.rel (0) target = $region13
  $region12: #{multi_crit_forward.9} parent=0 // pred_region
    _
  $region13: #{multi_crit_forward.9} parent=0 // pred_fallthru
    _
  // Predicated region
  $region14: #{multi_crit_forward.9} parent=0 // pred_check
    _
  $region15: #{multi_crit_forward.9} parent=0 // pred_check_branch
    %25 = sbr.rel (0) target = $region17
  $region16: #{multi_crit_forward.9} parent=0 // pred_region
    _
  $region17: #{multi_crit_forward.9} parent=0 // pred_fallthru
    _
  // Predicated region
  $region18: #{multi_crit_forward.9} parent=0 // pred_check
    _
  $region19: #{multi_crit_forward.9} parent=0 // pred_check_branch
    %27 = sbr.rel (0) target = $region21
  $region20: #{multi_crit_forward.9} parent=0 // pred_region
    _
  $region21: #{multi_crit_forward.9} parent=0 // pred_fallthru
    _
  // Predicated region
  $region22: #{multi_crit_forward.9} parent=0 // pred_check
    _
  $region23: #{multi_crit_forward.9} parent=0 // pred_check_branch
    %29 = sbr.rel (0) target = $region25
  $region24: #{multi_crit_forward.9} parent=0 // pred_region
    _
  $region25: #{multi_crit_forward.9} parent=0 // pred_fallthru
    _
  // Predicated region
  $region26: #{multi_crit_forward.9} parent=0 // pred_check
    _
  $region27: #{multi_crit_forward.9} parent=0 // pred_check_branch
    %31 = sbr.rel (0) target = $region29
  $region28: #{multi_crit_forward.9} parent=0 // pred_region
    _
  $region29: #{multi_crit_forward.9} parent=0 // pred_fallthru
    _
  // Predicated region
  $region30: #{multi_crit_forward.9} parent=0 // pred_check
    _
  $region31: #{multi_crit_forward.9} parent=0 // pred_check_branch
    %33 = sbr.rel (0) target = $region33
  $region32: #{multi_crit_forward.9} parent=0 // pred_region
    _
  $region33: #{multi_crit_forward.9} parent=0 // pred_fallthru
    _
  // Predicated region
  $region34: #{multi_crit_forward.9} parent=0 // pred_check
    _
  $region35: #{multi_crit_forward.9} parent=0 // pred_check_branch
    %35 = sbr.rel (0) target = $region37
  $region36: #{multi_crit_forward.9} parent=0 // pred_region
    _
  $region37: #{multi_crit_forward.9} parent=0 // pred_fallthru
    _
  // Predicated region
  $region38: #{multi_crit_forward.9} parent=0 // pred_check
    _
  $region39: #{multi_crit_forward.9} parent=0 // pred_check_branch
    %37 = sbr.rel (0) target = $region41
  $region40: #{multi_crit_forward.9} parent=0 // pred_region
    _
  $region41: #{multi_crit_forward.9} parent=0 // pred_fallthru
    _
  // Predicated region
  $region42: #{multi_crit_forward.9} parent=0 // pred_check
    _
  $region43: #{multi_crit_forward.9} parent=0 // pred_check_branch
    %39 = sbr.rel (0) target = $region45
  $region44: #{multi_crit_forward.9} parent=0 // pred_region
    _
  $region45: #{multi_crit_forward.9} parent=0 // pred_fallthru
    _
  // Predicated region
  $region46: #{multi_crit_forward.9} parent=0 // pred_check
    _
  $region47: #{multi_crit_forward.9} parent=0 // pred_check_branch
    %41 = sbr.rel (0) target = $region49
  $region48: #{multi_crit_forward.9} parent=0 // pred_region
    _
  $region49: #{multi_crit_forward.9} parent=0 // pred_fallthru
    _
  // Predicated region
  $region50: #{multi_crit_forward.9} parent=0 // pred_check
    _
  $region51: #{multi_crit_forward.9} parent=0 // pred_check_branch
    %43 = sbr.rel (0) target = $region53
  $region52: #{multi_crit_forward.9} parent=0 // pred_region
    _
  $region53: #{multi_crit_forward.9} parent=0 // pred_fallthru
    _
  %v45 = vld [vmem:[%s1] sm:$0xf]
  %v46 = vld [vmem:[%s2] sm:$0xf]
  %v47 = vld [vmem:[%s2 + $0x4] sm:$0xf]
  %v48 = vld [vmem:[%s2 + $0x8] sm:$0xf]
  %v49 = vld [vmem:[%s2 + $0xc] sm:$0xf]
  %v50 = vld [vmem:[%s2 + $0x10] sm:$0xf]
  %v51 = vld [vmem:[%s2 + $0x14] sm:$0xf]
  %v52 = vld [vmem:[%s2 + $0x18] sm:$0xf]
  %v53 = vld [vmem:[%s2 + $0x1c] sm:$0xf]
  %v54 = vld [vmem:[%s2 + $0x20] sm:$0xf]
  %v55 = vld [vmem:[%s2 + $0x24] sm:$0xf]
  %v56 = vld [vmem:[%s2 + $0x28] sm:$0xf]
  %v57 = vld [vmem:[%s2 + $0x2c] sm:$0xf]
  %v58 = vld [vmem:[%s2 + $0x30] sm:$0xf]
  %v59 = vld [vmem:[%s2 + $0x34] sm:$0xf]
  %v60 = vld [vmem:[%s2 + $0x38] sm:$0xf]
  %v61 = vld [vmem:[%s2 + $0x3c] sm:$0xf]
  %v62 = vld [vmem:[%s3] sm:$0x1]
  %v64 = vlaneseq
  %v65 = vshrl.u32 %v64, 7
  %v66 = vsub.s32 0, %v65
  %v67 = vrot.slane %v62, %v66
  %v85 = vunpack.c.l.b16 %v46
  %v86 = vunpack.c.l.b16 %v47
  %v87 = vunpack.c.l.b16 %v48
  %v88 = vunpack.c.l.b16 %v49
  %v89 = vunpack.c.l.b16 %v50
  %v90 = vunpack.c.l.b16 %v51
  %v91 = vunpack.c.l.b16 %v52
  %v92 = vunpack.c.l.b16 %v53
  %v93 = vunpack.c.l.b16 %v54
  %v94 = vunpack.c.l.b16 %v55
  %v95 = vunpack.c.l.b16 %v56
  %v96 = vunpack.c.l.b16 %v57
  %v97 = vunpack.c.l.b16 %v58
  %v98 = vunpack.c.l.b16 %v59
  %v99 = vunpack.c.l.b16 %v60
  %v100 = vunpack.c.l.b16 %v61
  %v101 = vpack.c.b16 %v86, %v85
  %v102 = vpack.c.b16 %v88, %v87
  %v103 = vpack.c.b16 %v90, %v89
  %v104 = vpack.c.b16 %v92, %v91
  %v105 = vpack.c.b16 %v94, %v93
  %v106 = vpack.c.b16 %v96, %v95
  %v107 = vpack.c.b16 %v98, %v97
  %v108 = vpack.c.b16 %v100, %v99
  %117 = vmatprep.subr.bf16.mxu0 0
  %118 = vmatpush1.bf16.msra.mxu0 %v108
  %119 = vmatprep.subr.bf16.mxu0 0
  %120 = vmatpush1.bf16.msra.mxu0 %v107
  %121 = vmatprep.subr.bf16.mxu0 0
  %122 = vmatpush1.bf16.msra.mxu0 %v106
  %123 = vmatprep.subr.bf16.mxu0 0
  %124 = vmatpush1.bf16.msra.mxu0 %v105
  %125 = vmatprep.subr.bf16.mxu0 0
  %126 = vmatpush1.bf16.msra.mxu0 %v104
  %127 = vmatprep.subr.bf16.mxu0 0
  %128 = vmatpush1.bf16.msra.mxu0 %v103
  %129 = vmatprep.subr.bf16.mxu0 0
  %130 = vmatpush1.bf16.msra.mxu0 %v102
  %131 = vmatprep.subr.bf16.mxu0 0
  %132 = vmatpush1.bf16.msra.mxu0 %v101
  %133 = vmatprep.subr.bf16.mxu0 0
  %134 = vmatpush2.bf16.msra.mxu0 0
  %135 = vmatprep.subr.bf16.mxu0 0
  %136 = vmatpush2.bf16.msra.mxu0 0
  %137 = vmatprep.subr.bf16.mxu0 0
  %138 = vmatpush2.bf16.msra.mxu0 0
  %139 = vmatprep.subr.bf16.mxu0 0
  %140 = vmatpush2.bf16.msra.mxu0 0
  %141 = vmatprep.subr.bf16.mxu0 0
  %142 = vmatpush2.bf16.msra.mxu0 0
  %143 = vmatprep.subr.bf16.mxu0 0
  %144 = vmatpush2.bf16.msra.mxu0 0
  %145 = vmatprep.subr.bf16.mxu0 0
  %146 = vmatpush2.bf16.msra.mxu0 0
  %147 = vmatprep.subr.bf16.mxu0 0
  %148 = vmatpush2.bf16.msra.mxu0 0
  %149 = vmatprep.mubr.bf16.mxu0 0
  %150 = vmatmul.mubr.bf16.gmra.mxu0 %v45
  %v151 = vpop.f32.mrf.mxu0
  %v152 = vadd.f32 %v67, %v151
  %v153 = vpop.f32.mrf.mxu0
  %v154 = vpop.f32.mrf.mxu0
  %v155 = vpop.f32.mrf.mxu0
  %156 = vdwg.mxu0
  %v157 = vmul.f32 %v152, 0.2
  %v158 = vmax.f32 %v152, %v157
  %v159 = vpack.c.bf16 %v158, %v158
  %v160 = vld [vmem:[%s4] sm:$0xf]
  %v161 = vld [vmem:[%s4 + $0x4] sm:$0xf]
  %v162 = vld [vmem:[%s4 + $0x8] sm:$0xf]
  %v163 = vld [vmem:[%s4 + $0xc] sm:$0xf]
  %v164 = vld [vmem:[%s4 + $0x10] sm:$0xf]
  %v165 = vld [vmem:[%s4 + $0x14] sm:$0xf]
  %v166 = vld [vmem:[%s4 + $0x18] sm:$0xf]
  %v167 = vld [vmem:[%s4 + $0x1c] sm:$0xf]
  %v168 = vld [vmem:[%s4 + $0x20] sm:$0xf]
  %v169 = vld [vmem:[%s4 + $0x24] sm:$0xf]
  %v170 = vld [vmem:[%s4 + $0x28] sm:$0xf]
  %v171 = vld [vmem:[%s4 + $0x2c] sm:$0xf]
  %v172 = vld [vmem:[%s4 + $0x30] sm:$0xf]
  %v173 = vld [vmem:[%s4 + $0x34] sm:$0xf]
  %v174 = vld [vmem:[%s4 + $0x38] sm:$0xf]
  %v175 = vld [vmem:[%s4 + $0x3c] sm:$0xf]
  %v176 = vld [vmem:[%s5] sm:$0x1]
  %v178 = vlaneseq
  %v179 = vshrl.u32 %v178, 7
  %v180 = vsub.s32 0, %v179
  %v181 = vrot.slane %v176, %v180
  %v199 = vunpack.c.l.b16 %v160
  %v200 = vunpack.c.l.b16 %v161
  %v201 = vunpack.c.l.b16 %v162
  %v202 = vunpack.c.l.b16 %v163
  %v203 = vunpack.c.l.b16 %v164
  %v204 = vunpack.c.l.b16 %v165
  %v205 = vunpack.c.l.b16 %v166
  %v206 = vunpack.c.l.b16 %v167
  %v207 = vunpack.c.l.b16 %v168
  %v208 = vunpack.c.l.b16 %v169
  %v209 = vunpack.c.l.b16 %v170
  %v210 = vunpack.c.l.b16 %v171
  %v211 = vunpack.c.l.b16 %v172
  %v212 = vunpack.c.l.b16 %v173
  %v213 = vunpack.c.l.b16 %v174
  %v214 = vunpack.c.l.b16 %v175
  %v215 = vpack.c.b16 %v200, %v199
  %v216 = vpack.c.b16 %v202, %v201
  %v217 = vpack.c.b16 %v204, %v203
  %v218 = vpack.c.b16 %v206, %v205
  %v219 = vpack.c.b16 %v208, %v207
  %v220 = vpack.c.b16 %v210, %v209
  %v221 = vpack.c.b16 %v212, %v211
  %v222 = vpack.c.b16 %v214, %v213
  %231 = vmatprep.subr.bf16.mxu0 0
  %232 = vmatpush1.bf16.msra.mxu0 %v222
  %233 = vmatprep.subr.bf16.mxu0 0
  %234 = vmatpush1.bf16.msra.mxu0 %v221
  %235 = vmatprep.subr.bf16.mxu0 0
  %236 = vmatpush1.bf16.msra.mxu0 %v220
  %237 = vmatprep.subr.bf16.mxu0 0
  %238 = vmatpush1.bf16.msra.mxu0 %v219
  %239 = vmatprep.subr.bf16.mxu0 0
  %240 = vmatpush1.bf16.msra.mxu0 %v218
  %241 = vmatprep.subr.bf16.mxu0 0
  %242 = vmatpush1.bf16.msra.mxu0 %v217
  %243 = vmatprep.subr.bf16.mxu0 0
  %244 = vmatpush1.bf16.msra.mxu0 %v216
  %245 = vmatprep.subr.bf16.mxu0 0
  %246 = vmatpush1.bf16.msra.mxu0 %v215
  %247 = vmatprep.subr.bf16.mxu0 0
  %248 = vmatpush2.bf16.msra.mxu0 0
  %249 = vmatprep.subr.bf16.mxu0 0
  %250 = vmatpush2.bf16.msra.mxu0 0
  %251 = vmatprep.subr.bf16.mxu0 0
  %252 = vmatpush2.bf16.msra.mxu0 0
  %253 = vmatprep.subr.bf16.mxu0 0
  %254 = vmatpush2.bf16.msra.mxu0 0
  %255 = vmatprep.subr.bf16.mxu0 0
  %256 = vmatpush2.bf16.msra.mxu0 0
  %257 = vmatprep.subr.bf16.mxu0 0
  %258 = vmatpush2.bf16.msra.mxu0 0
  %259 = vmatprep.subr.bf16.mxu0 0
  %260 = vmatpush2.bf16.msra.mxu0 0
  %261 = vmatprep.subr.bf16.mxu0 0
  %262 = vmatpush2.bf16.msra.mxu0 0
  %263 = vmatprep.mubr.bf16.mxu0 0
  %264 = vmatmul.mubr.bf16.gmra.mxu0 %v159
  %v265 = vpop.f32.mrf.mxu0
  %v266 = vadd.f32 %v181, %v265
  %v267 = vpop.f32.mrf.mxu0
  %v268 = vpop.f32.mrf.mxu0
  %v269 = vpop.f32.mrf.mxu0
  %270 = vdwg.mxu0
  %v271 = vmul.f32 %v266, 0.2
  %v272 = vmax.f32 %v266, %v271
  %v273 = vld [vmem:[%s0] sm:$0xff]
  %v274 = vld [vmem:[%s0 + $0x8] sm:$0xff]
  %v275 = vld [vmem:[%s0 + $0x10] sm:$0xf]
  %v276 = vld [vmem:[%s6] sm:$0xf]
  %v277 = vld [vmem:[%s6 + $0x4] sm:$0xf]
  %v278 = vld [vmem:[%s6 + $0x8] sm:$0xf]
  %v279 = vld [vmem:[%s6 + $0xc] sm:$0xf]
  %v280 = vld [vmem:[%s6 + $0x10] sm:$0xf]
  %v281 = vld [vmem:[%s6 + $0x14] sm:$0xf]
  %v282 = vld [vmem:[%s6 + $0x18] sm:$0xf]
  %v283 = vld [vmem:[%s6 + $0x1c] sm:$0xf]
  %v284 = vld [vmem:[%s6 + $0x20] sm:$0xf]
  %v285 = vld [vmem:[%s6 + $0x24] sm:$0xf]
  %v286 = vld [vmem:[%s6 + $0x28] sm:$0xf]
  %v287 = vld [vmem:[%s6 + $0x2c] sm:$0xf]
  %v288 = vld [vmem:[%s6 + $0x30] sm:$0xf]
  %v289 = vld [vmem:[%s6 + $0x34] sm:$0xf]
  %v290 = vld [vmem:[%s6 + $0x38] sm:$0xf]
  %v291 = vld [vmem:[%s6 + $0x3c] sm:$0xf]
  %v292 = vld [vmem:[%s6 + $0x40] sm:$0xf]
  %v293 = vld [vmem:[%s6 + $0x44] sm:$0xf]
  %v294 = vld [vmem:[%s6 + $0x48] sm:$0xf]
  %v295 = vld [vmem:[%s6 + $0x4c] sm:$0xf]
  %v296 = vld [vmem:[%s6 + $0x50] sm:$0xf]
  %v297 = vld [vmem:[%s6 + $0x54] sm:$0xf]
  %v298 = vld [vmem:[%s6 + $0x58] sm:$0xf]
  %v299 = vld [vmem:[%s6 + $0x5c] sm:$0xf]
  %v300 = vld [vmem:[%s6 + $0x60] sm:$0xf]
  %v301 = vld [vmem:[%s6 + $0x64] sm:$0xf]
  %v302 = vld [vmem:[%s6 + $0x68] sm:$0xf]
  %v303 = vld [vmem:[%s6 + $0x6c] sm:$0xf]
  %v304 = vld [vmem:[%s6 + $0x70] sm:$0xf]
  %v305 = vld [vmem:[%s6 + $0x74] sm:$0xf]
  %v306 = vld [vmem:[%s6 + $0x78] sm:$0xf]
  %v307 = vld [vmem:[%s6 + $0x7c] sm:$0xf]
  %v308 = vld [vmem:[%s6 + $0x80] sm:$0xf]
  %v309 = vld [vmem:[%s6 + $0x84] sm:$0xf]
  %v310 = vld [vmem:[%s6 + $0x88] sm:$0xf]
  %v311 = vld [vmem:[%s6 + $0x8c] sm:$0xf]
  %v312 = vld [vmem:[%s6 + $0x90] sm:$0xf]
  %v313 = vld [vmem:[%s6 + $0x94] sm:$0xf]
  %v314 = vld [vmem:[%s6 + $0x98] sm:$0xf]
  %v315 = vld [vmem:[%s6 + $0x9c] sm:$0xf]
  %v316 = vld [vmem:[%s6 + $0xa0] sm:$0xf]
  %v317 = vld [vmem:[%s6 + $0xa4] sm:$0xf]
  %v318 = vld [vmem:[%s6 + $0xa8] sm:$0xf]
  %v319 = vld [vmem:[%s6 + $0xac] sm:$0xf]
  %v320 = vld [vmem:[%s6 + $0xb0] sm:$0xf]
  %v321 = vld [vmem:[%s6 + $0xb4] sm:$0xf]
  %v322 = vld [vmem:[%s6 + $0xb8] sm:$0xf]
  %v323 = vld [vmem:[%s6 + $0xbc] sm:$0xf]
  %v324 = vld [vmem:[%s6 + $0xc0] sm:$0xf]
  %v325 = vld [vmem:[%s6 + $0xc4] sm:$0xf]
  %v326 = vld [vmem:[%s6 + $0xc8] sm:$0xf]
  %v327 = vld [vmem:[%s6 + $0xcc] sm:$0xf]
  %v328 = vld [vmem:[%s6 + $0xd0] sm:$0xf]
  %v329 = vld [vmem:[%s6 + $0xd4] sm:$0xf]
  %v330 = vld [vmem:[%s6 + $0xd8] sm:$0xf]
  %v331 = vld [vmem:[%s6 + $0xdc] sm:$0xf]
  %v332 = vld [vmem:[%s6 + $0xe0] sm:$0xf]
  %v333 = vld [vmem:[%s6 + $0xe4] sm:$0xf]
  %v334 = vld [vmem:[%s6 + $0xe8] sm:$0xf]
  %v335 = vld [vmem:[%s6 + $0xec] sm:$0xf]
  %v336 = vld [vmem:[%s6 + $0xf0] sm:$0xf]
  %v337 = vld [vmem:[%s6 + $0xf4] sm:$0xf]
  %v338 = vld [vmem:[%s6 + $0xf8] sm:$0xf]
  %v339 = vld [vmem:[%s6 + $0xfc] sm:$0xf]
  %v340 = vld [vmem:[%s6 + $0x100] sm:$0xf]
  %v341 = vld [vmem:[%s6 + $0x104] sm:$0xf]
  %v342 = vld [vmem:[%s6 + $0x108] sm:$0xf]
  %v343 = vld [vmem:[%s6 + $0x10c] sm:$0xf]
  %v344 = vld [vmem:[%s6 + $0x110] sm:$0xf]
  %v345 = vld [vmem:[%s6 + $0x114] sm:$0xf]
  %v346 = vld [vmem:[%s6 + $0x118] sm:$0xf]
  %v347 = vld [vmem:[%s6 + $0x11c] sm:$0xf]
  %v348 = vpack.c.bf16 %v272, %v272
  %v349 = vld [vmem:[%s7] sm:$0xf]
  %v350 = vld [vmem:[%s7 + $0x4] sm:$0xf]
  %v351 = vld [vmem:[%s7 + $0x8] sm:$0xf]
  %v352 = vld [vmem:[%s7 + $0xc] sm:$0xf]
  %v353 = vld [vmem:[%s7 + $0x10] sm:$0xf]
  %v354 = vld [vmem:[%s7 + $0x14] sm:$0xf]
  %v355 = vld [vmem:[%s7 + $0x18] sm:$0xf]
  %v356 = vld [vmem:[%s7 + $0x1c] sm:$0xf]
  %v365 = vunpack.c.l.b16 %v349
  %v366 = vunpack.c.l.b16 %v350
  %v367 = vunpack.c.l.b16 %v351
  %v368 = vunpack.c.l.b16 %v352
  %v369 = vunpack.c.l.b16 %v353
  %v370 = vunpack.c.l.b16 %v354
  %v371 = vunpack.c.l.b16 %v355
  %v372 = vunpack.c.l.b16 %v356
  %v373 = vpack.c.b16 %v366, %v365
  %v374 = vpack.c.b16 %v368, %v367
  %v375 = vpack.c.b16 %v370, %v369
  %v376 = vpack.c.b16 %v372, %v371
  %vm381 = vcmask 523264
  %v383 = vsel %vm381, %v348, 0
  %385 = vmatprep.subr.bf16.mxu0 0
  %386 = vmatpush1.bf16.msra.mxu0 0
  %387 = vmatprep.subr.bf16.mxu0 0
  %388 = vmatpush1.bf16.msra.mxu0 0
  %389 = vmatprep.subr.bf16.mxu0 0
  %390 = vmatpush1.bf16.msra.mxu0 0
  %391 = vmatprep.subr.bf16.mxu0 0
  %392 = vmatpush1.bf16.msra.mxu0 0
  %393 = vmatprep.subr.bf16.mxu0 0
  %394 = vmatpush1.bf16.msra.mxu0 %v376
  %395 = vmatprep.subr.bf16.mxu0 0
  %396 = vmatpush1.bf16.msra.mxu0 %v375
  %397 = vmatprep.subr.bf16.mxu0 0
  %398 = vmatpush1.bf16.msra.mxu0 %v374
  %399 = vmatprep.subr.bf16.mxu0 0
  %400 = vmatpush1.bf16.msra.mxu0 %v373
  %401 = vmatprep.subr.bf16.mxu0 0
  %402 = vmatpush2.bf16.msra.mxu0 0
  %403 = vmatprep.subr.bf16.mxu0 0
  %404 = vmatpush2.bf16.msra.mxu0 0
  %405 = vmatprep.subr.bf16.mxu0 0
  %406 = vmatpush2.bf16.msra.mxu0 0
  %407 = vmatprep.subr.bf16.mxu0 0
  %408 = vmatpush2.bf16.msra.mxu0 0
  %409 = vmatprep.subr.bf16.mxu0 0
  %410 = vmatpush2.bf16.msra.mxu0 0
  %411 = vmatprep.subr.bf16.mxu0 0
  %412 = vmatpush2.bf16.msra.mxu0 0
  %413 = vmatprep.subr.bf16.mxu0 0
  %414 = vmatpush2.bf16.msra.mxu0 0
  %415 = vmatprep.subr.bf16.mxu0 0
  %416 = vmatpush2.bf16.msra.mxu0 0
  %417 = vmatprep.mubr.bf16.mxu0 0
  %418 = vmatmul.mubr.bf16.gmra.mxu0 %v383
  %v419 = vpop.f32.mrf.mxu0
  %v420 = vadd.f32 0.0, %v419
  %v421 = vpop.f32.mrf.mxu0
  %v422 = vpop.f32.mrf.mxu0
  %v423 = vpop.f32.mrf.mxu0
  %424 = vdwg.mxu0
  %v428 = vunpack.c.l.b16 %v273
  %v429 = vunpack.c.h.b16 %v273
  %v430 = vunpack.c.l.b16 %v274
  %v431 = vunpack.c.h.b16 %v274
  %v432 = vunpack.c.l.b16 %v275
  %v433 = vpack.c.b16 %v428, %v428
  %v434 = vpack.c.b16 %v429, %v429
  %v435 = vpack.c.b16 %v430, %v430
  %v436 = vpack.c.b16 %v431, %v431
  %v437 = vpack.c.b16 %v432, %v432
  %v514 = vunpack.c.l.b16 %v276
  %v515 = vunpack.c.l.b16 %v277
  %v516 = vunpack.c.l.b16 %v278
  %v517 = vunpack.c.l.b16 %v279
  %v518 = vunpack.c.l.b16 %v280
  %v519 = vunpack.c.l.b16 %v281
  %v520 = vunpack.c.l.b16 %v282
  %v521 = vunpack.c.l.b16 %v283
  %v522 = vunpack.c.l.b16 %v284
  %v523 = vunpack.c.l.b16 %v285
  %v524 = vunpack.c.l.b16 %v286
  %v525 = vunpack.c.l.b16 %v287
  %v526 = vunpack.c.l.b16 %v288
  %v527 = vunpack.c.l.b16 %v289
  %v528 = vunpack.c.l.b16 %v290
  %v529 = vunpack.c.l.b16 %v291
  %v530 = vunpack.c.l.b16 %v292
  %v531 = vunpack.c.l.b16 %v293
  %v532 = vunpack.c.l.b16 %v294
  %v533 = vunpack.c.l.b16 %v295
  %v534 = vunpack.c.l.b16 %v296
  %v535 = vunpack.c.l.b16 %v297
  %v536 = vunpack.c.l.b16 %v298
  %v537 = vunpack.c.l.b16 %v299
  %v538 = vunpack.c.l.b16 %v300
  %v539 = vunpack.c.l.b16 %v301
  %v540 = vunpack.c.l.b16 %v302
  %v541 = vunpack.c.l.b16 %v303
  %v542 = vunpack.c.l.b16 %v304
  %v543 = vunpack.c.l.b16 %v305
  %v544 = vunpack.c.l.b16 %v306
  %v545 = vunpack.c.l.b16 %v307
  %v546 = vunpack.c.l.b16 %v308
  %v547 = vunpack.c.l.b16 %v309
  %v548 = vunpack.c.l.b16 %v310
  %v549 = vunpack.c.l.b16 %v311
  %v550 = vunpack.c.l.b16 %v312
  %v551 = vunpack.c.l.b16 %v313
  %v552 = vunpack.c.l.b16 %v314
  %v553 = vunpack.c.l.b16 %v315
  %v554 = vunpack.c.l.b16 %v316
  %v555 = vunpack.c.l.b16 %v317
  %v556 = vunpack.c.l.b16 %v318
  %v557 = vunpack.c.l.b16 %v319
  %v558 = vunpack.c.l.b16 %v320
  %v559 = vunpack.c.l.b16 %v321
  %v560 = vunpack.c.l.b16 %v322
  %v561 = vunpack.c.l.b16 %v323
  %v562 = vunpack.c.l.b16 %v324
  %v563 = vunpack.c.l.b16 %v325
  %v564 = vunpack.c.l.b16 %v326
  %v565 = vunpack.c.l.b16 %v327
  %v566 = vunpack.c.l.b16 %v328
  %v567 = vunpack.c.l.b16 %v329
  %v568 = vunpack.c.l.b16 %v330
  %v569 = vunpack.c.l.b16 %v331
  %v570 = vunpack.c.l.b16 %v332
  %v571 = vunpack.c.l.b16 %v333
  %v572 = vunpack.c.l.b16 %v334
  %v573 = vunpack.c.l.b16 %v335
  %v574 = vunpack.c.l.b16 %v336
  %v575 = vunpack.c.l.b16 %v337
  %v576 = vunpack.c.l.b16 %v338
  %v577 = vunpack.c.l.b16 %v339
  %v578 = vunpack.c.l.b16 %v340
  %v579 = vunpack.c.l.b16 %v341
  %v580 = vunpack.c.l.b16 %v342
  %v581 = vunpack.c.l.b16 %v343
  %v582 = vunpack.c.l.b16 %v344
  %v583 = vunpack.c.l.b16 %v345
  %v584 = vunpack.c.l.b16 %v346
  %v585 = vunpack.c.l.b16 %v347
  %v586 = vpack.c.b16 %v515, %v514
  %v587 = vpack.c.b16 %v517, %v516
  %v588 = vpack.c.b16 %v519, %v518
  %v589 = vpack.c.b16 %v521, %v520
  %v590 = vpack.c.b16 %v523, %v522
  %v591 = vpack.c.b16 %v525, %v524
  %v592 = vpack.c.b16 %v527, %v526
  %v593 = vpack.c.b16 %v529, %v528
  %v594 = vpack.c.b16 %v531, %v530
  %v595 = vpack.c.b16 %v533, %v532
  %v596 = vpack.c.b16 %v535, %v534
  %v597 = vpack.c.b16 %v537, %v536
  %v598 = vpack.c.b16 %v539, %v538
  %v599 = vpack.c.b16 %v541, %v540
  %v600 = vpack.c.b16 %v543, %v542
  %v601 = vpack.c.b16 %v545, %v544
  %v602 = vpack.c.b16 %v547, %v546
  %v603 = vpack.c.b16 %v549, %v548
  %v604 = vpack.c.b16 %v551, %v550
  %v605 = vpack.c.b16 %v553, %v552
  %v606 = vpack.c.b16 %v555, %v554
  %v607 = vpack.c.b16 %v557, %v556
  %v608 = vpack.c.b16 %v559, %v558
  %v609 = vpack.c.b16 %v561, %v560
  %v610 = vpack.c.b16 %v563, %v562
  %v611 = vpack.c.b16 %v565, %v564
  %v612 = vpack.c.b16 %v567, %v566
  %v613 = vpack.c.b16 %v569, %v568
  %v614 = vpack.c.b16 %v571, %v570
  %v615 = vpack.c.b16 %v573, %v572
  %v616 = vpack.c.b16 %v575, %v574
  %v617 = vpack.c.b16 %v577, %v576
  %v618 = vpack.c.b16 %v579, %v578
  %v619 = vpack.c.b16 %v581, %v580
  %v620 = vpack.c.b16 %v583, %v582
  %v621 = vpack.c.b16 %v585, %v584
  %v659 = vsel %vm381, %v437, 0
  %661 = vmatprep.subr.bf16.mxu0 0
  %662 = vmatpush1.bf16.msra.mxu0 %v593
  %663 = vmatprep.subr.bf16.mxu0 0
  %664 = vmatpush1.bf16.msra.mxu0 %v592
  %665 = vmatprep.subr.bf16.mxu0 0
  %666 = vmatpush1.bf16.msra.mxu0 %v591
  %667 = vmatprep.subr.bf16.mxu0 0
  %668 = vmatpush1.bf16.msra.mxu0 %v590
  %669 = vmatprep.subr.bf16.mxu0 0
  %670 = vmatpush1.bf16.msra.mxu0 %v589
  %671 = vmatprep.subr.bf16.mxu0 0
  %672 = vmatpush1.bf16.msra.mxu0 %v588
  %673 = vmatprep.subr.bf16.mxu0 0
  %674 = vmatpush1.bf16.msra.mxu0 %v587
  %675 = vmatprep.subr.bf16.mxu0 0
  %676 = vmatpush1.bf16.msra.mxu0 %v586
  %677 = vmatprep.subr.bf16.mxu0 0
  %678 = vmatpush2.bf16.msra.mxu0 %v601
  %679 = vmatprep.subr.bf16.mxu0 0
  %680 = vmatpush2.bf16.msra.mxu0 %v600
  %681 = vmatprep.subr.bf16.mxu0 0
  %682 = vmatpush2.bf16.msra.mxu0 %v599
  %683 = vmatprep.subr.bf16.mxu0 0
  %684 = vmatpush2.bf16.msra.mxu0 %v598
  %685 = vmatprep.subr.bf16.mxu0 0
  %686 = vmatpush2.bf16.msra.mxu0 %v597
  %687 = vmatprep.subr.bf16.mxu0 0
  %688 = vmatpush2.bf16.msra.mxu0 %v596
  %689 = vmatprep.subr.bf16.mxu0 0
  %690 = vmatpush2.bf16.msra.mxu0 %v595
  %691 = vmatprep.subr.bf16.mxu0 0
  %692 = vmatpush2.bf16.msra.mxu0 %v594
  %693 = vmatprep.mubr.bf16.mxu0 %v434
  %694 = vmatmul.mubr.bf16.gmra.mxu0 %v433
  %v695 = vpop.f32.mrf.mxu0
  %v696 = vadd.f32 %v420, %v695
  %v697 = vpop.f32.mrf.mxu0
  %v698 = vpop.f32.mrf.mxu0
  %v699 = vpop.f32.mrf.mxu0
  %700 = vdwg.mxu0
  %701 = vmatprep.subr.bf16.mxu0 0
  %702 = vmatpush1.bf16.msra.mxu0 %v609
  %703 = vmatprep.subr.bf16.mxu0 0
  %704 = vmatpush1.bf16.msra.mxu0 %v608
  %705 = vmatprep.subr.bf16.mxu0 0
  %706 = vmatpush1.bf16.msra.mxu0 %v607
  %707 = vmatprep.subr.bf16.mxu0 0
  %708 = vmatpush1.bf16.msra.mxu0 %v606
  %709 = vmatprep.subr.bf16.mxu0 0
  %710 = vmatpush1.bf16.msra.mxu0 %v605
  %711 = vmatprep.subr.bf16.mxu0 0
  %712 = vmatpush1.bf16.msra.mxu0 %v604
  %713 = vmatprep.subr.bf16.mxu0 0
  %714 = vmatpush1.bf16.msra.mxu0 %v603
  %715 = vmatprep.subr.bf16.mxu0 0
  %716 = vmatpush1.bf16.msra.mxu0 %v602
  %717 = vmatprep.subr.bf16.mxu0 0
  %718 = vmatpush2.bf16.msra.mxu0 %v617
  %719 = vmatprep.subr.bf16.mxu0 0
  %720 = vmatpush2.bf16.msra.mxu0 %v616
  %721 = vmatprep.subr.bf16.mxu0 0
  %722 = vmatpush2.bf16.msra.mxu0 %v615
  %723 = vmatprep.subr.bf16.mxu0 0
  %724 = vmatpush2.bf16.msra.mxu0 %v614
  %725 = vmatprep.subr.bf16.mxu0 0
  %726 = vmatpush2.bf16.msra.mxu0 %v613
  %727 = vmatprep.subr.bf16.mxu0 0
  %728 = vmatpush2.bf16.msra.mxu0 %v612
  %729 = vmatprep.subr.bf16.mxu0 0
  %730 = vmatpush2.bf16.msra.mxu0 %v611
  %731 = vmatprep.subr.bf16.mxu0 0
  %732 = vmatpush2.bf16.msra.mxu0 %v610
  %733 = vmatprep.mubr.bf16.mxu0 %v436
  %734 = vmatmul.mubr.bf16.gmra.mxu0 %v435
  %v735 = vpop.f32.mrf.mxu0
  %v736 = vadd.f32 %v696, %v735
  %v737 = vpop.f32.mrf.mxu0
  %v738 = vpop.f32.mrf.mxu0
  %v739 = vpop.f32.mrf.mxu0
  %740 = vdwg.mxu0
  %741 = vmatprep.subr.bf16.mxu0 0
  %742 = vmatpush1.bf16.msra.mxu0 0
  %743 = vmatprep.subr.bf16.mxu0 0
  %744 = vmatpush1.bf16.msra.mxu0 0
  %745 = vmatprep.subr.bf16.mxu0 0
  %746 = vmatpush1.bf16.msra.mxu0 0
  %747 = vmatprep.subr.bf16.mxu0 0
  %748 = vmatpush1.bf16.msra.mxu0 0
  %749 = vmatprep.subr.bf16.mxu0 0
  %750 = vmatpush1.bf16.msra.mxu0 %v621
  %751 = vmatprep.subr.bf16.mxu0 0
  %752 = vmatpush1.bf16.msra.mxu0 %v620
  %753 = vmatprep.subr.bf16.mxu0 0
  %754 = vmatpush1.bf16.msra.mxu0 %v619
  %755 = vmatprep.subr.bf16.mxu0 0
  %756 = vmatpush1.bf16.msra.mxu0 %v618
  %757 = vmatprep.subr.bf16.mxu0 0
  %758 = vmatpush2.bf16.msra.mxu0 0
  %759 = vmatprep.subr.bf16.mxu0 0
  %760 = vmatpush2.bf16.msra.mxu0 0
  %761 = vmatprep.subr.bf16.mxu0 0
  %762 = vmatpush2.bf16.msra.mxu0 0
  %763 = vmatprep.subr.bf16.mxu0 0
  %764 = vmatpush2.bf16.msra.mxu0 0
  %765 = vmatprep.subr.bf16.mxu0 0
  %766 = vmatpush2.bf16.msra.mxu0 0
  %767 = vmatprep.subr.bf16.mxu0 0
  %768 = vmatpush2.bf16.msra.mxu0 0
  %769 = vmatprep.subr.bf16.mxu0 0
  %770 = vmatpush2.bf16.msra.mxu0 0
  %771 = vmatprep.subr.bf16.mxu0 0
  %772 = vmatpush2.bf16.msra.mxu0 0
  %773 = vmatprep.mubr.bf16.mxu0 0
  %774 = vmatmul.mubr.bf16.gmra.mxu0 %v659
  %v775 = vpop.f32.mrf.mxu0
  %v776 = vadd.f32 %v736, %v775
  %v777 = vpop.f32.mrf.mxu0
  %v778 = vpop.f32.mrf.mxu0
  %v779 = vpop.f32.mrf.mxu0
  %780 = vdwg.mxu0
  %v781 = vld [vmem:[%s8] sm:$0x1]
  %v783 = vlaneseq
  %v784 = vshrl.u32 %v783, 7
  %v785 = vsub.s32 0, %v784
  %v786 = vrot.slane %v781, %v785
  %v788 = vadd.f32 %v776, %v786
  %v789 = vmul.f32 %v788, 0.2
  %v790 = vmax.f32 %v788, %v789
  %v791 = vpack.c.bf16 %v790, %v790
  %v792 = vld [vmem:[%s9] sm:$0xf]
  %v793 = vld [vmem:[%s9 + $0x4] sm:$0xf]
  %v794 = vld [vmem:[%s9 + $0x8] sm:$0xf]
  %v795 = vld [vmem:[%s9 + $0xc] sm:$0xf]
  %v796 = vld [vmem:[%s9 + $0x10] sm:$0xf]
  %v797 = vld [vmem:[%s9 + $0x14] sm:$0xf]
  %v798 = vld [vmem:[%s9 + $0x18] sm:$0xf]
  %v799 = vld [vmem:[%s9 + $0x1c] sm:$0xf]
  %v800 = vld [vmem:[%s9 + $0x20] sm:$0xf]
  %v801 = vld [vmem:[%s9 + $0x24] sm:$0xf]
  %v802 = vld [vmem:[%s9 + $0x28] sm:$0xf]
  %v803 = vld [vmem:[%s9 + $0x2c] sm:$0xf]
  %v804 = vld [vmem:[%s9 + $0x30] sm:$0xf]
  %v805 = vld [vmem:[%s9 + $0x34] sm:$0xf]
  %v806 = vld [vmem:[%s9 + $0x38] sm:$0xf]
  %v807 = vld [vmem:[%s9 + $0x3c] sm:$0xf]
  %v808 = vld [vmem:[%s10] sm:$0x1]
  %v810 = vlaneseq
  %v811 = vshrl.u32 %v810, 7
  %v812 = vsub.s32 0, %v811
  %v813 = vrot.slane %v808, %v812
  %v831 = vunpack.c.l.b16 %v792
  %v832 = vunpack.c.l.b16 %v793
  %v833 = vunpack.c.l.b16 %v794
  %v834 = vunpack.c.l.b16 %v795
  %v835 = vunpack.c.l.b16 %v796
  %v836 = vunpack.c.l.b16 %v797
  %v837 = vunpack.c.l.b16 %v798
  %v838 = vunpack.c.l.b16 %v799
  %v839 = vunpack.c.l.b16 %v800
  %v840 = vunpack.c.l.b16 %v801
  %v841 = vunpack.c.l.b16 %v802
  %v842 = vunpack.c.l.b16 %v803
  %v843 = vunpack.c.l.b16 %v804
  %v844 = vunpack.c.l.b16 %v805
  %v845 = vunpack.c.l.b16 %v806
  %v846 = vunpack.c.l.b16 %v807
  %v847 = vpack.c.b16 %v832, %v831
  %v848 = vpack.c.b16 %v834, %v833
  %v849 = vpack.c.b16 %v836, %v835
  %v850 = vpack.c.b16 %v838, %v837
  %v851 = vpack.c.b16 %v840, %v839
  %v852 = vpack.c.b16 %v842, %v841
  %v853 = vpack.c.b16 %v844, %v843
  %v854 = vpack.c.b16 %v846, %v845
  %863 = vmatprep.subr.bf16.mxu0 0
  %864 = vmatpush1.bf16.msra.mxu0 %v854
  %865 = vmatprep.subr.bf16.mxu0 0
  %866 = vmatpush1.bf16.msra.mxu0 %v853
  %867 = vmatprep.subr.bf16.mxu0 0
  %868 = vmatpush1.bf16.msra.mxu0 %v852
  %869 = vmatprep.subr.bf16.mxu0 0
  %870 = vmatpush1.bf16.msra.mxu0 %v851
  %871 = vmatprep.subr.bf16.mxu0 0
  %872 = vmatpush1.bf16.msra.mxu0 %v850
  %873 = vmatprep.subr.bf16.mxu0 0
  %874 = vmatpush1.bf16.msra.mxu0 %v849
  %875 = vmatprep.subr.bf16.mxu0 0
  %876 = vmatpush1.bf16.msra.mxu0 %v848
  %877 = vmatprep.subr.bf16.mxu0 0
  %878 = vmatpush1.bf16.msra.mxu0 %v847
  %879 = vmatprep.subr.bf16.mxu0 0
  %880 = vmatpush2.bf16.msra.mxu0 0
  %881 = vmatprep.subr.bf16.mxu0 0
  %882 = vmatpush2.bf16.msra.mxu0 0
  %883 = vmatprep.subr.bf16.mxu0 0
  %884 = vmatpush2.bf16.msra.mxu0 0
  %885 = vmatprep.subr.bf16.mxu0 0
  %886 = vmatpush2.bf16.msra.mxu0 0
  %887 = vmatprep.subr.bf16.mxu0 0
  %888 = vmatpush2.bf16.msra.mxu0 0
  %889 = vmatprep.subr.bf16.mxu0 0
  %890 = vmatpush2.bf16.msra.mxu0 0
  %891 = vmatprep.subr.bf16.mxu0 0
  %892 = vmatpush2.bf16.msra.mxu0 0
  %893 = vmatprep.subr.bf16.mxu0 0
  %894 = vmatpush2.bf16.msra.mxu0 0
  %895 = vmatprep.mubr.bf16.mxu0 0
  %896 = vmatmul.mubr.bf16.gmra.mxu0 %v791
  %v897 = vpop.f32.mrf.mxu0
  %v898 = vadd.f32 %v813, %v897
  %v899 = vpop.f32.mrf.mxu0
  %v900 = vpop.f32.mrf.mxu0
  %v901 = vpop.f32.mrf.mxu0
  %902 = vdwg.mxu0
  %v903 = vmul.f32 %v898, 0.2
  %v904 = vmax.f32 %v898, %v903
  %v905 = vpack.c.bf16 %v904, %v904
  %v906 = vld [vmem:[%s11] sm:$0xf]
  %v907 = vld [vmem:[%s11 + $0x4] sm:$0xf]
  %v908 = vld [vmem:[%s11 + $0x8] sm:$0xf]
  %v909 = vld [vmem:[%s11 + $0xc] sm:$0xf]
  %v910 = vld [vmem:[%s12] sm:$0x1]
  %v912 = vlaneseq
  %v913 = vshrl.u32 %v912, 7
  %v914 = vsub.s32 0, %v913
  %v915 = vrot.slane %v910, %v914
  %v921 = vunpack.c.l.b16 %v906
  %v922 = vunpack.c.l.b16 %v907
  %v923 = vunpack.c.l.b16 %v908
  %v924 = vunpack.c.l.b16 %v909
  %v925 = vpack.c.b16 %v922, %v921
  %v926 = vpack.c.b16 %v924, %v923
  %vm929 = vcmask 261120
  %v931 = vsel %vm929, %v905, 0
  %933 = vmatprep.subr.bf16.mxu0 0
  %934 = vmatpush1.bf16.msra.mxu0 0
  %935 = vmatprep.subr.bf16.mxu0 0
  %936 = vmatpush1.bf16.msra.mxu0 0
  %937 = vmatprep.subr.bf16.mxu0 0
  %938 = vmatpush1.bf16.msra.mxu0 0
  %939 = vmatprep.subr.bf16.mxu0 0
  %940 = vmatpush1.bf16.msra.mxu0 0
  %941 = vmatprep.subr.bf16.mxu0 0
  %942 = vmatpush1.bf16.msra.mxu0 0
  %943 = vmatprep.subr.bf16.mxu0 0
  %944 = vmatpush1.bf16.msra.mxu0 0
  %945 = vmatprep.subr.bf16.mxu0 0
  %946 = vmatpush1.bf16.msra.mxu0 %v926
  %947 = vmatprep.subr.bf16.mxu0 0
  %948 = vmatpush1.bf16.msra.mxu0 %v925
  %949 = vmatprep.subr.bf16.mxu0 0
  %950 = vmatpush2.bf16.msra.mxu0 0
  %951 = vmatprep.subr.bf16.mxu0 0
  %952 = vmatpush2.bf16.msra.mxu0 0
  %953 = vmatprep.subr.bf16.mxu0 0
  %954 = vmatpush2.bf16.msra.mxu0 0
  %955 = vmatprep.subr.bf16.mxu0 0
  %956 = vmatpush2.bf16.msra.mxu0 0
  %957 = vmatprep.subr.bf16.mxu0 0
  %958 = vmatpush2.bf16.msra.mxu0 0
  %959 = vmatprep.subr.bf16.mxu0 0
  %960 = vmatpush2.bf16.msra.mxu0 0
  %961 = vmatprep.subr.bf16.mxu0 0
  %962 = vmatpush2.bf16.msra.mxu0 0
  %963 = vmatprep.subr.bf16.mxu0 0
  %964 = vmatpush2.bf16.msra.mxu0 0
  %965 = vmatprep.mubr.bf16.mxu0 0
  %966 = vmatmul.mubr.bf16.gmra.mxu0 %v931
  %v967 = vpop.f32.mrf.mxu0
  %v968 = vadd.f32 %v915, %v967
  %v969 = vpop.f32.mrf.mxu0
  %v970 = vpop.f32.mrf.mxu0
  %v971 = vpop.f32.mrf.mxu0
  %972 = vdwg.mxu0
  %973 = vst [vmem:[%s13] sm:$0xff] %v968
  // Predicated region
  $region54: #{multi_crit_forward.9} parent=0 // pred_check
    _
  $region55: #{multi_crit_forward.9} parent=0 // pred_check_branch
    %975 = sbr.rel (0) target = $region57
  $region56: #{multi_crit_forward.9} parent=0 // pred_region
    _
  $region57: #{multi_crit_forward.9} parent=0 // pred_fallthru
    _
  // Predicated region
  $region58: #{multi_crit_forward.9} parent=0 // pred_check
    _
  $region59: #{multi_crit_forward.9} parent=0 // pred_check_branch
    %977 = sbr.rel (0) target = $region61
  $region60: #{multi_crit_forward.9} parent=0 // pred_region
    _
  $region61: #{multi_crit_forward.9} parent=0 // pred_fallthru
    _

</llo_original>
